<compile_context>
chip_gen: v7x
topology: tpu7x:2x2x1
jax: 0.10.0
libtpu: 0.0.40
codegen_flags: <defaults>
</compile_context>

<pallas_src>
import functools

import jax
import jax.numpy as jnp
import numpy as np
from jax.experimental import pallas as pl
from jax.experimental.pallas import tpu as pltpu

_LANE_PAD = 128  # lane-aligned flank pad; must be >= W + 1 (max tap offset)


def _tap_valid_masks(B, H, W):
    """(9, B*H*W) float 0/1 masks: is tap (ky, kx) in-bounds at output (h, w)."""
    hh = np.arange(H)[:, None]
    ww = np.arange(W)[None, :]
    rows = []
    for ky in range(3):
        for kx in range(3):
            dy, dx = ky - 1, kx - 1
            valid = ((hh + dy >= 0) & (hh + dy < H) &
                     (ww + dx >= 0) & (ww + dx < W))
            rows.append(np.tile(valid.reshape(-1), B))
    return jnp.asarray(np.stack(rows, axis=0).astype(np.float32))


def _resblock_kernel(xp_ref, w1_ref, w2_ref, mask_ref, o_ref, x1p_ref, *, W, pad):
    # xp_ref  : (C, pad + N + pad) flank-padded flat input, N = B*H*W
    # w*_ref  : (9*C, C)  rows ordered (ky*3+kx)*Cout + co, cols = Cin
    # mask_ref: (9, N)    0/1 tap-validity masks
    # o_ref   : (C, N)    lane-dense output
    # x1p_ref : (C, pad + N + pad) VMEM scratch for the intermediate x1
    C, N = o_ref.shape

    w1 = w1_ref[...].astype(jnp.float32)
    w2 = w2_ref[...].astype(jnp.float32)
    masks = mask_ref[...]

    def conv3x3(src_ref, w_mat):
        # 3x3 SAME conv: 9 shifted reads (static slices of the flank-padded
        # flat buffer), per-tap validity mask, one MXU dot per tap.
        acc = jnp.zeros((C, N), jnp.float32)
        for ky in range(3):
            for kx in range(3):
                t = 3 * ky + kx
                off = (ky - 1) * W + (kx - 1)
                col = src_ref[:, pad + off:pad + off + N].astype(jnp.float32)
                if not (ky == 1 and kx == 1):           # center tap always valid
                    col = col * masks[t:t + 1, :]       # (1, N) bcast over C
                w_tap = w_mat[t * C:(t + 1) * C, :]     # (Cout, Cin)
                acc = acc + jnp.dot(w_tap, col,
                                    preferred_element_type=jnp.float32)
        return acc

    # conv1 + ReLU
    x1 = jnp.maximum(conv3x3(xp_ref, w1), 0.0)

    # Stage x1 in a flank-padded scratch so conv2 taps stay plain static
    # slices.  Only the flanks need defined values (they only ever feed
    # masked-out taps); zero them once, then write the interior once.
    x1p_ref[:, :pad] = jnp.zeros((C, pad), jnp.float32)
    x1p_ref[:, pad + N:] = jnp.zeros((C, pad), jnp.float32)
    x1p_ref[:, pad:pad + N] = x1

    # conv2
    y2 = conv3x3(x1p_ref, w2)

    # residual add (droprate == 0.0 -> dropout is identity)
    o_ref[...] = (xp_ref[:, pad:pad + N].astype(jnp.float32) + y2).astype(o_ref.dtype)


def _weights_to_tap_matrix(w_oihw):
    # OIHW (Cout, Cin, 3, 3) -> (9*Cout, Cin), rows ordered (ky*3+kx)*Cout + co
    Cout, Cin = w_oihw.shape[0], w_oihw.shape[1]
    return jnp.transpose(w_oihw, (2, 3, 0, 1)).reshape(9 * Cout, Cin)


def residual_block_forward(x_nchw, w1_oihw, w2_oihw):
    """Forward pass matching ResidualBlock(in_planes, dropRate=0.0).forward."""
    B, C, H, W = x_nchw.shape
    N = B * H * W
    pad = _LANE_PAD
    assert pad >= W + 1, "flank pad must cover the largest tap offset"

    # NCHW -> (C, B*H*W): channels on sublanes, flattened pixels on lanes,
    # plus lane-aligned zero flanks so every tap shift is an in-bounds slice.
    x_flat = jnp.transpose(x_nchw, (1, 0, 2, 3)).reshape(C, N)
    xp = jnp.pad(x_flat, ((0, 0), (pad, pad)))           # (C, pad + N + pad)

    w1 = _weights_to_tap_matrix(w1_oihw)                 # (9*C, C)
    w2 = _weights_to_tap_matrix(w2_oihw)
    masks = _tap_valid_masks(B, H, W)                    # (9, N)

    out_flat = pl.pallas_call(
        functools.partial(_resblock_kernel, W=W, pad=pad),
        out_shape=jax.ShapeDtypeStruct((C, N), x_nchw.dtype),
        scratch_shapes=[pltpu.VMEM((C, N + 2 * pad), jnp.float32)],
    )(xp, w1, w2, masks)

    # (C, B*H*W) -> NCHW
    return jnp.transpose(out_flat.reshape(C, B, H, W), (1, 0, 2, 3))


def _reference_forward(x, w1, w2):
    dn = ("NCHW", "OIHW", "NCHW")
    y1 = jax.nn.relu(jax.lax.conv_general_dilated(
        x, w1, window_strides=(1, 1), padding="SAME", dimension_numbers=dn))
    y2 = jax.lax.conv_general_dilated(
        y1, w2, window_strides=(1, 1), padding="SAME", dimension_numbers=dn)
    return x + y2


if __name__ == "__main__":
    # small shapes consistent with the module: in_planes=4, 16x16 spatial
    B, C, H, W = 2, 4, 16, 16

    key = jax.random.PRNGKey(0)
    kx, k1, k2 = jax.random.split(key, 3)
    x = jax.random.normal(kx, (B, C, H, W), dtype=jnp.float32)
    # deterministic synthetic conv weights (PyTorch OIHW layout, bias=False)
    w1 = 0.1 * jax.random.normal(k1, (C, C, 3, 3), dtype=jnp.float32)
    w2 = 0.1 * jax.random.normal(k2, (C, C, 3, 3), dtype=jnp.float32)

    out = jax.block_until_ready(residual_block_forward(x, w1, w2))
    ref = jax.block_until_ready(_reference_forward(x, w1, w2))

    np.testing.assert_allclose(np.asarray(out), np.asarray(ref),
                               rtol=2e-3, atol=2e-3)
    print("KERNEL_OK")
</pallas_src>

<mosaic_0001>
module attributes {stable_mosaic.version = 11 : i64} {
  func.func @_resblock_kernel(%arg0: memref<4x768xf32, #tpu.memory_space<vmem>>, %arg1: memref<36x4xf32, #tpu.memory_space<vmem>>, %arg2: memref<36x4xf32, #tpu.memory_space<vmem>>, %arg3: memref<9x512xf32, #tpu.memory_space<vmem>>, %arg4: memref<4x512xf32, #tpu.memory_space<vmem>>, %arg5: memref<4x768xf32, #tpu.memory_space<vmem>>) attributes {dimension_semantics = [], scalar_prefetch = 0 : i64, scratch_operands = 1 : i64, tpu.core_type = #tpu.core_type<tc>} {
    %c0 = arith.constant 0 : index
    %c0_0 = arith.constant 0 : index
    %0 = vector.load %arg1[%c0, %c0_0] : memref<36x4xf32, #tpu.memory_space<vmem>>, vector<36x4xf32>
    %c0_1 = arith.constant 0 : index
    %c0_2 = arith.constant 0 : index
    %1 = vector.load %arg2[%c0_1, %c0_2] : memref<36x4xf32, #tpu.memory_space<vmem>>, vector<36x4xf32>
    %c0_3 = arith.constant 0 : index
    %c0_4 = arith.constant 0 : index
    %2 = vector.load %arg3[%c0_3, %c0_4] : memref<9x512xf32, #tpu.memory_space<vmem>>, vector<9x512xf32>
    %cst = arith.constant 0.000000e+00 : f32
    %3 = vector.broadcast %cst : f32 to vector<4x512xf32>
    %c0_5 = arith.constant 0 : index
    %c111 = arith.constant 111 : index
    %4 = vector.load %arg0[%c0_5, %c111] : memref<4x768xf32, #tpu.memory_space<vmem>>, vector<4x512xf32>
    %5 = vector.extract_strided_slice %2 {offsets = [0, 0], sizes = [1, 512], strides = [1, 1]} : vector<9x512xf32> to vector<1x512xf32>
    %6 = vector.broadcast %5 : vector<1x512xf32> to vector<4x512xf32>
    %7 = arith.mulf %4, %6 : vector<4x512xf32>
    %8 = vector.extract_strided_slice %0 {offsets = [0, 0], sizes = [4, 4], strides = [1, 1]} : vector<36x4xf32> to vector<4x4xf32>
    %cst_6 = arith.constant dense<0.000000e+00> : vector<4x512xf32>
    %9 = tpu.matmul %8, %7, %cst_6 {dimension_numbers = #tpu.dot_dimension_numbers<[1], [0], [0], [1], [0, 0, 1, 1], [], []>} : vector<4x4xf32>, vector<4x512xf32>, vector<4x512xf32> -> vector<4x512xf32>
    %10 = arith.addf %3, %9 : vector<4x512xf32>
    %c0_7 = arith.constant 0 : index
    %c112 = arith.constant 112 : index
    %11 = vector.load %arg0[%c0_7, %c112] : memref<4x768xf32, #tpu.memory_space<vmem>>, vector<4x512xf32>
    %12 = vector.extract_strided_slice %2 {offsets = [1, 0], sizes = [1, 512], strides = [1, 1]} : vector<9x512xf32> to vector<1x512xf32>
    %13 = vector.broadcast %12 : vector<1x512xf32> to vector<4x512xf32>
    %14 = arith.mulf %11, %13 : vector<4x512xf32>
    %15 = vector.extract_strided_slice %0 {offsets = [4, 0], sizes = [4, 4], strides = [1, 1]} : vector<36x4xf32> to vector<4x4xf32>
    %cst_8 = arith.constant dense<0.000000e+00> : vector<4x512xf32>
    %16 = tpu.matmul %15, %14, %cst_8 {dimension_numbers = #tpu.dot_dimension_numbers<[1], [0], [0], [1], [0, 0, 1, 1], [], []>} : vector<4x4xf32>, vector<4x512xf32>, vector<4x512xf32> -> vector<4x512xf32>
    %17 = arith.addf %10, %16 : vector<4x512xf32>
    %c0_9 = arith.constant 0 : index
    %c113 = arith.constant 113 : index
    %18 = vector.load %arg0[%c0_9, %c113] : memref<4x768xf32, #tpu.memory_space<vmem>>, vector<4x512xf32>
    %19 = vector.extract_strided_slice %2 {offsets = [2, 0], sizes = [1, 512], strides = [1, 1]} : vector<9x512xf32> to vector<1x512xf32>
    %20 = vector.broadcast %19 : vector<1x512xf32> to vector<4x512xf32>
    %21 = arith.mulf %18, %20 : vector<4x512xf32>
    %22 = vector.extract_strided_slice %0 {offsets = [8, 0], sizes = [4, 4], strides = [1, 1]} : vector<36x4xf32> to vector<4x4xf32>
    %cst_10 = arith.constant dense<0.000000e+00> : vector<4x512xf32>
    %23 = tpu.matmul %22, %21, %cst_10 {dimension_numbers = #tpu.dot_dimension_numbers<[1], [0], [0], [1], [0, 0, 1, 1], [], []>} : vector<4x4xf32>, vector<4x512xf32>, vector<4x512xf32> -> vector<4x512xf32>
    %24 = arith.addf %17, %23 : vector<4x512xf32>
    %c0_11 = arith.constant 0 : index
    %c127 = arith.constant 127 : index
    %25 = vector.load %arg0[%c0_11, %c127] : memref<4x768xf32, #tpu.memory_space<vmem>>, vector<4x512xf32>
    %26 = vector.extract_strided_slice %2 {offsets = [3, 0], sizes = [1, 512], strides = [1, 1]} : vector<9x512xf32> to vector<1x512xf32>
    %27 = vector.broadcast %26 : vector<1x512xf32> to vector<4x512xf32>
    %28 = arith.mulf %25, %27 : vector<4x512xf32>
    %29 = vector.extract_strided_slice %0 {offsets = [12, 0], sizes = [4, 4], strides = [1, 1]} : vector<36x4xf32> to vector<4x4xf32>
    %cst_12 = arith.constant dense<0.000000e+00> : vector<4x512xf32>
    %30 = tpu.matmul %29, %28, %cst_12 {dimension_numbers = #tpu.dot_dimension_numbers<[1], [0], [0], [1], [0, 0, 1, 1], [], []>} : vector<4x4xf32>, vector<4x512xf32>, vector<4x512xf32> -> vector<4x512xf32>
    %31 = arith.addf %24, %30 : vector<4x512xf32>
    %c0_13 = arith.constant 0 : index
    %c128 = arith.constant 128 : index
    %32 = vector.load %arg0[%c0_13, %c128] : memref<4x768xf32, #tpu.memory_space<vmem>>, vector<4x512xf32>
    %33 = vector.extract_strided_slice %0 {offsets = [16, 0], sizes = [4, 4], strides = [1, 1]} : vector<36x4xf32> to vector<4x4xf32>
    %cst_14 = arith.constant dense<0.000000e+00> : vector<4x512xf32>
    %34 = tpu.matmul %33, %32, %cst_14 {dimension_numbers = #tpu.dot_dimension_numbers<[1], [0], [0], [1], [0, 0, 1, 1], [], []>} : vector<4x4xf32>, vector<4x512xf32>, vector<4x512xf32> -> vector<4x512xf32>
    %35 = arith.addf %31, %34 : vector<4x512xf32>
    %c0_15 = arith.constant 0 : index
    %c129 = arith.constant 129 : index
    %36 = vector.load %arg0[%c0_15, %c129] : memref<4x768xf32, #tpu.memory_space<vmem>>, vector<4x512xf32>
    %37 = vector.extract_strided_slice %2 {offsets = [5, 0], sizes = [1, 512], strides = [1, 1]} : vector<9x512xf32> to vector<1x512xf32>
    %38 = vector.broadcast %37 : vector<1x512xf32> to vector<4x512xf32>
    %39 = arith.mulf %36, %38 : vector<4x512xf32>
    %40 = vector.extract_strided_slice %0 {offsets = [20, 0], sizes = [4, 4], strides = [1, 1]} : vector<36x4xf32> to vector<4x4xf32>
    %cst_16 = arith.constant dense<0.000000e+00> : vector<4x512xf32>
    %41 = tpu.matmul %40, %39, %cst_16 {dimension_numbers = #tpu.dot_dimension_numbers<[1], [0], [0], [1], [0, 0, 1, 1], [], []>} : vector<4x4xf32>, vector<4x512xf32>, vector<4x512xf32> -> vector<4x512xf32>
    %42 = arith.addf %35, %41 : vector<4x512xf32>
    %c0_17 = arith.constant 0 : index
    %c143 = arith.constant 143 : index
    %43 = vector.load %arg0[%c0_17, %c143] : memref<4x768xf32, #tpu.memory_space<vmem>>, vector<4x512xf32>
    %44 = vector.extract_strided_slice %2 {offsets = [6, 0], sizes = [1, 512], strides = [1, 1]} : vector<9x512xf32> to vector<1x512xf32>
    %45 = vector.broadcast %44 : vector<1x512xf32> to vector<4x512xf32>
    %46 = arith.mulf %43, %45 : vector<4x512xf32>
    %47 = vector.extract_strided_slice %0 {offsets = [24, 0], sizes = [4, 4], strides = [1, 1]} : vector<36x4xf32> to vector<4x4xf32>
    %cst_18 = arith.constant dense<0.000000e+00> : vector<4x512xf32>
    %48 = tpu.matmul %47, %46, %cst_18 {dimension_numbers = #tpu.dot_dimension_numbers<[1], [0], [0], [1], [0, 0, 1, 1], [], []>} : vector<4x4xf32>, vector<4x512xf32>, vector<4x512xf32> -> vector<4x512xf32>
    %49 = arith.addf %42, %48 : vector<4x512xf32>
    %c0_19 = arith.constant 0 : index
    %c144 = arith.constant 144 : index
    %50 = vector.load %arg0[%c0_19, %c144] : memref<4x768xf32, #tpu.memory_space<vmem>>, vector<4x512xf32>
    %51 = vector.extract_strided_slice %2 {offsets = [7, 0], sizes = [1, 512], strides = [1, 1]} : vector<9x512xf32> to vector<1x512xf32>
    %52 = vector.broadcast %51 : vector<1x512xf32> to vector<4x512xf32>
    %53 = arith.mulf %50, %52 : vector<4x512xf32>
    %54 = vector.extract_strided_slice %0 {offsets = [28, 0], sizes = [4, 4], strides = [1, 1]} : vector<36x4xf32> to vector<4x4xf32>
    %cst_20 = arith.constant dense<0.000000e+00> : vector<4x512xf32>
    %55 = tpu.matmul %54, %53, %cst_20 {dimension_numbers = #tpu.dot_dimension_numbers<[1], [0], [0], [1], [0, 0, 1, 1], [], []>} : vector<4x4xf32>, vector<4x512xf32>, vector<4x512xf32> -> vector<4x512xf32>
    %56 = arith.addf %49, %55 : vector<4x512xf32>
    %c0_21 = arith.constant 0 : index
    %c145 = arith.constant 145 : index
    %57 = vector.load %arg0[%c0_21, %c145] : memref<4x768xf32, #tpu.memory_space<vmem>>, vector<4x512xf32>
    %58 = vector.extract_strided_slice %2 {offsets = [8, 0], sizes = [1, 512], strides = [1, 1]} : vector<9x512xf32> to vector<1x512xf32>
    %59 = vector.broadcast %58 : vector<1x512xf32> to vector<4x512xf32>
    %60 = arith.mulf %57, %59 : vector<4x512xf32>
    %61 = vector.extract_strided_slice %0 {offsets = [32, 0], sizes = [4, 4], strides = [1, 1]} : vector<36x4xf32> to vector<4x4xf32>
    %cst_22 = arith.constant dense<0.000000e+00> : vector<4x512xf32>
    %62 = tpu.matmul %61, %60, %cst_22 {dimension_numbers = #tpu.dot_dimension_numbers<[1], [0], [0], [1], [0, 0, 1, 1], [], []>} : vector<4x4xf32>, vector<4x512xf32>, vector<4x512xf32> -> vector<4x512xf32>
    %63 = arith.addf %56, %62 : vector<4x512xf32>
    %cst_23 = arith.constant 0.000000e+00 : f32
    %64 = vector.broadcast %cst_23 : f32 to vector<4x512xf32>
    %65 = arith.maximumf %63, %64 : vector<4x512xf32>
    %cst_24 = arith.constant 0.000000e+00 : f32
    %66 = vector.broadcast %cst_24 : f32 to vector<4x128xf32>
    %c0_25 = arith.constant 0 : index
    %c0_26 = arith.constant 0 : index
    %67 = vector.load %arg5[%c0_25, %c0_26] : memref<4x768xf32, #tpu.memory_space<vmem>>, vector<4x128xf32>
    tpu.vector_store %arg5[%c0_25, %c0_26], %66 {strides = array<i32>} : memref<4x768xf32, #tpu.memory_space<vmem>>, vector<4x128xf32>,
    %cst_27 = arith.constant 0.000000e+00 : f32
    %68 = vector.broadcast %cst_27 : f32 to vector<4x128xf32>
    %c0_28 = arith.constant 0 : index
    %c640 = arith.constant 640 : index
    %69 = vector.load %arg5[%c0_28, %c640] : memref<4x768xf32, #tpu.memory_space<vmem>>, vector<4x128xf32>
    tpu.vector_store %arg5[%c0_28, %c640], %68 {strides = array<i32>} : memref<4x768xf32, #tpu.memory_space<vmem>>, vector<4x128xf32>,
    %c0_29 = arith.constant 0 : index
    %c128_30 = arith.constant 128 : index
    %70 = vector.load %arg5[%c0_29, %c128_30] : memref<4x768xf32, #tpu.memory_space<vmem>>, vector<4x512xf32>
    tpu.vector_store %arg5[%c0_29, %c128_30], %65 {strides = array<i32>} : memref<4x768xf32, #tpu.memory_space<vmem>>, vector<4x512xf32>,
    %cst_31 = arith.constant 0.000000e+00 : f32
    %71 = vector.broadcast %cst_31 : f32 to vector<4x512xf32>
    %c0_32 = arith.constant 0 : index
    %c111_33 = arith.constant 111 : index
    %72 = vector.load %arg5[%c0_32, %c111_33] : memref<4x768xf32, #tpu.memory_space<vmem>>, vector<4x512xf32>
    %73 = vector.extract_strided_slice %2 {offsets = [0, 0], sizes = [1, 512], strides = [1, 1]} : vector<9x512xf32> to vector<1x512xf32>
    %74 = vector.broadcast %73 : vector<1x512xf32> to vector<4x512xf32>
    %75 = arith.mulf %72, %74 : vector<4x512xf32>
    %76 = vector.extract_strided_slice %1 {offsets = [0, 0], sizes = [4, 4], strides = [1, 1]} : vector<36x4xf32> to vector<4x4xf32>
    %cst_34 = arith.constant dense<0.000000e+00> : vector<4x512xf32>
    %77 = tpu.matmul %76, %75, %cst_34 {dimension_numbers = #tpu.dot_dimension_numbers<[1], [0], [0], [1], [0, 0, 1, 1], [], []>} : vector<4x4xf32>, vector<4x512xf32>, vector<4x512xf32> -> vector<4x512xf32>
    %78 = arith.addf %71, %77 : vector<4x512xf32>
    %c0_35 = arith.constant 0 : index
    %c112_36 = arith.constant 112 : index
    %79 = vector.load %arg5[%c0_35, %c112_36] : memref<4x768xf32, #tpu.memory_space<vmem>>, vector<4x512xf32>
    %80 = vector.extract_strided_slice %2 {offsets = [1, 0], sizes = [1, 512], strides = [1, 1]} : vector<9x512xf32> to vector<1x512xf32>
    %81 = vector.broadcast %80 : vector<1x512xf32> to vector<4x512xf32>
    %82 = arith.mulf %79, %81 : vector<4x512xf32>
    %83 = vector.extract_strided_slice %1 {offsets = [4, 0], sizes = [4, 4], strides = [1, 1]} : vector<36x4xf32> to vector<4x4xf32>
    %cst_37 = arith.constant dense<0.000000e+00> : vector<4x512xf32>
    %84 = tpu.matmul %83, %82, %cst_37 {dimension_numbers = #tpu.dot_dimension_numbers<[1], [0], [0], [1], [0, 0, 1, 1], [], []>} : vector<4x4xf32>, vector<4x512xf32>, vector<4x512xf32> -> vector<4x512xf32>
    %85 = arith.addf %78, %84 : vector<4x512xf32>
    %c0_38 = arith.constant 0 : index
    %c113_39 = arith.constant 113 : index
    %86 = vector.load %arg5[%c0_38, %c113_39] : memref<4x768xf32, #tpu.memory_space<vmem>>, vector<4x512xf32>
    %87 = vector.extract_strided_slice %2 {offsets = [2, 0], sizes = [1, 512], strides = [1, 1]} : vector<9x512xf32> to vector<1x512xf32>
    %88 = vector.broadcast %87 : vector<1x512xf32> to vector<4x512xf32>
    %89 = arith.mulf %86, %88 : vector<4x512xf32>
    %90 = vector.extract_strided_slice %1 {offsets = [8, 0], sizes = [4, 4], strides = [1, 1]} : vector<36x4xf32> to vector<4x4xf32>
    %cst_40 = arith.constant dense<0.000000e+00> : vector<4x512xf32>
    %91 = tpu.matmul %90, %89, %cst_40 {dimension_numbers = #tpu.dot_dimension_numbers<[1], [0], [0], [1], [0, 0, 1, 1], [], []>} : vector<4x4xf32>, vector<4x512xf32>, vector<4x512xf32> -> vector<4x512xf32>
    %92 = arith.addf %85, %91 : vector<4x512xf32>
    %c0_41 = arith.constant 0 : index
    %c127_42 = arith.constant 127 : index
    %93 = vector.load %arg5[%c0_41, %c127_42] : memref<4x768xf32, #tpu.memory_space<vmem>>, vector<4x512xf32>
    %94 = vector.extract_strided_slice %2 {offsets = [3, 0], sizes = [1, 512], strides = [1, 1]} : vector<9x512xf32> to vector<1x512xf32>
    %95 = vector.broadcast %94 : vector<1x512xf32> to vector<4x512xf32>
    %96 = arith.mulf %93, %95 : vector<4x512xf32>
    %97 = vector.extract_strided_slice %1 {offsets = [12, 0], sizes = [4, 4], strides = [1, 1]} : vector<36x4xf32> to vector<4x4xf32>
    %cst_43 = arith.constant dense<0.000000e+00> : vector<4x512xf32>
    %98 = tpu.matmul %97, %96, %cst_43 {dimension_numbers = #tpu.dot_dimension_numbers<[1], [0], [0], [1], [0, 0, 1, 1], [], []>} : vector<4x4xf32>, vector<4x512xf32>, vector<4x512xf32> -> vector<4x512xf32>
    %99 = arith.addf %92, %98 : vector<4x512xf32>
    %c0_44 = arith.constant 0 : index
    %c128_45 = arith.constant 128 : index
    %100 = vector.load %arg5[%c0_44, %c128_45] : memref<4x768xf32, #tpu.memory_space<vmem>>, vector<4x512xf32>
    %101 = vector.extract_strided_slice %1 {offsets = [16, 0], sizes = [4, 4], strides = [1, 1]} : vector<36x4xf32> to vector<4x4xf32>
    %cst_46 = arith.constant dense<0.000000e+00> : vector<4x512xf32>
    %102 = tpu.matmul %101, %100, %cst_46 {dimension_numbers = #tpu.dot_dimension_numbers<[1], [0], [0], [1], [0, 0, 1, 1], [], []>} : vector<4x4xf32>, vector<4x512xf32>, vector<4x512xf32> -> vector<4x512xf32>
    %103 = arith.addf %99, %102 : vector<4x512xf32>
    %c0_47 = arith.constant 0 : index
    %c129_48 = arith.constant 129 : index
    %104 = vector.load %arg5[%c0_47, %c129_48] : memref<4x768xf32, #tpu.memory_space<vmem>>, vector<4x512xf32>
    %105 = vector.extract_strided_slice %2 {offsets = [5, 0], sizes = [1, 512], strides = [1, 1]} : vector<9x512xf32> to vector<1x512xf32>
    %106 = vector.broadcast %105 : vector<1x512xf32> to vector<4x512xf32>
    %107 = arith.mulf %104, %106 : vector<4x512xf32>
    %108 = vector.extract_strided_slice %1 {offsets = [20, 0], sizes = [4, 4], strides = [1, 1]} : vector<36x4xf32> to vector<4x4xf32>
    %cst_49 = arith.constant dense<0.000000e+00> : vector<4x512xf32>
    %109 = tpu.matmul %108, %107, %cst_49 {dimension_numbers = #tpu.dot_dimension_numbers<[1], [0], [0], [1], [0, 0, 1, 1], [], []>} : vector<4x4xf32>, vector<4x512xf32>, vector<4x512xf32> -> vector<4x512xf32>
    %110 = arith.addf %103, %109 : vector<4x512xf32>
    %c0_50 = arith.constant 0 : index
    %c143_51 = arith.constant 143 : index
    %111 = vector.load %arg5[%c0_50, %c143_51] : memref<4x768xf32, #tpu.memory_space<vmem>>, vector<4x512xf32>
    %112 = vector.extract_strided_slice %2 {offsets = [6, 0], sizes = [1, 512], strides = [1, 1]} : vector<9x512xf32> to vector<1x512xf32>
    %113 = vector.broadcast %112 : vector<1x512xf32> to vector<4x512xf32>
    %114 = arith.mulf %111, %113 : vector<4x512xf32>
    %115 = vector.extract_strided_slice %1 {offsets = [24, 0], sizes = [4, 4], strides = [1, 1]} : vector<36x4xf32> to vector<4x4xf32>
    %cst_52 = arith.constant dense<0.000000e+00> : vector<4x512xf32>
    %116 = tpu.matmul %115, %114, %cst_52 {dimension_numbers = #tpu.dot_dimension_numbers<[1], [0], [0], [1], [0, 0, 1, 1], [], []>} : vector<4x4xf32>, vector<4x512xf32>, vector<4x512xf32> -> vector<4x512xf32>
    %117 = arith.addf %110, %116 : vector<4x512xf32>
    %c0_53 = arith.constant 0 : index
    %c144_54 = arith.constant 144 : index
    %118 = vector.load %arg5[%c0_53, %c144_54] : memref<4x768xf32, #tpu.memory_space<vmem>>, vector<4x512xf32>
    %119 = vector.extract_strided_slice %2 {offsets = [7, 0], sizes = [1, 512], strides = [1, 1]} : vector<9x512xf32> to vector<1x512xf32>
    %120 = vector.broadcast %119 : vector<1x512xf32> to vector<4x512xf32>
    %121 = arith.mulf %118, %120 : vector<4x512xf32>
    %122 = vector.extract_strided_slice %1 {offsets = [28, 0], sizes = [4, 4], strides = [1, 1]} : vector<36x4xf32> to vector<4x4xf32>
    %cst_55 = arith.constant dense<0.000000e+00> : vector<4x512xf32>
    %123 = tpu.matmul %122, %121, %cst_55 {dimension_numbers = #tpu.dot_dimension_numbers<[1], [0], [0], [1], [0, 0, 1, 1], [], []>} : vector<4x4xf32>, vector<4x512xf32>, vector<4x512xf32> -> vector<4x512xf32>
    %124 = arith.addf %117, %123 : vector<4x512xf32>
    %c0_56 = arith.constant 0 : index
    %c145_57 = arith.constant 145 : index
    %125 = vector.load %arg5[%c0_56, %c145_57] : memref<4x768xf32, #tpu.memory_space<vmem>>, vector<4x512xf32>
    %126 = vector.extract_strided_slice %2 {offsets = [8, 0], sizes = [1, 512], strides = [1, 1]} : vector<9x512xf32> to vector<1x512xf32>
    %127 = vector.broadcast %126 : vector<1x512xf32> to vector<4x512xf32>
    %128 = arith.mulf %125, %127 : vector<4x512xf32>
    %129 = vector.extract_strided_slice %1 {offsets = [32, 0], sizes = [4, 4], strides = [1, 1]} : vector<36x4xf32> to vector<4x4xf32>
    %cst_58 = arith.constant dense<0.000000e+00> : vector<4x512xf32>
    %130 = tpu.matmul %129, %128, %cst_58 {dimension_numbers = #tpu.dot_dimension_numbers<[1], [0], [0], [1], [0, 0, 1, 1], [], []>} : vector<4x4xf32>, vector<4x512xf32>, vector<4x512xf32> -> vector<4x512xf32>
    %131 = arith.addf %124, %130 : vector<4x512xf32>
    %c0_59 = arith.constant 0 : index
    %c128_60 = arith.constant 128 : index
    %132 = vector.load %arg0[%c0_59, %c128_60] : memref<4x768xf32, #tpu.memory_space<vmem>>, vector<4x512xf32>
    %133 = arith.addf %132, %131 : vector<4x512xf32>
    %c0_61 = arith.constant 0 : index
    %c0_62 = arith.constant 0 : index
    %134 = vector.load %arg4[%c0_61, %c0_62] : memref<4x512xf32, #tpu.memory_space<vmem>>, vector<4x512xf32>
    tpu.vector_store %arg4[%c0_61, %c0_62], %133 {strides = array<i32>} : memref<4x512xf32, #tpu.memory_space<vmem>>, vector<4x512xf32>,
    return
  }
}

</mosaic_0001>

<llo_original>
// kernel: tpu_custom_call.1
$region0: #{tpu_custom_call.1}
  #allocation0 [shape = 'u32[]', space=smem, size = 0x4, offset = 0x4, fixed_abs, tag = 'smem constant byte address 0x4 - core index']
  #allocation1 [shape = 'u32[144,128]{1,0:T(1,128)}', space=vmem, size = 0x12000, scoped, tag = 'internal scratch']
  #allocation2 [shape = 'f32[4,768]{1,0:T(4,128)}', space=vmem, size = 0x3000, scoped, tag = 'scratch operand']
  %s0 = inlined_call_operand.vmem [shape: f32[4,768], index: 0, kind: input, shape index: {}]
  %s1 = inlined_call_operand.vmem [shape: f32[36,4], index: 1, kind: input, shape index: {}]
  %s2 = inlined_call_operand.vmem [shape: f32[36,4], index: 2, kind: input, shape index: {}]
  %s3 = inlined_call_operand.vmem [shape: f32[9,512], index: 3, kind: input, shape index: {}]
  %s4 = inlined_call_operand.hbm [shape: f32[4,512], index: 4, kind: output, shape index: {}]
  %s5 = sld [smem:[#allocation0]]
  $region26: #{tpu_custom_call.1} parent=0
    _
  %s7 = ssub.s32 1, %s5
  %s8 = scalar_select 0, %s7, %s5
  $region1: #{tpu_custom_call.1} parent=0
    #allocation3 [shape = 'u8[8192]{0}', space=vmem, size = 0x2000, scoped, tag = 'output window, operand 0, single buffered']
    #allocation4 [shape = 's32[1]{0}', space=sflag, size = 0x4, scoped, tag = 'scoped memory for tpu_custom_call.1']
    %9 = vsyncpa [#allocation4], 0
    // Predicated region
    $region2: #{tpu_custom_call.1} parent=1 // pred_check
      _
    $region3: #{tpu_custom_call.1} parent=1 // pred_check_branch
      %11 = sbr.rel (0) target = $region5
    $region4: #{tpu_custom_call.1} parent=1 // pred_region
      _
    $region5: #{tpu_custom_call.1} parent=1 // pred_fallthru
      _
    // Predicated region
    $region6: #{tpu_custom_call.1} parent=1 // pred_check
      _
    $region7: #{tpu_custom_call.1} parent=1 // pred_check_branch
      %13 = sbr.rel (0) target = $region9
    $region8: #{tpu_custom_call.1} parent=1 // pred_region
      _
    $region9: #{tpu_custom_call.1} parent=1 // pred_fallthru
      _
    // Predicated region
    $region10: #{tpu_custom_call.1} parent=1 // pred_check
      _
    $region11: #{tpu_custom_call.1} parent=1 // pred_check_branch
      %15 = sbr.rel (0) target = $region13
    $region12: #{tpu_custom_call.1} parent=1 // pred_region
      _
    $region13: #{tpu_custom_call.1} parent=1 // pred_fallthru
      _
    // Predicated region
    $region14: #{tpu_custom_call.1} parent=1 // pred_check
      _
    $region15: #{tpu_custom_call.1} parent=1 // pred_check_branch
      %17 = sbr.rel (0) target = $region17
    $region16: #{tpu_custom_call.1} parent=1 // pred_region
      _
    $region17: #{tpu_custom_call.1} parent=1 // pred_fallthru
      _
    %v18 = vld [vmem:[%s1] sm:$0xff]
    %v19 = vld [vmem:[%s1 + $0x8] sm:$0xff]
    %v20 = vld [vmem:[%s1 + $0x10] sm:$0xff]
    %v21 = vld [vmem:[%s1 + $0x18] sm:$0xff]
    %v22 = vld [vmem:[%s1 + $0x20] sm:$0xf]
    %v23 = vld [vmem:[%s2] sm:$0xff]
    %v24 = vld [vmem:[%s2 + $0x8] sm:$0xff]
    %v25 = vld [vmem:[%s2 + $0x10] sm:$0xff]
    %v26 = vld [vmem:[%s2 + $0x18] sm:$0xff]
    %v27 = vld [vmem:[%s2 + $0x20] sm:$0xf]
    %v28 = vld [vmem:[%s3] sm:$0xff]
    %v29 = vld [vmem:[%s3 + $0x8] sm:$0xff]
    %v30 = vld [vmem:[%s3 + $0x10] sm:$0xff]
    %v31 = vld [vmem:[%s3 + $0x18] sm:$0xff]
    %v32 = vld [vmem:[%s3 + $0x20] sm:$0x1]
    %v33 = vld [vmem:[%s3 + $0x28] sm:$0x1]
    %v34 = vld [vmem:[%s3 + $0x30] sm:$0x1]
    %v35 = vld [vmem:[%s3 + $0x38] sm:$0x1]
    %v36 = vld [vmem:[%s0] sm:$0xff]
    %v37 = vld [vmem:[%s0 + $0x8] sm:$0xff]
    %v38 = vld [vmem:[%s0 + $0x10] sm:$0xf]
    %v39 = vlaneseq
    %v40 = vshrl.u32 %v39, 7
    %v41 = vsub.s32 0, %v40
    %v42 = vrot.slane %v28, %v41
    %v43 = vlaneseq
    %v44 = vshrl.u32 %v43, 7
    %v45 = vsub.s32 0, %v44
    %v46 = vrot.slane %v29, %v45
    %v47 = vlaneseq
    %v48 = vshrl.u32 %v47, 7
    %v49 = vsub.s32 0, %v48
    %v50 = vrot.slane %v30, %v49
    %v51 = vlaneseq
    %v52 = vshrl.u32 %v51, 7
    %v53 = vsub.s32 0, %v52
    %v54 = vrot.slane %v31, %v53
    %v59 = vcombine.low %v42, %v46
    %v60 = vcombine.low %v50, %v54
    %61 = vrot.lane.b32.xlu0 %v59, 111
    %v62 = vpop.permute.xlu0 %61
    %63 = vrot.lane.b32.xlu0 %v60, 111
    %v64 = vpop.permute.xlu0 %63
    %v65 = vrot.slane %v62, 4
    %v66 = vrot.slane %v64, 4
    %vm67 = vcmask 908288
    %v68 = vsel %vm67, %v65, %v62
    %vm69 = vcmask 1043456
    %v70 = vsel %vm69, %v65, %v66
    %v71 = vsel %vm67, %v70, %v64
    %v75 = vmul.f32 %v36, %v68
    %v76 = vmul.f32 %v37, %v71
    %v77 = vmul.f32 %v38, %v66
    %v78 = vlaneseq
    %v79 = vshrl.u32 %v78, 7
    %v80 = vsub.s32 1, %v79
    %v81 = vrot.slane %v28, %v80
    %v82 = vlaneseq
    %v83 = vshrl.u32 %v82, 7
    %v84 = vsub.s32 1, %v83
    %v85 = vrot.slane %v29, %v84
    %v86 = vlaneseq
    %v87 = vshrl.u32 %v86, 7
    %v88 = vsub.s32 1, %v87
    %v89 = vrot.slane %v30, %v88
    %v90 = vlaneseq
    %v91 = vshrl.u32 %v90, 7
    %v92 = vsub.s32 1, %v91
    %v93 = vrot.slane %v31, %v92
    %v98 = vcombine.low %v81, %v85
    %v99 = vcombine.low %v89, %v93
    %100 = vrot.lane.b32.xlu0 %v98, 112
    %v101 = vpop.permute.xlu0 %100
    %102 = vrot.lane.b32.xlu0 %v99, 112
    %v103 = vpop.permute.xlu0 %102
    %v104 = vrot.slane %v101, 4
    %v105 = vrot.slane %v103, 4
    %vm106 = vcmask 916480
    %v107 = vsel %vm106, %v104, %v101
    %v108 = vsel %vm69, %v104, %v105
    %v109 = vsel %vm106, %v108, %v103
    %v113 = vmul.f32 %v36, %v107
    %v114 = vmul.f32 %v37, %v109
    %v115 = vmul.f32 %v38, %v105
    %v117 = vrot.slane %v18, 4
    %v121 = vcombine.high %v113, %v113
    %v122 = vcombine.high %v114, %v114
    %123 = vrot.lane.b32.xlu0 %v113, 16
    %v124 = vpop.permute.xlu0 %123
    %125 = vrot.lane.b32.xlu0 %v121, 16
    %v126 = vpop.permute.xlu0 %125
    %127 = vrot.lane.b32.xlu0 %v114, 16
    %v128 = vpop.permute.xlu0 %127
    %129 = vrot.lane.b32.xlu0 %v122, 16
    %v130 = vpop.permute.xlu0 %129
    %131 = vrot.lane.b32.xlu0 %v115, 16
    %v132 = vpop.permute.xlu0 %131
    %vm133 = vcmask 130048
    %v134 = vsel %vm133, %v124, %v126
    %v135 = vsel %vm133, %v126, %v128
    %v136 = vsel %vm133, %v128, %v130
    %v137 = vsel %vm133, %v130, %v132
    %vm138 = vcmask 31744
    %v139 = vsel %vm138, %v117, 0
    %v141 = vsel %vm69, %v134, 0
    %v143 = vsel %vm69, %v135, 0
    %v145 = vsel %vm69, %v136, 0
    %v147 = vsel %vm69, %v137, 0
    %149 = vmatprep.subr.mxu0 %v143
    %150 = vmatpush1.msra.mxu0 %v141
    %151 = vmatprep.subr.mxu0 0.0
    %152 = vmatpush1.msra.mxu0 0.0
    %153 = vmatprep.subr.mxu0 0.0
    %154 = vmatpush1.msra.mxu0 0.0
    %155 = vmatprep.subr.mxu0 0.0
    %156 = vmatpush1.msra.mxu0 0.0
    %157 = vmatprep.subr.mxu0 0.0
    %158 = vmatpush1.msra.mxu0 0.0
    %159 = vmatprep.subr.mxu0 0.0
    %160 = vmatpush1.msra.mxu0 0.0
    %161 = vmatprep.subr.mxu0 0.0
    %162 = vmatpush1.msra.mxu0 0.0
    %163 = vmatprep.subr.mxu0 0.0
    %164 = vmatpush1.msra.mxu0 0.0
    %165 = vmatprep.subr.mxu0 0.0
    %166 = vmatpush1.msra.mxu0 0.0
    %167 = vmatprep.subr.mxu0 0.0
    %168 = vmatpush1.msra.mxu0 0.0
    %169 = vmatprep.subr.mxu0 0.0
    %170 = vmatpush1.msra.mxu0 0.0
    %171 = vmatprep.subr.mxu0 0.0
    %172 = vmatpush1.msra.mxu0 0.0
    %173 = vmatprep.subr.mxu0 0.0
    %174 = vmatpush1.msra.mxu0 0.0
    %175 = vmatprep.subr.mxu0 0.0
    %176 = vmatpush1.msra.mxu0 0.0
    %177 = vmatprep.subr.mxu0 0.0
    %178 = vmatpush1.msra.mxu0 0.0
    %179 = vmatprep.subr.mxu0 0.0
    %180 = vmatpush1.msra.mxu0 0.0
    %181 = vmatprep.subr.mxu0 0.0
    %182 = vmatpush1.msra.mxu0 0.0
    %183 = vmatprep.subr.mxu0 0.0
    %184 = vmatpush1.msra.mxu0 0.0
    %185 = vmatprep.subr.mxu0 0.0
    %186 = vmatpush1.msra.mxu0 0.0
    %187 = vmatprep.subr.mxu0 0.0
    %188 = vmatpush1.msra.mxu0 0.0
    %189 = vmatprep.subr.mxu0 0.0
    %190 = vmatpush1.msra.mxu0 0.0
    %191 = vmatprep.subr.mxu0 0.0
    %192 = vmatpush1.msra.mxu0 0.0
    %193 = vmatprep.subr.mxu0 0.0
    %194 = vmatpush1.msra.mxu0 0.0
    %195 = vmatprep.subr.mxu0 0.0
    %196 = vmatpush1.msra.mxu0 0.0
    %197 = vmatprep.subr.mxu0 0.0
    %198 = vmatpush1.msra.mxu0 0.0
    %199 = vmatprep.subr.mxu0 0.0
    %200 = vmatpush1.msra.mxu0 0.0
    %201 = vmatprep.subr.mxu0 0.0
    %202 = vmatpush1.msra.mxu0 0.0
    %203 = vmatprep.subr.mxu0 0.0
    %204 = vmatpush1.msra.mxu0 0.0
    %205 = vmatprep.subr.mxu0 0.0
    %206 = vmatpush1.msra.mxu0 0.0
    %207 = vmatprep.subr.mxu0 0.0
    %208 = vmatpush1.msra.mxu0 0.0
    %209 = vmatprep.subr.mxu0 0.0
    %210 = vmatpush1.msra.mxu0 0.0
    %211 = vmatprep.subr.mxu0 0.0
    %212 = vmatpush1.msra.mxu0 0.0
    %213 = vmatprep.mubr.f32.mxu0 0.0
    %214 = vmatmul.mubr.f32.gmra.mrb[0].mxu0 %v139
    %v215 = vpop.f32.mrb[0].mxu0
    %v216 = vadd.f32 0.0, %v215
    %v217 = vpop.f32.mrb[0].mxu0
    %v218 = vadd.f32 0.0, %v217
    %219 = vdwg.mxu0
    %220 = vmatprep.subr.mxu0 %v147
    %221 = vmatpush1.msra.mxu0 %v145
    %222 = vmatprep.subr.mxu0 0.0
    %223 = vmatpush1.msra.mxu0 0.0
    %224 = vmatprep.subr.mxu0 0.0
    %225 = vmatpush1.msra.mxu0 0.0
    %226 = vmatprep.subr.mxu0 0.0
    %227 = vmatpush1.msra.mxu0 0.0
    %228 = vmatprep.subr.mxu0 0.0
    %229 = vmatpush1.msra.mxu0 0.0
    %230 = vmatprep.subr.mxu0 0.0
    %231 = vmatpush1.msra.mxu0 0.0
    %232 = vmatprep.subr.mxu0 0.0
    %233 = vmatpush1.msra.mxu0 0.0
    %234 = vmatprep.subr.mxu0 0.0
    %235 = vmatpush1.msra.mxu0 0.0
    %236 = vmatprep.subr.mxu0 0.0
    %237 = vmatpush1.msra.mxu0 0.0
    %238 = vmatprep.subr.mxu0 0.0
    %239 = vmatpush1.msra.mxu0 0.0
    %240 = vmatprep.subr.mxu0 0.0
    %241 = vmatpush1.msra.mxu0 0.0
    %242 = vmatprep.subr.mxu0 0.0
    %243 = vmatpush1.msra.mxu0 0.0
    %244 = vmatprep.subr.mxu0 0.0
    %245 = vmatpush1.msra.mxu0 0.0
    %246 = vmatprep.subr.mxu0 0.0
    %247 = vmatpush1.msra.mxu0 0.0
    %248 = vmatprep.subr.mxu0 0.0
    %249 = vmatpush1.msra.mxu0 0.0
    %250 = vmatprep.subr.mxu0 0.0
    %251 = vmatpush1.msra.mxu0 0.0
    %252 = vmatprep.subr.mxu0 0.0
    %253 = vmatpush1.msra.mxu0 0.0
    %254 = vmatprep.subr.mxu0 0.0
    %255 = vmatpush1.msra.mxu0 0.0
    %256 = vmatprep.subr.mxu0 0.0
    %257 = vmatpush1.msra.mxu0 0.0
    %258 = vmatprep.subr.mxu0 0.0
    %259 = vmatpush1.msra.mxu0 0.0
    %260 = vmatprep.subr.mxu0 0.0
    %261 = vmatpush1.msra.mxu0 0.0
    %262 = vmatprep.subr.mxu0 0.0
    %263 = vmatpush1.msra.mxu0 0.0
    %264 = vmatprep.subr.mxu0 0.0
    %265 = vmatpush1.msra.mxu0 0.0
    %266 = vmatprep.subr.mxu0 0.0
    %267 = vmatpush1.msra.mxu0 0.0
    %268 = vmatprep.subr.mxu0 0.0
    %269 = vmatpush1.msra.mxu0 0.0
    %270 = vmatprep.subr.mxu0 0.0
    %271 = vmatpush1.msra.mxu0 0.0
    %272 = vmatprep.subr.mxu0 0.0
    %273 = vmatpush1.msra.mxu0 0.0
    %274 = vmatprep.subr.mxu0 0.0
    %275 = vmatpush1.msra.mxu0 0.0
    %276 = vmatprep.subr.mxu0 0.0
    %277 = vmatpush1.msra.mxu0 0.0
    %278 = vmatprep.subr.mxu0 0.0
    %279 = vmatpush1.msra.mxu0 0.0
    %280 = vmatprep.subr.mxu0 0.0
    %281 = vmatpush1.msra.mxu0 0.0
    %282 = vmatprep.subr.mxu0 0.0
    %283 = vmatpush1.msra.mxu0 0.0
    %284 = vmatprep.mubr.f32.mxu0 0.0
    %285 = vmatmul.mubr.f32.gmra.mrb[0].mxu0 %v139
    %v286 = vpop.f32.mrb[0].mxu0
    %v287 = vadd.f32 0.0, %v286
    %v288 = vpop.f32.mrb[0].mxu0
    %v289 = vadd.f32 0.0, %v288
    %290 = vdwg.mxu0
    %v294 = vcombine.high %v75, %v75
    %v295 = vcombine.high %v76, %v76
    %296 = vrot.lane.b32.xlu0 %v75, 17
    %v297 = vpop.permute.xlu0 %296
    %298 = vrot.lane.b32.xlu0 %v294, 17
    %v299 = vpop.permute.xlu0 %298
    %300 = vrot.lane.b32.xlu0 %v76, 17
    %v301 = vpop.permute.xlu0 %300
    %302 = vrot.lane.b32.xlu0 %v295, 17
    %v303 = vpop.permute.xlu0 %302
    %304 = vrot.lane.b32.xlu0 %v77, 17
    %v305 = vpop.permute.xlu0 %304
    %vm306 = vcmask 138240
    %v307 = vsel %vm306, %v297, %v299
    %v308 = vsel %vm306, %v299, %v301
    %v309 = vsel %vm306, %v301, %v303
    %v310 = vsel %vm306, %v303, %v305
    %v311 = vsel %vm138, %v18, 0
    %v313 = vsel %vm69, %v307, 0
    %v315 = vsel %vm69, %v308, 0
    %v317 = vsel %vm69, %v309, 0
    %v319 = vsel %vm69, %v310, 0
    %321 = vmatprep.subr.mxu0 %v315
    %322 = vmatpush1.msra.mxu0 %v313
    %323 = vmatprep.subr.mxu0 0.0
    %324 = vmatpush1.msra.mxu0 0.0
    %325 = vmatprep.subr.mxu0 0.0
    %326 = vmatpush1.msra.mxu0 0.0
    %327 = vmatprep.subr.mxu0 0.0
    %328 = vmatpush1.msra.mxu0 0.0
    %329 = vmatprep.subr.mxu0 0.0
    %330 = vmatpush1.msra.mxu0 0.0
    %331 = vmatprep.subr.mxu0 0.0
    %332 = vmatpush1.msra.mxu0 0.0
    %333 = vmatprep.subr.mxu0 0.0
    %334 = vmatpush1.msra.mxu0 0.0
    %335 = vmatprep.subr.mxu0 0.0
    %336 = vmatpush1.msra.mxu0 0.0
    %337 = vmatprep.subr.mxu0 0.0
    %338 = vmatpush1.msra.mxu0 0.0
    %339 = vmatprep.subr.mxu0 0.0
    %340 = vmatpush1.msra.mxu0 0.0
    %341 = vmatprep.subr.mxu0 0.0
    %342 = vmatpush1.msra.mxu0 0.0
    %343 = vmatprep.subr.mxu0 0.0
    %344 = vmatpush1.msra.mxu0 0.0
    %345 = vmatprep.subr.mxu0 0.0
    %346 = vmatpush1.msra.mxu0 0.0
    %347 = vmatprep.subr.mxu0 0.0
    %348 = vmatpush1.msra.mxu0 0.0
    %349 = vmatprep.subr.mxu0 0.0
    %350 = vmatpush1.msra.mxu0 0.0
    %351 = vmatprep.subr.mxu0 0.0
    %352 = vmatpush1.msra.mxu0 0.0
    %353 = vmatprep.subr.mxu0 0.0
    %354 = vmatpush1.msra.mxu0 0.0
    %355 = vmatprep.subr.mxu0 0.0
    %356 = vmatpush1.msra.mxu0 0.0
    %357 = vmatprep.subr.mxu0 0.0
    %358 = vmatpush1.msra.mxu0 0.0
    %359 = vmatprep.subr.mxu0 0.0
    %360 = vmatpush1.msra.mxu0 0.0
    %361 = vmatprep.subr.mxu0 0.0
    %362 = vmatpush1.msra.mxu0 0.0
    %363 = vmatprep.subr.mxu0 0.0
    %364 = vmatpush1.msra.mxu0 0.0
    %365 = vmatprep.subr.mxu0 0.0
    %366 = vmatpush1.msra.mxu0 0.0
    %367 = vmatprep.subr.mxu0 0.0
    %368 = vmatpush1.msra.mxu0 0.0
    %369 = vmatprep.subr.mxu0 0.0
    %370 = vmatpush1.msra.mxu0 0.0
    %371 = vmatprep.subr.mxu0 0.0
    %372 = vmatpush1.msra.mxu0 0.0
    %373 = vmatprep.subr.mxu0 0.0
    %374 = vmatpush1.msra.mxu0 0.0
    %375 = vmatprep.subr.mxu0 0.0
    %376 = vmatpush1.msra.mxu0 0.0
    %377 = vmatprep.subr.mxu0 0.0
    %378 = vmatpush1.msra.mxu0 0.0
    %379 = vmatprep.subr.mxu0 0.0
    %380 = vmatpush1.msra.mxu0 0.0
    %381 = vmatprep.subr.mxu0 0.0
    %382 = vmatpush1.msra.mxu0 0.0
    %383 = vmatprep.subr.mxu0 0.0
    %384 = vmatpush1.msra.mxu0 0.0
    %385 = vmatprep.mubr.f32.mxu0 0.0
    %386 = vmatmul.mubr.f32.gmra.mrb[0].mxu0 %v311
    %v387 = vpop.f32.mrb[0].mxu0
    %v388 = vadd.f32 %v216, %v387
    %v389 = vpop.f32.mrb[0].mxu0
    %v390 = vadd.f32 %v218, %v389
    %391 = vdwg.mxu0
    %392 = vmatprep.subr.mxu0 %v319
    %393 = vmatpush1.msra.mxu0 %v317
    %394 = vmatprep.subr.mxu0 0.0
    %395 = vmatpush1.msra.mxu0 0.0
    %396 = vmatprep.subr.mxu0 0.0
    %397 = vmatpush1.msra.mxu0 0.0
    %398 = vmatprep.subr.mxu0 0.0
    %399 = vmatpush1.msra.mxu0 0.0
    %400 = vmatprep.subr.mxu0 0.0
    %401 = vmatpush1.msra.mxu0 0.0
    %402 = vmatprep.subr.mxu0 0.0
    %403 = vmatpush1.msra.mxu0 0.0
    %404 = vmatprep.subr.mxu0 0.0
    %405 = vmatpush1.msra.mxu0 0.0
    %406 = vmatprep.subr.mxu0 0.0
    %407 = vmatpush1.msra.mxu0 0.0
    %408 = vmatprep.subr.mxu0 0.0
    %409 = vmatpush1.msra.mxu0 0.0
    %410 = vmatprep.subr.mxu0 0.0
    %411 = vmatpush1.msra.mxu0 0.0
    %412 = vmatprep.subr.mxu0 0.0
    %413 = vmatpush1.msra.mxu0 0.0
    %414 = vmatprep.subr.mxu0 0.0
    %415 = vmatpush1.msra.mxu0 0.0
    %416 = vmatprep.subr.mxu0 0.0
    %417 = vmatpush1.msra.mxu0 0.0
    %418 = vmatprep.subr.mxu0 0.0
    %419 = vmatpush1.msra.mxu0 0.0
    %420 = vmatprep.subr.mxu0 0.0
    %421 = vmatpush1.msra.mxu0 0.0
    %422 = vmatprep.subr.mxu0 0.0
    %423 = vmatpush1.msra.mxu0 0.0
    %424 = vmatprep.subr.mxu0 0.0
    %425 = vmatpush1.msra.mxu0 0.0
    %426 = vmatprep.subr.mxu0 0.0
    %427 = vmatpush1.msra.mxu0 0.0
    %428 = vmatprep.subr.mxu0 0.0
    %429 = vmatpush1.msra.mxu0 0.0
    %430 = vmatprep.subr.mxu0 0.0
    %431 = vmatpush1.msra.mxu0 0.0
    %432 = vmatprep.subr.mxu0 0.0
    %433 = vmatpush1.msra.mxu0 0.0
    %434 = vmatprep.subr.mxu0 0.0
    %435 = vmatpush1.msra.mxu0 0.0
    %436 = vmatprep.subr.mxu0 0.0
    %437 = vmatpush1.msra.mxu0 0.0
    %438 = vmatprep.subr.mxu0 0.0
    %439 = vmatpush1.msra.mxu0 0.0
    %440 = vmatprep.subr.mxu0 0.0
    %441 = vmatpush1.msra.mxu0 0.0
    %442 = vmatprep.subr.mxu0 0.0
    %443 = vmatpush1.msra.mxu0 0.0
    %444 = vmatprep.subr.mxu0 0.0
    %445 = vmatpush1.msra.mxu0 0.0
    %446 = vmatprep.subr.mxu0 0.0
    %447 = vmatpush1.msra.mxu0 0.0
    %448 = vmatprep.subr.mxu0 0.0
    %449 = vmatpush1.msra.mxu0 0.0
    %450 = vmatprep.subr.mxu0 0.0
    %451 = vmatpush1.msra.mxu0 0.0
    %452 = vmatprep.subr.mxu0 0.0
    %453 = vmatpush1.msra.mxu0 0.0
    %454 = vmatprep.subr.mxu0 0.0
    %455 = vmatpush1.msra.mxu0 0.0
    %456 = vmatprep.mubr.f32.mxu0 0.0
    %457 = vmatmul.mubr.f32.gmra.mrb[0].mxu0 %v311
    %v458 = vpop.f32.mrb[0].mxu0
    %v459 = vadd.f32 %v287, %v458
    %v460 = vpop.f32.mrb[0].mxu0
    %v461 = vadd.f32 %v289, %v460
    %462 = vdwg.mxu0
    %v463 = vld [vmem:[%s0] sm:$0xff]
    %v464 = vld [vmem:[%s0 + $0x8] sm:$0xff]
    %v465 = vld [vmem:[%s0 + $0x10] sm:$0xf]
    %v466 = vlaneseq
    %v467 = vshrl.u32 %v466, 7
    %v468 = vsub.s32 2, %v467
    %v469 = vrot.slane %v28, %v468
    %v470 = vlaneseq
    %v471 = vshrl.u32 %v470, 7
    %v472 = vsub.s32 2, %v471
    %v473 = vrot.slane %v29, %v472
    %v474 = vlaneseq
    %v475 = vshrl.u32 %v474, 7
    %v476 = vsub.s32 2, %v475
    %v477 = vrot.slane %v30, %v476
    %v478 = vlaneseq
    %v479 = vshrl.u32 %v478, 7
    %v480 = vsub.s32 2, %v479
    %v481 = vrot.slane %v31, %v480
    %v486 = vcombine.low %v469, %v473
    %v487 = vcombine.low %v477, %v481
    %488 = vrot.lane.b32.xlu0 %v486, 113
    %v489 = vpop.permute.xlu0 %488
    %490 = vrot.lane.b32.xlu0 %v487, 113
    %v491 = vpop.permute.xlu0 %490
    %v492 = vrot.slane %v489, 4
    %v493 = vrot.slane %v491, 4
    %vm494 = vcmask 924672
    %v495 = vsel %vm494, %v492, %v489
    %v496 = vsel %vm69, %v492, %v493
    %v497 = vsel %vm494, %v496, %v491
    %v501 = vmul.f32 %v463, %v495
    %v502 = vmul.f32 %v464, %v497
    %v503 = vmul.f32 %v465, %v493
    %v507 = vcombine.high %v501, %v501
    %v508 = vcombine.high %v502, %v502
    %509 = vrot.lane.b32.xlu0 %v501, 15
    %v510 = vpop.permute.xlu0 %509
    %511 = vrot.lane.b32.xlu0 %v507, 15
    %v512 = vpop.permute.xlu0 %511
    %513 = vrot.lane.b32.xlu0 %v502, 15
    %v514 = vpop.permute.xlu0 %513
    %515 = vrot.lane.b32.xlu0 %v508, 15
    %v516 = vpop.permute.xlu0 %515
    %517 = vrot.lane.b32.xlu0 %v503, 15
    %v518 = vpop.permute.xlu0 %517
    %vm519 = vcmask 121856
    %v520 = vsel %vm519, %v510, %v512
    %v521 = vsel %vm519, %v512, %v514
    %v522 = vsel %vm519, %v514, %v516
    %v523 = vsel %vm519, %v516, %v518
    %v525 = vsel %vm138, %v19, 0
    %v527 = vsel %vm69, %v520, 0
    %v529 = vsel %vm69, %v521, 0
    %v531 = vsel %vm69, %v522, 0
    %v533 = vsel %vm69, %v523, 0
    %535 = vmatprep.subr.mxu0 %v529
    %536 = vmatpush1.msra.mxu0 %v527
    %537 = vmatprep.subr.mxu0 0.0
    %538 = vmatpush1.msra.mxu0 0.0
    %539 = vmatprep.subr.mxu0 0.0
    %540 = vmatpush1.msra.mxu0 0.0
    %541 = vmatprep.subr.mxu0 0.0
    %542 = vmatpush1.msra.mxu0 0.0
    %543 = vmatprep.subr.mxu0 0.0
    %544 = vmatpush1.msra.mxu0 0.0
    %545 = vmatprep.subr.mxu0 0.0
    %546 = vmatpush1.msra.mxu0 0.0
    %547 = vmatprep.subr.mxu0 0.0
    %548 = vmatpush1.msra.mxu0 0.0
    %549 = vmatprep.subr.mxu0 0.0
    %550 = vmatpush1.msra.mxu0 0.0
    %551 = vmatprep.subr.mxu0 0.0
    %552 = vmatpush1.msra.mxu0 0.0
    %553 = vmatprep.subr.mxu0 0.0
    %554 = vmatpush1.msra.mxu0 0.0
    %555 = vmatprep.subr.mxu0 0.0
    %556 = vmatpush1.msra.mxu0 0.0
    %557 = vmatprep.subr.mxu0 0.0
    %558 = vmatpush1.msra.mxu0 0.0
    %559 = vmatprep.subr.mxu0 0.0
    %560 = vmatpush1.msra.mxu0 0.0
    %561 = vmatprep.subr.mxu0 0.0
    %562 = vmatpush1.msra.mxu0 0.0
    %563 = vmatprep.subr.mxu0 0.0
    %564 = vmatpush1.msra.mxu0 0.0
    %565 = vmatprep.subr.mxu0 0.0
    %566 = vmatpush1.msra.mxu0 0.0
    %567 = vmatprep.subr.mxu0 0.0
    %568 = vmatpush1.msra.mxu0 0.0
    %569 = vmatprep.subr.mxu0 0.0
    %570 = vmatpush1.msra.mxu0 0.0
    %571 = vmatprep.subr.mxu0 0.0
    %572 = vmatpush1.msra.mxu0 0.0
    %573 = vmatprep.subr.mxu0 0.0
    %574 = vmatpush1.msra.mxu0 0.0
    %575 = vmatprep.subr.mxu0 0.0
    %576 = vmatpush1.msra.mxu0 0.0
    %577 = vmatprep.subr.mxu0 0.0
    %578 = vmatpush1.msra.mxu0 0.0
    %579 = vmatprep.subr.mxu0 0.0
    %580 = vmatpush1.msra.mxu0 0.0
    %581 = vmatprep.subr.mxu0 0.0
    %582 = vmatpush1.msra.mxu0 0.0
    %583 = vmatprep.subr.mxu0 0.0
    %584 = vmatpush1.msra.mxu0 0.0
    %585 = vmatprep.subr.mxu0 0.0
    %586 = vmatpush1.msra.mxu0 0.0
    %587 = vmatprep.subr.mxu0 0.0
    %588 = vmatpush1.msra.mxu0 0.0
    %589 = vmatprep.subr.mxu0 0.0
    %590 = vmatpush1.msra.mxu0 0.0
    %591 = vmatprep.subr.mxu0 0.0
    %592 = vmatpush1.msra.mxu0 0.0
    %593 = vmatprep.subr.mxu0 0.0
    %594 = vmatpush1.msra.mxu0 0.0
    %595 = vmatprep.subr.mxu0 0.0
    %596 = vmatpush1.msra.mxu0 0.0
    %597 = vmatprep.subr.mxu0 0.0
    %598 = vmatpush1.msra.mxu0 0.0
    %599 = vmatprep.mubr.f32.mxu0 0.0
    %600 = vmatmul.mubr.f32.gmra.mrb[0].mxu0 %v525
    %v601 = vpop.f32.mrb[0].mxu0
    %v602 = vadd.f32 0.0, %v601
    %v603 = vpop.f32.mrb[0].mxu0
    %v604 = vadd.f32 0.0, %v603
    %605 = vdwg.mxu0
    %606 = vmatprep.subr.mxu0 %v533
    %607 = vmatpush1.msra.mxu0 %v531
    %608 = vmatprep.subr.mxu0 0.0
    %609 = vmatpush1.msra.mxu0 0.0
    %610 = vmatprep.subr.mxu0 0.0
    %611 = vmatpush1.msra.mxu0 0.0
    %612 = vmatprep.subr.mxu0 0.0
    %613 = vmatpush1.msra.mxu0 0.0
    %614 = vmatprep.subr.mxu0 0.0
    %615 = vmatpush1.msra.mxu0 0.0
    %616 = vmatprep.subr.mxu0 0.0
    %617 = vmatpush1.msra.mxu0 0.0
    %618 = vmatprep.subr.mxu0 0.0
    %619 = vmatpush1.msra.mxu0 0.0
    %620 = vmatprep.subr.mxu0 0.0
    %621 = vmatpush1.msra.mxu0 0.0
    %622 = vmatprep.subr.mxu0 0.0
    %623 = vmatpush1.msra.mxu0 0.0
    %624 = vmatprep.subr.mxu0 0.0
    %625 = vmatpush1.msra.mxu0 0.0
    %626 = vmatprep.subr.mxu0 0.0
    %627 = vmatpush1.msra.mxu0 0.0
    %628 = vmatprep.subr.mxu0 0.0
    %629 = vmatpush1.msra.mxu0 0.0
    %630 = vmatprep.subr.mxu0 0.0
    %631 = vmatpush1.msra.mxu0 0.0
    %632 = vmatprep.subr.mxu0 0.0
    %633 = vmatpush1.msra.mxu0 0.0
    %634 = vmatprep.subr.mxu0 0.0
    %635 = vmatpush1.msra.mxu0 0.0
    %636 = vmatprep.subr.mxu0 0.0
    %637 = vmatpush1.msra.mxu0 0.0
    %638 = vmatprep.subr.mxu0 0.0
    %639 = vmatpush1.msra.mxu0 0.0
    %640 = vmatprep.subr.mxu0 0.0
    %641 = vmatpush1.msra.mxu0 0.0
    %642 = vmatprep.subr.mxu0 0.0
    %643 = vmatpush1.msra.mxu0 0.0
    %644 = vmatprep.subr.mxu0 0.0
    %645 = vmatpush1.msra.mxu0 0.0
    %646 = vmatprep.subr.mxu0 0.0
    %647 = vmatpush1.msra.mxu0 0.0
    %648 = vmatprep.subr.mxu0 0.0
    %649 = vmatpush1.msra.mxu0 0.0
    %650 = vmatprep.subr.mxu0 0.0
    %651 = vmatpush1.msra.mxu0 0.0
    %652 = vmatprep.subr.mxu0 0.0
    %653 = vmatpush1.msra.mxu0 0.0
    %654 = vmatprep.subr.mxu0 0.0
    %655 = vmatpush1.msra.mxu0 0.0
    %656 = vmatprep.subr.mxu0 0.0
    %657 = vmatpush1.msra.mxu0 0.0
    %658 = vmatprep.subr.mxu0 0.0
    %659 = vmatpush1.msra.mxu0 0.0
    %660 = vmatprep.subr.mxu0 0.0
    %661 = vmatpush1.msra.mxu0 0.0
    %662 = vmatprep.subr.mxu0 0.0
    %663 = vmatpush1.msra.mxu0 0.0
    %664 = vmatprep.subr.mxu0 0.0
    %665 = vmatpush1.msra.mxu0 0.0
    %666 = vmatprep.subr.mxu0 0.0
    %667 = vmatpush1.msra.mxu0 0.0
    %668 = vmatprep.subr.mxu0 0.0
    %669 = vmatpush1.msra.mxu0 0.0
    %670 = vmatprep.mubr.f32.mxu0 0.0
    %671 = vmatmul.mubr.f32.gmra.mrb[0].mxu0 %v525
    %v672 = vpop.f32.mrb[0].mxu0
    %v673 = vadd.f32 0.0, %v672
    %v674 = vpop.f32.mrb[0].mxu0
    %v675 = vadd.f32 0.0, %v674
    %676 = vdwg.mxu0
    %v677 = vadd.f32 %v388, %v602
    %v678 = vadd.f32 %v390, %v604
    %v679 = vadd.f32 %v459, %v673
    %v680 = vadd.f32 %v461, %v675
    %v681 = vld [vmem:[%s0] sm:$0xff]
    %v682 = vld [vmem:[%s0 + $0x8] sm:$0xff]
    %v683 = vld [vmem:[%s0 + $0x10] sm:$0xf]
    %v684 = vlaneseq
    %v685 = vshrl.u32 %v684, 7
    %v686 = vsub.s32 3, %v685
    %v687 = vrot.slane %v28, %v686
    %v688 = vlaneseq
    %v689 = vshrl.u32 %v688, 7
    %v690 = vsub.s32 3, %v689
    %v691 = vrot.slane %v29, %v690
    %v692 = vlaneseq
    %v693 = vshrl.u32 %v692, 7
    %v694 = vsub.s32 3, %v693
    %v695 = vrot.slane %v30, %v694
    %v696 = vlaneseq
    %v697 = vshrl.u32 %v696, 7
    %v698 = vsub.s32 3, %v697
    %v699 = vrot.slane %v31, %v698
    %v704 = vcombine.low %v687, %v691
    %v705 = vcombine.low %v695, %v699
    %706 = vrot.lane.b32.xlu0 %v704, 127
    %v707 = vpop.permute.xlu0 %706
    %708 = vrot.lane.b32.xlu0 %v705, 127
    %v709 = vpop.permute.xlu0 %708
    %v710 = vrot.slane %v707, 4
    %v711 = vrot.slane %v709, 4
    %vm712 = vcmask 1039360
    %v713 = vsel %vm712, %v710, %v707
    %v714 = vsel %vm69, %v710, %v711
    %v715 = vsel %vm712, %v714, %v709
    %v719 = vmul.f32 %v681, %v713
    %v720 = vmul.f32 %v682, %v715
    %v721 = vmul.f32 %v683, %v711
    %v722 = vrot.slane %v19, 4
    %v726 = vcombine.high %v719, %v719
    %v727 = vcombine.high %v720, %v720
    %728 = vrot.lane.b32.xlu0 %v719, 1
    %v729 = vpop.permute.xlu0 %728
    %730 = vrot.lane.b32.xlu0 %v726, 1
    %v731 = vpop.permute.xlu0 %730
    %732 = vrot.lane.b32.xlu0 %v720, 1
    %v733 = vpop.permute.xlu0 %732
    %734 = vrot.lane.b32.xlu0 %v727, 1
    %v735 = vpop.permute.xlu0 %734
    %736 = vrot.lane.b32.xlu0 %v721, 1
    %v737 = vpop.permute.xlu0 %736
    %vm738 = vcmask 7168
    %v739 = vsel %vm738, %v729, %v731
    %v740 = vsel %vm738, %v731, %v733
    %v741 = vsel %vm738, %v733, %v735
    %v742 = vsel %vm738, %v735, %v737
    %v743 = vsel %vm138, %v722, 0
    %v745 = vsel %vm69, %v739, 0
    %v747 = vsel %vm69, %v740, 0
    %v749 = vsel %vm69, %v741, 0
    %v751 = vsel %vm69, %v742, 0
    %753 = vmatprep.subr.mxu0 %v747
    %754 = vmatpush1.msra.mxu0 %v745
    %755 = vmatprep.subr.mxu0 0.0
    %756 = vmatpush1.msra.mxu0 0.0
    %757 = vmatprep.subr.mxu0 0.0
    %758 = vmatpush1.msra.mxu0 0.0
    %759 = vmatprep.subr.mxu0 0.0
    %760 = vmatpush1.msra.mxu0 0.0
    %761 = vmatprep.subr.mxu0 0.0
    %762 = vmatpush1.msra.mxu0 0.0
    %763 = vmatprep.subr.mxu0 0.0
    %764 = vmatpush1.msra.mxu0 0.0
    %765 = vmatprep.subr.mxu0 0.0
    %766 = vmatpush1.msra.mxu0 0.0
    %767 = vmatprep.subr.mxu0 0.0
    %768 = vmatpush1.msra.mxu0 0.0
    %769 = vmatprep.subr.mxu0 0.0
    %770 = vmatpush1.msra.mxu0 0.0
    %771 = vmatprep.subr.mxu0 0.0
    %772 = vmatpush1.msra.mxu0 0.0
    %773 = vmatprep.subr.mxu0 0.0
    %774 = vmatpush1.msra.mxu0 0.0
    %775 = vmatprep.subr.mxu0 0.0
    %776 = vmatpush1.msra.mxu0 0.0
    %777 = vmatprep.subr.mxu0 0.0
    %778 = vmatpush1.msra.mxu0 0.0
    %779 = vmatprep.subr.mxu0 0.0
    %780 = vmatpush1.msra.mxu0 0.0
    %781 = vmatprep.subr.mxu0 0.0
    %782 = vmatpush1.msra.mxu0 0.0
    %783 = vmatprep.subr.mxu0 0.0
    %784 = vmatpush1.msra.mxu0 0.0
    %785 = vmatprep.subr.mxu0 0.0
    %786 = vmatpush1.msra.mxu0 0.0
    %787 = vmatprep.subr.mxu0 0.0
    %788 = vmatpush1.msra.mxu0 0.0
    %789 = vmatprep.subr.mxu0 0.0
    %790 = vmatpush1.msra.mxu0 0.0
    %791 = vmatprep.subr.mxu0 0.0
    %792 = vmatpush1.msra.mxu0 0.0
    %793 = vmatprep.subr.mxu0 0.0
    %794 = vmatpush1.msra.mxu0 0.0
    %795 = vmatprep.subr.mxu0 0.0
    %796 = vmatpush1.msra.mxu0 0.0
    %797 = vmatprep.subr.mxu0 0.0
    %798 = vmatpush1.msra.mxu0 0.0
    %799 = vmatprep.subr.mxu0 0.0
    %800 = vmatpush1.msra.mxu0 0.0
    %801 = vmatprep.subr.mxu0 0.0
    %802 = vmatpush1.msra.mxu0 0.0
    %803 = vmatprep.subr.mxu0 0.0
    %804 = vmatpush1.msra.mxu0 0.0
    %805 = vmatprep.subr.mxu0 0.0
    %806 = vmatpush1.msra.mxu0 0.0
    %807 = vmatprep.subr.mxu0 0.0
    %808 = vmatpush1.msra.mxu0 0.0
    %809 = vmatprep.subr.mxu0 0.0
    %810 = vmatpush1.msra.mxu0 0.0
    %811 = vmatprep.subr.mxu0 0.0
    %812 = vmatpush1.msra.mxu0 0.0
    %813 = vmatprep.subr.mxu0 0.0
    %814 = vmatpush1.msra.mxu0 0.0
    %815 = vmatprep.subr.mxu0 0.0
    %816 = vmatpush1.msra.mxu0 0.0
    %817 = vmatprep.mubr.f32.mxu0 0.0
    %818 = vmatmul.mubr.f32.gmra.mrb[0].mxu0 %v743
    %v819 = vpop.f32.mrb[0].mxu0
    %v820 = vadd.f32 0.0, %v819
    %v821 = vpop.f32.mrb[0].mxu0
    %v822 = vadd.f32 0.0, %v821
    %823 = vdwg.mxu0
    %824 = vmatprep.subr.mxu0 %v751
    %825 = vmatpush1.msra.mxu0 %v749
    %826 = vmatprep.subr.mxu0 0.0
    %827 = vmatpush1.msra.mxu0 0.0
    %828 = vmatprep.subr.mxu0 0.0
    %829 = vmatpush1.msra.mxu0 0.0
    %830 = vmatprep.subr.mxu0 0.0
    %831 = vmatpush1.msra.mxu0 0.0
    %832 = vmatprep.subr.mxu0 0.0
    %833 = vmatpush1.msra.mxu0 0.0
    %834 = vmatprep.subr.mxu0 0.0
    %835 = vmatpush1.msra.mxu0 0.0
    %836 = vmatprep.subr.mxu0 0.0
    %837 = vmatpush1.msra.mxu0 0.0
    %838 = vmatprep.subr.mxu0 0.0
    %839 = vmatpush1.msra.mxu0 0.0
    %840 = vmatprep.subr.mxu0 0.0
    %841 = vmatpush1.msra.mxu0 0.0
    %842 = vmatprep.subr.mxu0 0.0
    %843 = vmatpush1.msra.mxu0 0.0
    %844 = vmatprep.subr.mxu0 0.0
    %845 = vmatpush1.msra.mxu0 0.0
    %846 = vmatprep.subr.mxu0 0.0
    %847 = vmatpush1.msra.mxu0 0.0
    %848 = vmatprep.subr.mxu0 0.0
    %849 = vmatpush1.msra.mxu0 0.0
    %850 = vmatprep.subr.mxu0 0.0
    %851 = vmatpush1.msra.mxu0 0.0
    %852 = vmatprep.subr.mxu0 0.0
    %853 = vmatpush1.msra.mxu0 0.0
    %854 = vmatprep.subr.mxu0 0.0
    %855 = vmatpush1.msra.mxu0 0.0
    %856 = vmatprep.subr.mxu0 0.0
    %857 = vmatpush1.msra.mxu0 0.0
    %858 = vmatprep.subr.mxu0 0.0
    %859 = vmatpush1.msra.mxu0 0.0
    %860 = vmatprep.subr.mxu0 0.0
    %861 = vmatpush1.msra.mxu0 0.0
    %862 = vmatprep.subr.mxu0 0.0
    %863 = vmatpush1.msra.mxu0 0.0
    %864 = vmatprep.subr.mxu0 0.0
    %865 = vmatpush1.msra.mxu0 0.0
    %866 = vmatprep.subr.mxu0 0.0
    %867 = vmatpush1.msra.mxu0 0.0
    %868 = vmatprep.subr.mxu0 0.0
    %869 = vmatpush1.msra.mxu0 0.0
    %870 = vmatprep.subr.mxu0 0.0
    %871 = vmatpush1.msra.mxu0 0.0
    %872 = vmatprep.subr.mxu0 0.0
    %873 = vmatpush1.msra.mxu0 0.0
    %874 = vmatprep.subr.mxu0 0.0
    %875 = vmatpush1.msra.mxu0 0.0
    %876 = vmatprep.subr.mxu0 0.0
    %877 = vmatpush1.msra.mxu0 0.0
    %878 = vmatprep.subr.mxu0 0.0
    %879 = vmatpush1.msra.mxu0 0.0
    %880 = vmatprep.subr.mxu0 0.0
    %881 = vmatpush1.msra.mxu0 0.0
    %882 = vmatprep.subr.mxu0 0.0
    %883 = vmatpush1.msra.mxu0 0.0
    %884 = vmatprep.subr.mxu0 0.0
    %885 = vmatpush1.msra.mxu0 0.0
    %886 = vmatprep.subr.mxu0 0.0
    %887 = vmatpush1.msra.mxu0 0.0
    %888 = vmatprep.mubr.f32.mxu0 0.0
    %889 = vmatmul.mubr.f32.gmra.mrb[0].mxu0 %v743
    %v890 = vpop.f32.mrb[0].mxu0
    %v891 = vadd.f32 0.0, %v890
    %v892 = vpop.f32.mrb[0].mxu0
    %v893 = vadd.f32 0.0, %v892
    %894 = vdwg.mxu0
    %v895 = vadd.f32 %v677, %v820
    %v896 = vadd.f32 %v678, %v822
    %v897 = vadd.f32 %v679, %v891
    %v898 = vadd.f32 %v680, %v893
    %v899 = vld [vmem:[%s0 + $0x4] sm:$0xff]
    %v900 = vld [vmem:[%s0 + $0xc] sm:$0xff]
    %v903 = vcombine.high %v899, %v899
    %v904 = vcombine.high %v900, %v900
    %v906 = vsel %vm138, %v20, 0
    %v908 = vsel %vm69, %v899, 0
    %v910 = vsel %vm69, %v903, 0
    %v912 = vsel %vm69, %v900, 0
    %v914 = vsel %vm69, %v904, 0
    %916 = vmatprep.subr.mxu0 %v910
    %917 = vmatpush1.msra.mxu0 %v908
    %918 = vmatprep.subr.mxu0 0.0
    %919 = vmatpush1.msra.mxu0 0.0
    %920 = vmatprep.subr.mxu0 0.0
    %921 = vmatpush1.msra.mxu0 0.0
    %922 = vmatprep.subr.mxu0 0.0
    %923 = vmatpush1.msra.mxu0 0.0
    %924 = vmatprep.subr.mxu0 0.0
    %925 = vmatpush1.msra.mxu0 0.0
    %926 = vmatprep.subr.mxu0 0.0
    %927 = vmatpush1.msra.mxu0 0.0
    %928 = vmatprep.subr.mxu0 0.0
    %929 = vmatpush1.msra.mxu0 0.0
    %930 = vmatprep.subr.mxu0 0.0
    %931 = vmatpush1.msra.mxu0 0.0
    %932 = vmatprep.subr.mxu0 0.0
    %933 = vmatpush1.msra.mxu0 0.0
    %934 = vmatprep.subr.mxu0 0.0
    %935 = vmatpush1.msra.mxu0 0.0
    %936 = vmatprep.subr.mxu0 0.0
    %937 = vmatpush1.msra.mxu0 0.0
    %938 = vmatprep.subr.mxu0 0.0
    %939 = vmatpush1.msra.mxu0 0.0
    %940 = vmatprep.subr.mxu0 0.0
    %941 = vmatpush1.msra.mxu0 0.0
    %942 = vmatprep.subr.mxu0 0.0
    %943 = vmatpush1.msra.mxu0 0.0
    %944 = vmatprep.subr.mxu0 0.0
    %945 = vmatpush1.msra.mxu0 0.0
    %946 = vmatprep.subr.mxu0 0.0
    %947 = vmatpush1.msra.mxu0 0.0
    %948 = vmatprep.subr.mxu0 0.0
    %949 = vmatpush1.msra.mxu0 0.0
    %950 = vmatprep.subr.mxu0 0.0
    %951 = vmatpush1.msra.mxu0 0.0
    %952 = vmatprep.subr.mxu0 0.0
    %953 = vmatpush1.msra.mxu0 0.0
    %954 = vmatprep.subr.mxu0 0.0
    %955 = vmatpush1.msra.mxu0 0.0
    %956 = vmatprep.subr.mxu0 0.0
    %957 = vmatpush1.msra.mxu0 0.0
    %958 = vmatprep.subr.mxu0 0.0
    %959 = vmatpush1.msra.mxu0 0.0
    %960 = vmatprep.subr.mxu0 0.0
    %961 = vmatpush1.msra.mxu0 0.0
    %962 = vmatprep.subr.mxu0 0.0
    %963 = vmatpush1.msra.mxu0 0.0
    %964 = vmatprep.subr.mxu0 0.0
    %965 = vmatpush1.msra.mxu0 0.0
    %966 = vmatprep.subr.mxu0 0.0
    %967 = vmatpush1.msra.mxu0 0.0
    %968 = vmatprep.subr.mxu0 0.0
    %969 = vmatpush1.msra.mxu0 0.0
    %970 = vmatprep.subr.mxu0 0.0
    %971 = vmatpush1.msra.mxu0 0.0
    %972 = vmatprep.subr.mxu0 0.0
    %973 = vmatpush1.msra.mxu0 0.0
    %974 = vmatprep.subr.mxu0 0.0
    %975 = vmatpush1.msra.mxu0 0.0
    %976 = vmatprep.subr.mxu0 0.0
    %977 = vmatpush1.msra.mxu0 0.0
    %978 = vmatprep.subr.mxu0 0.0
    %979 = vmatpush1.msra.mxu0 0.0
    %980 = vmatprep.mubr.f32.mxu0 0.0
    %981 = vmatmul.mubr.f32.gmra.mrb[0].mxu0 %v906
    %v982 = vpop.f32.mrb[0].mxu0
    %v983 = vadd.f32 0.0, %v982
    %v984 = vpop.f32.mrb[0].mxu0
    %v985 = vadd.f32 0.0, %v984
    %986 = vdwg.mxu0
    %987 = vmatprep.subr.mxu0 %v914
    %988 = vmatpush1.msra.mxu0 %v912
    %989 = vmatprep.subr.mxu0 0.0
    %990 = vmatpush1.msra.mxu0 0.0
    %991 = vmatprep.subr.mxu0 0.0
    %992 = vmatpush1.msra.mxu0 0.0
    %993 = vmatprep.subr.mxu0 0.0
    %994 = vmatpush1.msra.mxu0 0.0
    %995 = vmatprep.subr.mxu0 0.0
    %996 = vmatpush1.msra.mxu0 0.0
    %997 = vmatprep.subr.mxu0 0.0
    %998 = vmatpush1.msra.mxu0 0.0
    %999 = vmatprep.subr.mxu0 0.0
    %1000 = vmatpush1.msra.mxu0 0.0
    %1001 = vmatprep.subr.mxu0 0.0
    %1002 = vmatpush1.msra.mxu0 0.0
    %1003 = vmatprep.subr.mxu0 0.0
    %1004 = vmatpush1.msra.mxu0 0.0
    %1005 = vmatprep.subr.mxu0 0.0
    %1006 = vmatpush1.msra.mxu0 0.0
    %1007 = vmatprep.subr.mxu0 0.0
    %1008 = vmatpush1.msra.mxu0 0.0
    %1009 = vmatprep.subr.mxu0 0.0
    %1010 = vmatpush1.msra.mxu0 0.0
    %1011 = vmatprep.subr.mxu0 0.0
    %1012 = vmatpush1.msra.mxu0 0.0
    %1013 = vmatprep.subr.mxu0 0.0
    %1014 = vmatpush1.msra.mxu0 0.0
    %1015 = vmatprep.subr.mxu0 0.0
    %1016 = vmatpush1.msra.mxu0 0.0
    %1017 = vmatprep.subr.mxu0 0.0
    %1018 = vmatpush1.msra.mxu0 0.0
    %1019 = vmatprep.subr.mxu0 0.0
    %1020 = vmatpush1.msra.mxu0 0.0
    %1021 = vmatprep.subr.mxu0 0.0
    %1022 = vmatpush1.msra.mxu0 0.0
    %1023 = vmatprep.subr.mxu0 0.0
    %1024 = vmatpush1.msra.mxu0 0.0
    %1025 = vmatprep.subr.mxu0 0.0
    %1026 = vmatpush1.msra.mxu0 0.0
    %1027 = vmatprep.subr.mxu0 0.0
    %1028 = vmatpush1.msra.mxu0 0.0
    %1029 = vmatprep.subr.mxu0 0.0
    %1030 = vmatpush1.msra.mxu0 0.0
    %1031 = vmatprep.subr.mxu0 0.0
    %1032 = vmatpush1.msra.mxu0 0.0
    %1033 = vmatprep.subr.mxu0 0.0
    %1034 = vmatpush1.msra.mxu0 0.0
    %1035 = vmatprep.subr.mxu0 0.0
    %1036 = vmatpush1.msra.mxu0 0.0
    %1037 = vmatprep.subr.mxu0 0.0
    %1038 = vmatpush1.msra.mxu0 0.0
    %1039 = vmatprep.subr.mxu0 0.0
    %1040 = vmatpush1.msra.mxu0 0.0
    %1041 = vmatprep.subr.mxu0 0.0
    %1042 = vmatpush1.msra.mxu0 0.0
    %1043 = vmatprep.subr.mxu0 0.0
    %1044 = vmatpush1.msra.mxu0 0.0
    %1045 = vmatprep.subr.mxu0 0.0
    %1046 = vmatpush1.msra.mxu0 0.0
    %1047 = vmatprep.subr.mxu0 0.0
    %1048 = vmatpush1.msra.mxu0 0.0
    %1049 = vmatprep.subr.mxu0 0.0
    %1050 = vmatpush1.msra.mxu0 0.0
    %1051 = vmatprep.mubr.f32.mxu0 0.0
    %1052 = vmatmul.mubr.f32.gmra.mrb[0].mxu0 %v906
    %v1053 = vpop.f32.mrb[0].mxu0
    %v1054 = vadd.f32 0.0, %v1053
    %v1055 = vpop.f32.mrb[0].mxu0
    %v1056 = vadd.f32 0.0, %v1055
    %1057 = vdwg.mxu0
    %v1058 = vadd.f32 %v895, %v983
    %v1059 = vadd.f32 %v896, %v985
    %v1060 = vadd.f32 %v897, %v1054
    %v1061 = vadd.f32 %v898, %v1056
    %v1062 = vld [vmem:[%s0 + $0x4] sm:$0xff]
    %v1063 = vld [vmem:[%s0 + $0xc] sm:$0xff]
    %v1064 = vld [vmem:[%s0 + $0x14] sm:$0xf]
    %v1065 = vlaneseq
    %v1066 = vshrl.u32 %v1065, 7
    %v1067 = vsub.s32 5, %v1066
    %v1068 = vrot.slane %v28, %v1067
    %v1069 = vlaneseq
    %v1070 = vshrl.u32 %v1069, 7
    %v1071 = vsub.s32 5, %v1070
    %v1072 = vrot.slane %v29, %v1071
    %v1073 = vlaneseq
    %v1074 = vshrl.u32 %v1073, 7
    %v1075 = vsub.s32 5, %v1074
    %v1076 = vrot.slane %v30, %v1075
    %v1077 = vlaneseq
    %v1078 = vshrl.u32 %v1077, 7
    %v1079 = vsub.s32 5, %v1078
    %v1080 = vrot.slane %v31, %v1079
    %v1085 = vcombine.low %v1068, %v1072
    %v1086 = vcombine.low %v1076, %v1080
    %1087 = vrot.lane.b32.xlu0 %v1085, 1
    %v1088 = vpop.permute.xlu0 %1087
    %1089 = vrot.lane.b32.xlu0 %v1086, 1
    %v1090 = vpop.permute.xlu0 %1089
    %v1091 = vrot.slane %v1088, 4
    %v1092 = vrot.slane %v1090, 4
    %v1093 = vsel %vm738, %v1091, %v1088
    %v1094 = vsel %vm69, %v1091, %v1092
    %v1095 = vsel %vm738, %v1094, %v1090
    %v1099 = vmul.f32 %v1062, %v1093
    %v1100 = vmul.f32 %v1063, %v1095
    %v1101 = vmul.f32 %v1064, %v1092
    %v1102 = vrot.slane %v20, 4
    %v1106 = vcombine.high %v1099, %v1099
    %v1107 = vcombine.high %v1100, %v1100
    %1108 = vrot.lane.b32.xlu0 %v1099, 127
    %v1109 = vpop.permute.xlu0 %1108
    %1110 = vrot.lane.b32.xlu0 %v1106, 127
    %v1111 = vpop.permute.xlu0 %1110
    %1112 = vrot.lane.b32.xlu0 %v1100, 127
    %v1113 = vpop.permute.xlu0 %1112
    %1114 = vrot.lane.b32.xlu0 %v1107, 127
    %v1115 = vpop.permute.xlu0 %1114
    %1116 = vrot.lane.b32.xlu0 %v1101, 127
    %v1117 = vpop.permute.xlu0 %1116
    %v1118 = vsel %vm712, %v1109, %v1111
    %v1119 = vsel %vm712, %v1111, %v1113
    %v1120 = vsel %vm712, %v1113, %v1115
    %v1121 = vsel %vm712, %v1115, %v1117
    %v1122 = vsel %vm138, %v1102, 0
    %v1124 = vsel %vm69, %v1118, 0
    %v1126 = vsel %vm69, %v1119, 0
    %v1128 = vsel %vm69, %v1120, 0
    %v1130 = vsel %vm69, %v1121, 0
    %1132 = vmatprep.subr.mxu0 %v1126
    %1133 = vmatpush1.msra.mxu0 %v1124
    %1134 = vmatprep.subr.mxu0 0.0
    %1135 = vmatpush1.msra.mxu0 0.0
    %1136 = vmatprep.subr.mxu0 0.0
    %1137 = vmatpush1.msra.mxu0 0.0
    %1138 = vmatprep.subr.mxu0 0.0
    %1139 = vmatpush1.msra.mxu0 0.0
    %1140 = vmatprep.subr.mxu0 0.0
    %1141 = vmatpush1.msra.mxu0 0.0
    %1142 = vmatprep.subr.mxu0 0.0
    %1143 = vmatpush1.msra.mxu0 0.0
    %1144 = vmatprep.subr.mxu0 0.0
    %1145 = vmatpush1.msra.mxu0 0.0
    %1146 = vmatprep.subr.mxu0 0.0
    %1147 = vmatpush1.msra.mxu0 0.0
    %1148 = vmatprep.subr.mxu0 0.0
    %1149 = vmatpush1.msra.mxu0 0.0
    %1150 = vmatprep.subr.mxu0 0.0
    %1151 = vmatpush1.msra.mxu0 0.0
    %1152 = vmatprep.subr.mxu0 0.0
    %1153 = vmatpush1.msra.mxu0 0.0
    %1154 = vmatprep.subr.mxu0 0.0
    %1155 = vmatpush1.msra.mxu0 0.0
    %1156 = vmatprep.subr.mxu0 0.0
    %1157 = vmatpush1.msra.mxu0 0.0
    %1158 = vmatprep.subr.mxu0 0.0
    %1159 = vmatpush1.msra.mxu0 0.0
    %1160 = vmatprep.subr.mxu0 0.0
    %1161 = vmatpush1.msra.mxu0 0.0
    %1162 = vmatprep.subr.mxu0 0.0
    %1163 = vmatpush1.msra.mxu0 0.0
    %1164 = vmatprep.subr.mxu0 0.0
    %1165 = vmatpush1.msra.mxu0 0.0
    %1166 = vmatprep.subr.mxu0 0.0
    %1167 = vmatpush1.msra.mxu0 0.0
    %1168 = vmatprep.subr.mxu0 0.0
    %1169 = vmatpush1.msra.mxu0 0.0
    %1170 = vmatprep.subr.mxu0 0.0
    %1171 = vmatpush1.msra.mxu0 0.0
    %1172 = vmatprep.subr.mxu0 0.0
    %1173 = vmatpush1.msra.mxu0 0.0
    %1174 = vmatprep.subr.mxu0 0.0
    %1175 = vmatpush1.msra.mxu0 0.0
    %1176 = vmatprep.subr.mxu0 0.0
    %1177 = vmatpush1.msra.mxu0 0.0
    %1178 = vmatprep.subr.mxu0 0.0
    %1179 = vmatpush1.msra.mxu0 0.0
    %1180 = vmatprep.subr.mxu0 0.0
    %1181 = vmatpush1.msra.mxu0 0.0
    %1182 = vmatprep.subr.mxu0 0.0
    %1183 = vmatpush1.msra.mxu0 0.0
    %1184 = vmatprep.subr.mxu0 0.0
    %1185 = vmatpush1.msra.mxu0 0.0
    %1186 = vmatprep.subr.mxu0 0.0
    %1187 = vmatpush1.msra.mxu0 0.0
    %1188 = vmatprep.subr.mxu0 0.0
    %1189 = vmatpush1.msra.mxu0 0.0
    %1190 = vmatprep.subr.mxu0 0.0
    %1191 = vmatpush1.msra.mxu0 0.0
    %1192 = vmatprep.subr.mxu0 0.0
    %1193 = vmatpush1.msra.mxu0 0.0
    %1194 = vmatprep.subr.mxu0 0.0
    %1195 = vmatpush1.msra.mxu0 0.0
    %1196 = vmatprep.mubr.f32.mxu0 0.0
    %1197 = vmatmul.mubr.f32.gmra.mrb[0].mxu0 %v1122
    %v1198 = vpop.f32.mrb[0].mxu0
    %v1199 = vadd.f32 0.0, %v1198
    %v1200 = vpop.f32.mrb[0].mxu0
    %v1201 = vadd.f32 0.0, %v1200
    %1202 = vdwg.mxu0
    %1203 = vmatprep.subr.mxu0 %v1130
    %1204 = vmatpush1.msra.mxu0 %v1128
    %1205 = vmatprep.subr.mxu0 0.0
    %1206 = vmatpush1.msra.mxu0 0.0
    %1207 = vmatprep.subr.mxu0 0.0
    %1208 = vmatpush1.msra.mxu0 0.0
    %1209 = vmatprep.subr.mxu0 0.0
    %1210 = vmatpush1.msra.mxu0 0.0
    %1211 = vmatprep.subr.mxu0 0.0
    %1212 = vmatpush1.msra.mxu0 0.0
    %1213 = vmatprep.subr.mxu0 0.0
    %1214 = vmatpush1.msra.mxu0 0.0
    %1215 = vmatprep.subr.mxu0 0.0
    %1216 = vmatpush1.msra.mxu0 0.0
    %1217 = vmatprep.subr.mxu0 0.0
    %1218 = vmatpush1.msra.mxu0 0.0
    %1219 = vmatprep.subr.mxu0 0.0
    %1220 = vmatpush1.msra.mxu0 0.0
    %1221 = vmatprep.subr.mxu0 0.0
    %1222 = vmatpush1.msra.mxu0 0.0
    %1223 = vmatprep.subr.mxu0 0.0
    %1224 = vmatpush1.msra.mxu0 0.0
    %1225 = vmatprep.subr.mxu0 0.0
    %1226 = vmatpush1.msra.mxu0 0.0
    %1227 = vmatprep.subr.mxu0 0.0
    %1228 = vmatpush1.msra.mxu0 0.0
    %1229 = vmatprep.subr.mxu0 0.0
    %1230 = vmatpush1.msra.mxu0 0.0
    %1231 = vmatprep.subr.mxu0 0.0
    %1232 = vmatpush1.msra.mxu0 0.0
    %1233 = vmatprep.subr.mxu0 0.0
    %1234 = vmatpush1.msra.mxu0 0.0
    %1235 = vmatprep.subr.mxu0 0.0
    %1236 = vmatpush1.msra.mxu0 0.0
    %1237 = vmatprep.subr.mxu0 0.0
    %1238 = vmatpush1.msra.mxu0 0.0
    %1239 = vmatprep.subr.mxu0 0.0
    %1240 = vmatpush1.msra.mxu0 0.0
    %1241 = vmatprep.subr.mxu0 0.0
    %1242 = vmatpush1.msra.mxu0 0.0
    %1243 = vmatprep.subr.mxu0 0.0
    %1244 = vmatpush1.msra.mxu0 0.0
    %1245 = vmatprep.subr.mxu0 0.0
    %1246 = vmatpush1.msra.mxu0 0.0
    %1247 = vmatprep.subr.mxu0 0.0
    %1248 = vmatpush1.msra.mxu0 0.0
    %1249 = vmatprep.subr.mxu0 0.0
    %1250 = vmatpush1.msra.mxu0 0.0
    %1251 = vmatprep.subr.mxu0 0.0
    %1252 = vmatpush1.msra.mxu0 0.0
    %1253 = vmatprep.subr.mxu0 0.0
    %1254 = vmatpush1.msra.mxu0 0.0
    %1255 = vmatprep.subr.mxu0 0.0
    %1256 = vmatpush1.msra.mxu0 0.0
    %1257 = vmatprep.subr.mxu0 0.0
    %1258 = vmatpush1.msra.mxu0 0.0
    %1259 = vmatprep.subr.mxu0 0.0
    %1260 = vmatpush1.msra.mxu0 0.0
    %1261 = vmatprep.subr.mxu0 0.0
    %1262 = vmatpush1.msra.mxu0 0.0
    %1263 = vmatprep.subr.mxu0 0.0
    %1264 = vmatpush1.msra.mxu0 0.0
    %1265 = vmatprep.subr.mxu0 0.0
    %1266 = vmatpush1.msra.mxu0 0.0
    %1267 = vmatprep.mubr.f32.mxu0 0.0
    %1268 = vmatmul.mubr.f32.gmra.mrb[0].mxu0 %v1122
    %v1269 = vpop.f32.mrb[0].mxu0
    %v1270 = vadd.f32 0.0, %v1269
    %v1271 = vpop.f32.mrb[0].mxu0
    %v1272 = vadd.f32 0.0, %v1271
    %1273 = vdwg.mxu0
    %v1274 = vadd.f32 %v1058, %v1199
    %v1275 = vadd.f32 %v1059, %v1201
    %v1276 = vadd.f32 %v1060, %v1270
    %v1277 = vadd.f32 %v1061, %v1272
    %v1278 = vld [vmem:[%s0 + $0x4] sm:$0xff]
    %v1279 = vld [vmem:[%s0 + $0xc] sm:$0xff]
    %v1280 = vld [vmem:[%s0 + $0x14] sm:$0xf]
    %v1281 = vlaneseq
    %v1282 = vshrl.u32 %v1281, 7
    %v1283 = vsub.s32 6, %v1282
    %v1284 = vrot.slane %v28, %v1283
    %v1285 = vlaneseq
    %v1286 = vshrl.u32 %v1285, 7
    %v1287 = vsub.s32 6, %v1286
    %v1288 = vrot.slane %v29, %v1287
    %v1289 = vlaneseq
    %v1290 = vshrl.u32 %v1289, 7
    %v1291 = vsub.s32 6, %v1290
    %v1292 = vrot.slane %v30, %v1291
    %v1293 = vlaneseq
    %v1294 = vshrl.u32 %v1293, 7
    %v1295 = vsub.s32 6, %v1294
    %v1296 = vrot.slane %v31, %v1295
    %v1301 = vcombine.low %v1284, %v1288
    %v1302 = vcombine.low %v1292, %v1296
    %1303 = vrot.lane.b32.xlu0 %v1301, 15
    %v1304 = vpop.permute.xlu0 %1303
    %1305 = vrot.lane.b32.xlu0 %v1302, 15
    %v1306 = vpop.permute.xlu0 %1305
    %v1307 = vrot.slane %v1304, 4
    %v1308 = vrot.slane %v1306, 4
    %v1309 = vsel %vm519, %v1307, %v1304
    %v1310 = vsel %vm69, %v1307, %v1308
    %v1311 = vsel %vm519, %v1310, %v1306
    %v1315 = vmul.f32 %v1278, %v1309
    %v1316 = vmul.f32 %v1279, %v1311
    %v1317 = vmul.f32 %v1280, %v1308
    %v1321 = vcombine.high %v1315, %v1315
    %v1322 = vcombine.high %v1316, %v1316
    %1323 = vrot.lane.b32.xlu0 %v1315, 113
    %v1324 = vpop.permute.xlu0 %1323
    %1325 = vrot.lane.b32.xlu0 %v1321, 113
    %v1326 = vpop.permute.xlu0 %1325
    %1327 = vrot.lane.b32.xlu0 %v1316, 113
    %v1328 = vpop.permute.xlu0 %1327
    %1329 = vrot.lane.b32.xlu0 %v1322, 113
    %v1330 = vpop.permute.xlu0 %1329
    %1331 = vrot.lane.b32.xlu0 %v1317, 113
    %v1332 = vpop.permute.xlu0 %1331
    %v1333 = vsel %vm494, %v1324, %v1326
    %v1334 = vsel %vm494, %v1326, %v1328
    %v1335 = vsel %vm494, %v1328, %v1330
    %v1336 = vsel %vm494, %v1330, %v1332
    %v1338 = vsel %vm138, %v21, 0
    %v1340 = vsel %vm69, %v1333, 0
    %v1342 = vsel %vm69, %v1334, 0
    %v1344 = vsel %vm69, %v1335, 0
    %v1346 = vsel %vm69, %v1336, 0
    %1348 = vmatprep.subr.mxu0 %v1342
    %1349 = vmatpush1.msra.mxu0 %v1340
    %1350 = vmatprep.subr.mxu0 0.0
    %1351 = vmatpush1.msra.mxu0 0.0
    %1352 = vmatprep.subr.mxu0 0.0
    %1353 = vmatpush1.msra.mxu0 0.0
    %1354 = vmatprep.subr.mxu0 0.0
    %1355 = vmatpush1.msra.mxu0 0.0
    %1356 = vmatprep.subr.mxu0 0.0
    %1357 = vmatpush1.msra.mxu0 0.0
    %1358 = vmatprep.subr.mxu0 0.0
    %1359 = vmatpush1.msra.mxu0 0.0
    %1360 = vmatprep.subr.mxu0 0.0
    %1361 = vmatpush1.msra.mxu0 0.0
    %1362 = vmatprep.subr.mxu0 0.0
    %1363 = vmatpush1.msra.mxu0 0.0
    %1364 = vmatprep.subr.mxu0 0.0
    %1365 = vmatpush1.msra.mxu0 0.0
    %1366 = vmatprep.subr.mxu0 0.0
    %1367 = vmatpush1.msra.mxu0 0.0
    %1368 = vmatprep.subr.mxu0 0.0
    %1369 = vmatpush1.msra.mxu0 0.0
    %1370 = vmatprep.subr.mxu0 0.0
    %1371 = vmatpush1.msra.mxu0 0.0
    %1372 = vmatprep.subr.mxu0 0.0
    %1373 = vmatpush1.msra.mxu0 0.0
    %1374 = vmatprep.subr.mxu0 0.0
    %1375 = vmatpush1.msra.mxu0 0.0
    %1376 = vmatprep.subr.mxu0 0.0
    %1377 = vmatpush1.msra.mxu0 0.0
    %1378 = vmatprep.subr.mxu0 0.0
    %1379 = vmatpush1.msra.mxu0 0.0
    %1380 = vmatprep.subr.mxu0 0.0
    %1381 = vmatpush1.msra.mxu0 0.0
    %1382 = vmatprep.subr.mxu0 0.0
    %1383 = vmatpush1.msra.mxu0 0.0
    %1384 = vmatprep.subr.mxu0 0.0
    %1385 = vmatpush1.msra.mxu0 0.0
    %1386 = vmatprep.subr.mxu0 0.0
    %1387 = vmatpush1.msra.mxu0 0.0
    %1388 = vmatprep.subr.mxu0 0.0
    %1389 = vmatpush1.msra.mxu0 0.0
    %1390 = vmatprep.subr.mxu0 0.0
    %1391 = vmatpush1.msra.mxu0 0.0
    %1392 = vmatprep.subr.mxu0 0.0
    %1393 = vmatpush1.msra.mxu0 0.0
    %1394 = vmatprep.subr.mxu0 0.0
    %1395 = vmatpush1.msra.mxu0 0.0
    %1396 = vmatprep.subr.mxu0 0.0
    %1397 = vmatpush1.msra.mxu0 0.0
    %1398 = vmatprep.subr.mxu0 0.0
    %1399 = vmatpush1.msra.mxu0 0.0
    %1400 = vmatprep.subr.mxu0 0.0
    %1401 = vmatpush1.msra.mxu0 0.0
    %1402 = vmatprep.subr.mxu0 0.0
    %1403 = vmatpush1.msra.mxu0 0.0
    %1404 = vmatprep.subr.mxu0 0.0
    %1405 = vmatpush1.msra.mxu0 0.0
    %1406 = vmatprep.subr.mxu0 0.0
    %1407 = vmatpush1.msra.mxu0 0.0
    %1408 = vmatprep.subr.mxu0 0.0
    %1409 = vmatpush1.msra.mxu0 0.0
    %1410 = vmatprep.subr.mxu0 0.0
    %1411 = vmatpush1.msra.mxu0 0.0
    %1412 = vmatprep.mubr.f32.mxu0 0.0
    %1413 = vmatmul.mubr.f32.gmra.mrb[0].mxu0 %v1338
    %v1414 = vpop.f32.mrb[0].mxu0
    %v1415 = vadd.f32 0.0, %v1414
    %v1416 = vpop.f32.mrb[0].mxu0
    %v1417 = vadd.f32 0.0, %v1416
    %1418 = vdwg.mxu0
    %1419 = vmatprep.subr.mxu0 %v1346
    %1420 = vmatpush1.msra.mxu0 %v1344
    %1421 = vmatprep.subr.mxu0 0.0
    %1422 = vmatpush1.msra.mxu0 0.0
    %1423 = vmatprep.subr.mxu0 0.0
    %1424 = vmatpush1.msra.mxu0 0.0
    %1425 = vmatprep.subr.mxu0 0.0
    %1426 = vmatpush1.msra.mxu0 0.0
    %1427 = vmatprep.subr.mxu0 0.0
    %1428 = vmatpush1.msra.mxu0 0.0
    %1429 = vmatprep.subr.mxu0 0.0
    %1430 = vmatpush1.msra.mxu0 0.0
    %1431 = vmatprep.subr.mxu0 0.0
    %1432 = vmatpush1.msra.mxu0 0.0
    %1433 = vmatprep.subr.mxu0 0.0
    %1434 = vmatpush1.msra.mxu0 0.0
    %1435 = vmatprep.subr.mxu0 0.0
    %1436 = vmatpush1.msra.mxu0 0.0
    %1437 = vmatprep.subr.mxu0 0.0
    %1438 = vmatpush1.msra.mxu0 0.0
    %1439 = vmatprep.subr.mxu0 0.0
    %1440 = vmatpush1.msra.mxu0 0.0
    %1441 = vmatprep.subr.mxu0 0.0
    %1442 = vmatpush1.msra.mxu0 0.0
    %1443 = vmatprep.subr.mxu0 0.0
    %1444 = vmatpush1.msra.mxu0 0.0
    %1445 = vmatprep.subr.mxu0 0.0
    %1446 = vmatpush1.msra.mxu0 0.0
    %1447 = vmatprep.subr.mxu0 0.0
    %1448 = vmatpush1.msra.mxu0 0.0
    %1449 = vmatprep.subr.mxu0 0.0
    %1450 = vmatpush1.msra.mxu0 0.0
    %1451 = vmatprep.subr.mxu0 0.0
    %1452 = vmatpush1.msra.mxu0 0.0
    %1453 = vmatprep.subr.mxu0 0.0
    %1454 = vmatpush1.msra.mxu0 0.0
    %1455 = vmatprep.subr.mxu0 0.0
    %1456 = vmatpush1.msra.mxu0 0.0
    %1457 = vmatprep.subr.mxu0 0.0
    %1458 = vmatpush1.msra.mxu0 0.0
    %1459 = vmatprep.subr.mxu0 0.0
    %1460 = vmatpush1.msra.mxu0 0.0
    %1461 = vmatprep.subr.mxu0 0.0
    %1462 = vmatpush1.msra.mxu0 0.0
    %1463 = vmatprep.subr.mxu0 0.0
    %1464 = vmatpush1.msra.mxu0 0.0
    %1465 = vmatprep.subr.mxu0 0.0
    %1466 = vmatpush1.msra.mxu0 0.0
    %1467 = vmatprep.subr.mxu0 0.0
    %1468 = vmatpush1.msra.mxu0 0.0
    %1469 = vmatprep.subr.mxu0 0.0
    %1470 = vmatpush1.msra.mxu0 0.0
    %1471 = vmatprep.subr.mxu0 0.0
    %1472 = vmatpush1.msra.mxu0 0.0
    %1473 = vmatprep.subr.mxu0 0.0
    %1474 = vmatpush1.msra.mxu0 0.0
    %1475 = vmatprep.subr.mxu0 0.0
    %1476 = vmatpush1.msra.mxu0 0.0
    %1477 = vmatprep.subr.mxu0 0.0
    %1478 = vmatpush1.msra.mxu0 0.0
    %1479 = vmatprep.subr.mxu0 0.0
    %1480 = vmatpush1.msra.mxu0 0.0
    %1481 = vmatprep.subr.mxu0 0.0
    %1482 = vmatpush1.msra.mxu0 0.0
    %1483 = vmatprep.mubr.f32.mxu0 0.0
    %1484 = vmatmul.mubr.f32.gmra.mrb[0].mxu0 %v1338
    %v1485 = vpop.f32.mrb[0].mxu0
    %v1486 = vadd.f32 0.0, %v1485
    %v1487 = vpop.f32.mrb[0].mxu0
    %v1488 = vadd.f32 0.0, %v1487
    %1489 = vdwg.mxu0
    %v1490 = vadd.f32 %v1274, %v1415
    %v1491 = vadd.f32 %v1275, %v1417
    %v1492 = vadd.f32 %v1276, %v1486
    %v1493 = vadd.f32 %v1277, %v1488
    %v1494 = vld [vmem:[%s0 + $0x4] sm:$0xff]
    %v1495 = vld [vmem:[%s0 + $0xc] sm:$0xff]
    %v1496 = vld [vmem:[%s0 + $0x14] sm:$0xf]
    %v1497 = vlaneseq
    %v1498 = vshrl.u32 %v1497, 7
    %v1499 = vsub.s32 7, %v1498
    %v1500 = vrot.slane %v28, %v1499
    %v1501 = vlaneseq
    %v1502 = vshrl.u32 %v1501, 7
    %v1503 = vsub.s32 7, %v1502
    %v1504 = vrot.slane %v29, %v1503
    %v1505 = vlaneseq
    %v1506 = vshrl.u32 %v1505, 7
    %v1507 = vsub.s32 7, %v1506
    %v1508 = vrot.slane %v30, %v1507
    %v1509 = vlaneseq
    %v1510 = vshrl.u32 %v1509, 7
    %v1511 = vsub.s32 7, %v1510
    %v1512 = vrot.slane %v31, %v1511
    %v1517 = vcombine.low %v1500, %v1504
    %v1518 = vcombine.low %v1508, %v1512
    %1519 = vrot.lane.b32.xlu0 %v1517, 16
    %v1520 = vpop.permute.xlu0 %1519
    %1521 = vrot.lane.b32.xlu0 %v1518, 16
    %v1522 = vpop.permute.xlu0 %1521
    %v1523 = vrot.slane %v1520, 4
    %v1524 = vrot.slane %v1522, 4
    %v1525 = vsel %vm133, %v1523, %v1520
    %v1526 = vsel %vm69, %v1523, %v1524
    %v1527 = vsel %vm133, %v1526, %v1522
    %v1531 = vmul.f32 %v1494, %v1525
    %v1532 = vmul.f32 %v1495, %v1527
    %v1533 = vmul.f32 %v1496, %v1524
    %v1534 = vrot.slane %v21, 4
    %v1538 = vcombine.high %v1531, %v1531
    %v1539 = vcombine.high %v1532, %v1532
    %1540 = vrot.lane.b32.xlu0 %v1531, 112
    %v1541 = vpop.permute.xlu0 %1540
    %1542 = vrot.lane.b32.xlu0 %v1538, 112
    %v1543 = vpop.permute.xlu0 %1542
    %1544 = vrot.lane.b32.xlu0 %v1532, 112
    %v1545 = vpop.permute.xlu0 %1544
    %1546 = vrot.lane.b32.xlu0 %v1539, 112
    %v1547 = vpop.permute.xlu0 %1546
    %1548 = vrot.lane.b32.xlu0 %v1533, 112
    %v1549 = vpop.permute.xlu0 %1548
    %v1550 = vsel %vm106, %v1541, %v1543
    %v1551 = vsel %vm106, %v1543, %v1545
    %v1552 = vsel %vm106, %v1545, %v1547
    %v1553 = vsel %vm106, %v1547, %v1549
    %v1554 = vsel %vm138, %v1534, 0
    %v1556 = vsel %vm69, %v1550, 0
    %v1558 = vsel %vm69, %v1551, 0
    %v1560 = vsel %vm69, %v1552, 0
    %v1562 = vsel %vm69, %v1553, 0
    %1564 = vmatprep.subr.mxu0 %v1558
    %1565 = vmatpush1.msra.mxu0 %v1556
    %1566 = vmatprep.subr.mxu0 0.0
    %1567 = vmatpush1.msra.mxu0 0.0
    %1568 = vmatprep.subr.mxu0 0.0
    %1569 = vmatpush1.msra.mxu0 0.0
    %1570 = vmatprep.subr.mxu0 0.0
    %1571 = vmatpush1.msra.mxu0 0.0
    %1572 = vmatprep.subr.mxu0 0.0
    %1573 = vmatpush1.msra.mxu0 0.0
    %1574 = vmatprep.subr.mxu0 0.0
    %1575 = vmatpush1.msra.mxu0 0.0
    %1576 = vmatprep.subr.mxu0 0.0
    %1577 = vmatpush1.msra.mxu0 0.0
    %1578 = vmatprep.subr.mxu0 0.0
    %1579 = vmatpush1.msra.mxu0 0.0
    %1580 = vmatprep.subr.mxu0 0.0
    %1581 = vmatpush1.msra.mxu0 0.0
    %1582 = vmatprep.subr.mxu0 0.0
    %1583 = vmatpush1.msra.mxu0 0.0
    %1584 = vmatprep.subr.mxu0 0.0
    %1585 = vmatpush1.msra.mxu0 0.0
    %1586 = vmatprep.subr.mxu0 0.0
    %1587 = vmatpush1.msra.mxu0 0.0
    %1588 = vmatprep.subr.mxu0 0.0
    %1589 = vmatpush1.msra.mxu0 0.0
    %1590 = vmatprep.subr.mxu0 0.0
    %1591 = vmatpush1.msra.mxu0 0.0
    %1592 = vmatprep.subr.mxu0 0.0
    %1593 = vmatpush1.msra.mxu0 0.0
    %1594 = vmatprep.subr.mxu0 0.0
    %1595 = vmatpush1.msra.mxu0 0.0
    %1596 = vmatprep.subr.mxu0 0.0
    %1597 = vmatpush1.msra.mxu0 0.0
    %1598 = vmatprep.subr.mxu0 0.0
    %1599 = vmatpush1.msra.mxu0 0.0
    %1600 = vmatprep.subr.mxu0 0.0
    %1601 = vmatpush1.msra.mxu0 0.0
    %1602 = vmatprep.subr.mxu0 0.0
    %1603 = vmatpush1.msra.mxu0 0.0
    %1604 = vmatprep.subr.mxu0 0.0
    %1605 = vmatpush1.msra.mxu0 0.0
    %1606 = vmatprep.subr.mxu0 0.0
    %1607 = vmatpush1.msra.mxu0 0.0
    %1608 = vmatprep.subr.mxu0 0.0
    %1609 = vmatpush1.msra.mxu0 0.0
    %1610 = vmatprep.subr.mxu0 0.0
    %1611 = vmatpush1.msra.mxu0 0.0
    %1612 = vmatprep.subr.mxu0 0.0
    %1613 = vmatpush1.msra.mxu0 0.0
    %1614 = vmatprep.subr.mxu0 0.0
    %1615 = vmatpush1.msra.mxu0 0.0
    %1616 = vmatprep.subr.mxu0 0.0
    %1617 = vmatpush1.msra.mxu0 0.0
    %1618 = vmatprep.subr.mxu0 0.0
    %1619 = vmatpush1.msra.mxu0 0.0
    %1620 = vmatprep.subr.mxu0 0.0
    %1621 = vmatpush1.msra.mxu0 0.0
    %1622 = vmatprep.subr.mxu0 0.0
    %1623 = vmatpush1.msra.mxu0 0.0
    %1624 = vmatprep.subr.mxu0 0.0
    %1625 = vmatpush1.msra.mxu0 0.0
    %1626 = vmatprep.subr.mxu0 0.0
    %1627 = vmatpush1.msra.mxu0 0.0
    %1628 = vmatprep.mubr.f32.mxu0 0.0
    %1629 = vmatmul.mubr.f32.gmra.mrb[0].mxu0 %v1554
    %v1630 = vpop.f32.mrb[0].mxu0
    %v1631 = vadd.f32 0.0, %v1630
    %v1632 = vpop.f32.mrb[0].mxu0
    %v1633 = vadd.f32 0.0, %v1632
    %1634 = vdwg.mxu0
    %1635 = vmatprep.subr.mxu0 %v1562
    %1636 = vmatpush1.msra.mxu0 %v1560
    %1637 = vmatprep.subr.mxu0 0.0
    %1638 = vmatpush1.msra.mxu0 0.0
    %1639 = vmatprep.subr.mxu0 0.0
    %1640 = vmatpush1.msra.mxu0 0.0
    %1641 = vmatprep.subr.mxu0 0.0
    %1642 = vmatpush1.msra.mxu0 0.0
    %1643 = vmatprep.subr.mxu0 0.0
    %1644 = vmatpush1.msra.mxu0 0.0
    %1645 = vmatprep.subr.mxu0 0.0
    %1646 = vmatpush1.msra.mxu0 0.0
    %1647 = vmatprep.subr.mxu0 0.0
    %1648 = vmatpush1.msra.mxu0 0.0
    %1649 = vmatprep.subr.mxu0 0.0
    %1650 = vmatpush1.msra.mxu0 0.0
    %1651 = vmatprep.subr.mxu0 0.0
    %1652 = vmatpush1.msra.mxu0 0.0
    %1653 = vmatprep.subr.mxu0 0.0
    %1654 = vmatpush1.msra.mxu0 0.0
    %1655 = vmatprep.subr.mxu0 0.0
    %1656 = vmatpush1.msra.mxu0 0.0
    %1657 = vmatprep.subr.mxu0 0.0
    %1658 = vmatpush1.msra.mxu0 0.0
    %1659 = vmatprep.subr.mxu0 0.0
    %1660 = vmatpush1.msra.mxu0 0.0
    %1661 = vmatprep.subr.mxu0 0.0
    %1662 = vmatpush1.msra.mxu0 0.0
    %1663 = vmatprep.subr.mxu0 0.0
    %1664 = vmatpush1.msra.mxu0 0.0
    %1665 = vmatprep.subr.mxu0 0.0
    %1666 = vmatpush1.msra.mxu0 0.0
    %1667 = vmatprep.subr.mxu0 0.0
    %1668 = vmatpush1.msra.mxu0 0.0
    %1669 = vmatprep.subr.mxu0 0.0
    %1670 = vmatpush1.msra.mxu0 0.0
    %1671 = vmatprep.subr.mxu0 0.0
    %1672 = vmatpush1.msra.mxu0 0.0
    %1673 = vmatprep.subr.mxu0 0.0
    %1674 = vmatpush1.msra.mxu0 0.0
    %1675 = vmatprep.subr.mxu0 0.0
    %1676 = vmatpush1.msra.mxu0 0.0
    %1677 = vmatprep.subr.mxu0 0.0
    %1678 = vmatpush1.msra.mxu0 0.0
    %1679 = vmatprep.subr.mxu0 0.0
    %1680 = vmatpush1.msra.mxu0 0.0
    %1681 = vmatprep.subr.mxu0 0.0
    %1682 = vmatpush1.msra.mxu0 0.0
    %1683 = vmatprep.subr.mxu0 0.0
    %1684 = vmatpush1.msra.mxu0 0.0
    %1685 = vmatprep.subr.mxu0 0.0
    %1686 = vmatpush1.msra.mxu0 0.0
    %1687 = vmatprep.subr.mxu0 0.0
    %1688 = vmatpush1.msra.mxu0 0.0
    %1689 = vmatprep.subr.mxu0 0.0
    %1690 = vmatpush1.msra.mxu0 0.0
    %1691 = vmatprep.subr.mxu0 0.0
    %1692 = vmatpush1.msra.mxu0 0.0
    %1693 = vmatprep.subr.mxu0 0.0
    %1694 = vmatpush1.msra.mxu0 0.0
    %1695 = vmatprep.subr.mxu0 0.0
    %1696 = vmatpush1.msra.mxu0 0.0
    %1697 = vmatprep.subr.mxu0 0.0
    %1698 = vmatpush1.msra.mxu0 0.0
    %1699 = vmatprep.mubr.f32.mxu0 0.0
    %1700 = vmatmul.mubr.f32.gmra.mrb[0].mxu0 %v1554
    %v1701 = vpop.f32.mrb[0].mxu0
    %v1702 = vadd.f32 0.0, %v1701
    %v1703 = vpop.f32.mrb[0].mxu0
    %v1704 = vadd.f32 0.0, %v1703
    %1705 = vdwg.mxu0
    %v1706 = vadd.f32 %v1490, %v1631
    %v1707 = vadd.f32 %v1491, %v1633
    %v1708 = vadd.f32 %v1492, %v1702
    %v1709 = vadd.f32 %v1493, %v1704
    %v1710 = vld [vmem:[%s0 + $0x4] sm:$0xff]
    %v1711 = vld [vmem:[%s0 + $0xc] sm:$0xff]
    %v1712 = vld [vmem:[%s0 + $0x14] sm:$0xf]
    %v1713 = vlaneseq
    %v1714 = vshrl.u32 %v1713, 7
    %v1715 = vsub.s32 0, %v1714
    %v1716 = vrot.slane %v32, %v1715
    %v1717 = vlaneseq
    %v1718 = vshrl.u32 %v1717, 7
    %v1719 = vsub.s32 0, %v1718
    %v1720 = vrot.slane %v33, %v1719
    %v1721 = vlaneseq
    %v1722 = vshrl.u32 %v1721, 7
    %v1723 = vsub.s32 0, %v1722
    %v1724 = vrot.slane %v34, %v1723
    %v1725 = vlaneseq
    %v1726 = vshrl.u32 %v1725, 7
    %v1727 = vsub.s32 0, %v1726
    %v1728 = vrot.slane %v35, %v1727
    %v1733 = vcombine.low %v1716, %v1720
    %v1734 = vcombine.low %v1724, %v1728
    %1735 = vrot.lane.b32.xlu0 %v1733, 17
    %v1736 = vpop.permute.xlu0 %1735
    %1737 = vrot.lane.b32.xlu0 %v1734, 17
    %v1738 = vpop.permute.xlu0 %1737
    %v1739 = vrot.slane %v1736, 4
    %v1740 = vrot.slane %v1738, 4
    %v1741 = vsel %vm306, %v1739, %v1736
    %v1742 = vsel %vm69, %v1739, %v1740
    %v1743 = vsel %vm306, %v1742, %v1738
    %v1747 = vmul.f32 %v1710, %v1741
    %v1748 = vmul.f32 %v1711, %v1743
    %v1749 = vmul.f32 %v1712, %v1740
    %v1753 = vcombine.high %v1747, %v1747
    %v1754 = vcombine.high %v1748, %v1748
    %1755 = vrot.lane.b32.xlu0 %v1747, 111
    %v1756 = vpop.permute.xlu0 %1755
    %1757 = vrot.lane.b32.xlu0 %v1753, 111
    %v1758 = vpop.permute.xlu0 %1757
    %1759 = vrot.lane.b32.xlu0 %v1748, 111
    %v1760 = vpop.permute.xlu0 %1759
    %1761 = vrot.lane.b32.xlu0 %v1754, 111
    %v1762 = vpop.permute.xlu0 %1761
    %1763 = vrot.lane.b32.xlu0 %v1749, 111
    %v1764 = vpop.permute.xlu0 %1763
    %v1765 = vsel %vm67, %v1756, %v1758
    %v1766 = vsel %vm67, %v1758, %v1760
    %v1767 = vsel %vm67, %v1760, %v1762
    %v1768 = vsel %vm67, %v1762, %v1764
    %v1770 = vsel %vm138, %v22, 0
    %v1772 = vsel %vm69, %v1765, 0
    %v1774 = vsel %vm69, %v1766, 0
    %v1776 = vsel %vm69, %v1767, 0
    %v1778 = vsel %vm69, %v1768, 0
    %1780 = vmatprep.subr.mxu0 %v1774
    %1781 = vmatpush1.msra.mxu0 %v1772
    %1782 = vmatprep.subr.mxu0 0.0
    %1783 = vmatpush1.msra.mxu0 0.0
    %1784 = vmatprep.subr.mxu0 0.0
    %1785 = vmatpush1.msra.mxu0 0.0
    %1786 = vmatprep.subr.mxu0 0.0
    %1787 = vmatpush1.msra.mxu0 0.0
    %1788 = vmatprep.subr.mxu0 0.0
    %1789 = vmatpush1.msra.mxu0 0.0
    %1790 = vmatprep.subr.mxu0 0.0
    %1791 = vmatpush1.msra.mxu0 0.0
    %1792 = vmatprep.subr.mxu0 0.0
    %1793 = vmatpush1.msra.mxu0 0.0
    %1794 = vmatprep.subr.mxu0 0.0
    %1795 = vmatpush1.msra.mxu0 0.0
    %1796 = vmatprep.subr.mxu0 0.0
    %1797 = vmatpush1.msra.mxu0 0.0
    %1798 = vmatprep.subr.mxu0 0.0
    %1799 = vmatpush1.msra.mxu0 0.0
    %1800 = vmatprep.subr.mxu0 0.0
    %1801 = vmatpush1.msra.mxu0 0.0
    %1802 = vmatprep.subr.mxu0 0.0
    %1803 = vmatpush1.msra.mxu0 0.0
    %1804 = vmatprep.subr.mxu0 0.0
    %1805 = vmatpush1.msra.mxu0 0.0
    %1806 = vmatprep.subr.mxu0 0.0
    %1807 = vmatpush1.msra.mxu0 0.0
    %1808 = vmatprep.subr.mxu0 0.0
    %1809 = vmatpush1.msra.mxu0 0.0
    %1810 = vmatprep.subr.mxu0 0.0
    %1811 = vmatpush1.msra.mxu0 0.0
    %1812 = vmatprep.subr.mxu0 0.0
    %1813 = vmatpush1.msra.mxu0 0.0
    %1814 = vmatprep.subr.mxu0 0.0
    %1815 = vmatpush1.msra.mxu0 0.0
    %1816 = vmatprep.subr.mxu0 0.0
    %1817 = vmatpush1.msra.mxu0 0.0
    %1818 = vmatprep.subr.mxu0 0.0
    %1819 = vmatpush1.msra.mxu0 0.0
    %1820 = vmatprep.subr.mxu0 0.0
    %1821 = vmatpush1.msra.mxu0 0.0
    %1822 = vmatprep.subr.mxu0 0.0
    %1823 = vmatpush1.msra.mxu0 0.0
    %1824 = vmatprep.subr.mxu0 0.0
    %1825 = vmatpush1.msra.mxu0 0.0
    %1826 = vmatprep.subr.mxu0 0.0
    %1827 = vmatpush1.msra.mxu0 0.0
    %1828 = vmatprep.subr.mxu0 0.0
    %1829 = vmatpush1.msra.mxu0 0.0
    %1830 = vmatprep.subr.mxu0 0.0
    %1831 = vmatpush1.msra.mxu0 0.0
    %1832 = vmatprep.subr.mxu0 0.0
    %1833 = vmatpush1.msra.mxu0 0.0
    %1834 = vmatprep.subr.mxu0 0.0
    %1835 = vmatpush1.msra.mxu0 0.0
    %1836 = vmatprep.subr.mxu0 0.0
    %1837 = vmatpush1.msra.mxu0 0.0
    %1838 = vmatprep.subr.mxu0 0.0
    %1839 = vmatpush1.msra.mxu0 0.0
    %1840 = vmatprep.subr.mxu0 0.0
    %1841 = vmatpush1.msra.mxu0 0.0
    %1842 = vmatprep.subr.mxu0 0.0
    %1843 = vmatpush1.msra.mxu0 0.0
    %1844 = vmatprep.mubr.f32.mxu0 0.0
    %1845 = vmatmul.mubr.f32.gmra.mrb[0].mxu0 %v1770
    %v1846 = vpop.f32.mrb[0].mxu0
    %v1847 = vadd.f32 0.0, %v1846
    %v1848 = vpop.f32.mrb[0].mxu0
    %v1849 = vadd.f32 0.0, %v1848
    %1850 = vdwg.mxu0
    %1851 = vmatprep.subr.mxu0 %v1778
    %1852 = vmatpush1.msra.mxu0 %v1776
    %1853 = vmatprep.subr.mxu0 0.0
    %1854 = vmatpush1.msra.mxu0 0.0
    %1855 = vmatprep.subr.mxu0 0.0
    %1856 = vmatpush1.msra.mxu0 0.0
    %1857 = vmatprep.subr.mxu0 0.0
    %1858 = vmatpush1.msra.mxu0 0.0
    %1859 = vmatprep.subr.mxu0 0.0
    %1860 = vmatpush1.msra.mxu0 0.0
    %1861 = vmatprep.subr.mxu0 0.0
    %1862 = vmatpush1.msra.mxu0 0.0
    %1863 = vmatprep.subr.mxu0 0.0
    %1864 = vmatpush1.msra.mxu0 0.0
    %1865 = vmatprep.subr.mxu0 0.0
    %1866 = vmatpush1.msra.mxu0 0.0
    %1867 = vmatprep.subr.mxu0 0.0
    %1868 = vmatpush1.msra.mxu0 0.0
    %1869 = vmatprep.subr.mxu0 0.0
    %1870 = vmatpush1.msra.mxu0 0.0
    %1871 = vmatprep.subr.mxu0 0.0
    %1872 = vmatpush1.msra.mxu0 0.0
    %1873 = vmatprep.subr.mxu0 0.0
    %1874 = vmatpush1.msra.mxu0 0.0
    %1875 = vmatprep.subr.mxu0 0.0
    %1876 = vmatpush1.msra.mxu0 0.0
    %1877 = vmatprep.subr.mxu0 0.0
    %1878 = vmatpush1.msra.mxu0 0.0
    %1879 = vmatprep.subr.mxu0 0.0
    %1880 = vmatpush1.msra.mxu0 0.0
    %1881 = vmatprep.subr.mxu0 0.0
    %1882 = vmatpush1.msra.mxu0 0.0
    %1883 = vmatprep.subr.mxu0 0.0
    %1884 = vmatpush1.msra.mxu0 0.0
    %1885 = vmatprep.subr.mxu0 0.0
    %1886 = vmatpush1.msra.mxu0 0.0
    %1887 = vmatprep.subr.mxu0 0.0
    %1888 = vmatpush1.msra.mxu0 0.0
    %1889 = vmatprep.subr.mxu0 0.0
    %1890 = vmatpush1.msra.mxu0 0.0
    %1891 = vmatprep.subr.mxu0 0.0
    %1892 = vmatpush1.msra.mxu0 0.0
    %1893 = vmatprep.subr.mxu0 0.0
    %1894 = vmatpush1.msra.mxu0 0.0
    %1895 = vmatprep.subr.mxu0 0.0
    %1896 = vmatpush1.msra.mxu0 0.0
    %1897 = vmatprep.subr.mxu0 0.0
    %1898 = vmatpush1.msra.mxu0 0.0
    %1899 = vmatprep.subr.mxu0 0.0
    %1900 = vmatpush1.msra.mxu0 0.0
    %1901 = vmatprep.subr.mxu0 0.0
    %1902 = vmatpush1.msra.mxu0 0.0
    %1903 = vmatprep.subr.mxu0 0.0
    %1904 = vmatpush1.msra.mxu0 0.0
    %1905 = vmatprep.subr.mxu0 0.0
    %1906 = vmatpush1.msra.mxu0 0.0
    %1907 = vmatprep.subr.mxu0 0.0
    %1908 = vmatpush1.msra.mxu0 0.0
    %1909 = vmatprep.subr.mxu0 0.0
    %1910 = vmatpush1.msra.mxu0 0.0
    %1911 = vmatprep.subr.mxu0 0.0
    %1912 = vmatpush1.msra.mxu0 0.0
    %1913 = vmatprep.subr.mxu0 0.0
    %1914 = vmatpush1.msra.mxu0 0.0
    %1915 = vmatprep.mubr.f32.mxu0 0.0
    %1916 = vmatmul.mubr.f32.gmra.mrb[0].mxu0 %v1770
    %v1917 = vpop.f32.mrb[0].mxu0
    %v1918 = vadd.f32 0.0, %v1917
    %v1919 = vpop.f32.mrb[0].mxu0
    %v1920 = vadd.f32 0.0, %v1919
    %1921 = vdwg.mxu0
    %v1922 = vadd.f32 %v1706, %v1847
    %v1923 = vadd.f32 %v1707, %v1849
    %v1924 = vadd.f32 %v1708, %v1918
    %v1925 = vadd.f32 %v1709, %v1920
    %v1926 = vmax.f32 %v1922, 0.0
    %v1927 = vmax.f32 %v1923, 0.0
    %v1928 = vmax.f32 %v1924, 0.0
    %v1929 = vmax.f32 %v1925, 0.0
    %1930 = vst [vmem:[#allocation2] sm:$0xf] 0.0
    %1931 = vst [vmem:[#allocation2 + $0x14] sm:$0xf] 0.0
    %v1936 = vcombine.low %v1926, %v1927
    %v1937 = vcombine.low %v1928, %v1929
    %1940 = vst [vmem:[#allocation2 + $0x4] sm:$0xff] %v1936
    %1941 = vst [vmem:[#allocation2 + $0xc] sm:$0xff] %v1937
    %v1942 = vld [vmem:[#allocation2] sm:$0xff]
    %v1943 = vld [vmem:[#allocation2 + $0x8] sm:$0xff]
    %v1944 = vld [vmem:[#allocation2 + $0x10] sm:$0xf]
    %v1945 = vmul.f32 %v1942, %v68
    %v1946 = vmul.f32 %v1943, %v71
    %v1947 = vmul.f32 %v1944, %v66
    %v1948 = vmul.f32 %v1942, %v107
    %v1949 = vmul.f32 %v1943, %v109
    %v1950 = vmul.f32 %v1944, %v105
    %v1952 = vrot.slane %v23, 4
    %v1956 = vcombine.high %v1948, %v1948
    %v1957 = vcombine.high %v1949, %v1949
    %1958 = vrot.lane.b32.xlu0 %v1948, 16
    %v1959 = vpop.permute.xlu0 %1958
    %1960 = vrot.lane.b32.xlu0 %v1956, 16
    %v1961 = vpop.permute.xlu0 %1960
    %1962 = vrot.lane.b32.xlu0 %v1949, 16
    %v1963 = vpop.permute.xlu0 %1962
    %1964 = vrot.lane.b32.xlu0 %v1957, 16
    %v1965 = vpop.permute.xlu0 %1964
    %1966 = vrot.lane.b32.xlu0 %v1950, 16
    %v1967 = vpop.permute.xlu0 %1966
    %v1968 = vsel %vm133, %v1959, %v1961
    %v1969 = vsel %vm133, %v1961, %v1963
    %v1970 = vsel %vm133, %v1963, %v1965
    %v1971 = vsel %vm133, %v1965, %v1967
    %v1972 = vsel %vm138, %v1952, 0
    %v1974 = vsel %vm69, %v1968, 0
    %v1976 = vsel %vm69, %v1969, 0
    %v1978 = vsel %vm69, %v1970, 0
    %v1980 = vsel %vm69, %v1971, 0
    %1982 = vmatprep.subr.mxu0 %v1976
    %1983 = vmatpush1.msra.mxu0 %v1974
    %1984 = vmatprep.subr.mxu0 0.0
    %1985 = vmatpush1.msra.mxu0 0.0
    %1986 = vmatprep.subr.mxu0 0.0
    %1987 = vmatpush1.msra.mxu0 0.0
    %1988 = vmatprep.subr.mxu0 0.0
    %1989 = vmatpush1.msra.mxu0 0.0
    %1990 = vmatprep.subr.mxu0 0.0
    %1991 = vmatpush1.msra.mxu0 0.0
    %1992 = vmatprep.subr.mxu0 0.0
    %1993 = vmatpush1.msra.mxu0 0.0
    %1994 = vmatprep.subr.mxu0 0.0
    %1995 = vmatpush1.msra.mxu0 0.0
    %1996 = vmatprep.subr.mxu0 0.0
    %1997 = vmatpush1.msra.mxu0 0.0
    %1998 = vmatprep.subr.mxu0 0.0
    %1999 = vmatpush1.msra.mxu0 0.0
    %2000 = vmatprep.subr.mxu0 0.0
    %2001 = vmatpush1.msra.mxu0 0.0
    %2002 = vmatprep.subr.mxu0 0.0
    %2003 = vmatpush1.msra.mxu0 0.0
    %2004 = vmatprep.subr.mxu0 0.0
    %2005 = vmatpush1.msra.mxu0 0.0
    %2006 = vmatprep.subr.mxu0 0.0
    %2007 = vmatpush1.msra.mxu0 0.0
    %2008 = vmatprep.subr.mxu0 0.0
    %2009 = vmatpush1.msra.mxu0 0.0
    %2010 = vmatprep.subr.mxu0 0.0
    %2011 = vmatpush1.msra.mxu0 0.0
    %2012 = vmatprep.subr.mxu0 0.0
    %2013 = vmatpush1.msra.mxu0 0.0
    %2014 = vmatprep.subr.mxu0 0.0
    %2015 = vmatpush1.msra.mxu0 0.0
    %2016 = vmatprep.subr.mxu0 0.0
    %2017 = vmatpush1.msra.mxu0 0.0
    %2018 = vmatprep.subr.mxu0 0.0
    %2019 = vmatpush1.msra.mxu0 0.0
    %2020 = vmatprep.subr.mxu0 0.0
    %2021 = vmatpush1.msra.mxu0 0.0
    %2022 = vmatprep.subr.mxu0 0.0
    %2023 = vmatpush1.msra.mxu0 0.0
    %2024 = vmatprep.subr.mxu0 0.0
    %2025 = vmatpush1.msra.mxu0 0.0
    %2026 = vmatprep.subr.mxu0 0.0
    %2027 = vmatpush1.msra.mxu0 0.0
    %2028 = vmatprep.subr.mxu0 0.0
    %2029 = vmatpush1.msra.mxu0 0.0
    %2030 = vmatprep.subr.mxu0 0.0
    %2031 = vmatpush1.msra.mxu0 0.0
    %2032 = vmatprep.subr.mxu0 0.0
    %2033 = vmatpush1.msra.mxu0 0.0
    %2034 = vmatprep.subr.mxu0 0.0
    %2035 = vmatpush1.msra.mxu0 0.0
    %2036 = vmatprep.subr.mxu0 0.0
    %2037 = vmatpush1.msra.mxu0 0.0
    %2038 = vmatprep.subr.mxu0 0.0
    %2039 = vmatpush1.msra.mxu0 0.0
    %2040 = vmatprep.subr.mxu0 0.0
    %2041 = vmatpush1.msra.mxu0 0.0
    %2042 = vmatprep.subr.mxu0 0.0
    %2043 = vmatpush1.msra.mxu0 0.0
    %2044 = vmatprep.subr.mxu0 0.0
    %2045 = vmatpush1.msra.mxu0 0.0
    %2046 = vmatprep.mubr.f32.mxu0 0.0
    %2047 = vmatmul.mubr.f32.gmra.mrb[0].mxu0 %v1972
    %v2048 = vpop.f32.mrb[0].mxu0
    %v2049 = vadd.f32 0.0, %v2048
    %v2050 = vpop.f32.mrb[0].mxu0
    %v2051 = vadd.f32 0.0, %v2050
    %2052 = vdwg.mxu0
    %2053 = vmatprep.subr.mxu0 %v1980
    %2054 = vmatpush1.msra.mxu0 %v1978
    %2055 = vmatprep.subr.mxu0 0.0
    %2056 = vmatpush1.msra.mxu0 0.0
    %2057 = vmatprep.subr.mxu0 0.0
    %2058 = vmatpush1.msra.mxu0 0.0
    %2059 = vmatprep.subr.mxu0 0.0
    %2060 = vmatpush1.msra.mxu0 0.0
    %2061 = vmatprep.subr.mxu0 0.0
    %2062 = vmatpush1.msra.mxu0 0.0
    %2063 = vmatprep.subr.mxu0 0.0
    %2064 = vmatpush1.msra.mxu0 0.0
    %2065 = vmatprep.subr.mxu0 0.0
    %2066 = vmatpush1.msra.mxu0 0.0
    %2067 = vmatprep.subr.mxu0 0.0
    %2068 = vmatpush1.msra.mxu0 0.0
    %2069 = vmatprep.subr.mxu0 0.0
    %2070 = vmatpush1.msra.mxu0 0.0
    %2071 = vmatprep.subr.mxu0 0.0
    %2072 = vmatpush1.msra.mxu0 0.0
    %2073 = vmatprep.subr.mxu0 0.0
    %2074 = vmatpush1.msra.mxu0 0.0
    %2075 = vmatprep.subr.mxu0 0.0
    %2076 = vmatpush1.msra.mxu0 0.0
    %2077 = vmatprep.subr.mxu0 0.0
    %2078 = vmatpush1.msra.mxu0 0.0
    %2079 = vmatprep.subr.mxu0 0.0
    %2080 = vmatpush1.msra.mxu0 0.0
    %2081 = vmatprep.subr.mxu0 0.0
    %2082 = vmatpush1.msra.mxu0 0.0
    %2083 = vmatprep.subr.mxu0 0.0
    %2084 = vmatpush1.msra.mxu0 0.0
    %2085 = vmatprep.subr.mxu0 0.0
    %2086 = vmatpush1.msra.mxu0 0.0
    %2087 = vmatprep.subr.mxu0 0.0
    %2088 = vmatpush1.msra.mxu0 0.0
    %2089 = vmatprep.subr.mxu0 0.0
    %2090 = vmatpush1.msra.mxu0 0.0
    %2091 = vmatprep.subr.mxu0 0.0
    %2092 = vmatpush1.msra.mxu0 0.0
    %2093 = vmatprep.subr.mxu0 0.0
    %2094 = vmatpush1.msra.mxu0 0.0
    %2095 = vmatprep.subr.mxu0 0.0
    %2096 = vmatpush1.msra.mxu0 0.0
    %2097 = vmatprep.subr.mxu0 0.0
    %2098 = vmatpush1.msra.mxu0 0.0
    %2099 = vmatprep.subr.mxu0 0.0
    %2100 = vmatpush1.msra.mxu0 0.0
    %2101 = vmatprep.subr.mxu0 0.0
    %2102 = vmatpush1.msra.mxu0 0.0
    %2103 = vmatprep.subr.mxu0 0.0
    %2104 = vmatpush1.msra.mxu0 0.0
    %2105 = vmatprep.subr.mxu0 0.0
    %2106 = vmatpush1.msra.mxu0 0.0
    %2107 = vmatprep.subr.mxu0 0.0
    %2108 = vmatpush1.msra.mxu0 0.0
    %2109 = vmatprep.subr.mxu0 0.0
    %2110 = vmatpush1.msra.mxu0 0.0
    %2111 = vmatprep.subr.mxu0 0.0
    %2112 = vmatpush1.msra.mxu0 0.0
    %2113 = vmatprep.subr.mxu0 0.0
    %2114 = vmatpush1.msra.mxu0 0.0
    %2115 = vmatprep.subr.mxu0 0.0
    %2116 = vmatpush1.msra.mxu0 0.0
    %2117 = vmatprep.mubr.f32.mxu0 0.0
    %2118 = vmatmul.mubr.f32.gmra.mrb[0].mxu0 %v1972
    %v2119 = vpop.f32.mrb[0].mxu0
    %v2120 = vadd.f32 0.0, %v2119
    %v2121 = vpop.f32.mrb[0].mxu0
    %v2122 = vadd.f32 0.0, %v2121
    %2123 = vdwg.mxu0
    %v2127 = vcombine.high %v1945, %v1945
    %v2128 = vcombine.high %v1946, %v1946
    %2129 = vrot.lane.b32.xlu0 %v1945, 17
    %v2130 = vpop.permute.xlu0 %2129
    %2131 = vrot.lane.b32.xlu0 %v2127, 17
    %v2132 = vpop.permute.xlu0 %2131
    %2133 = vrot.lane.b32.xlu0 %v1946, 17
    %v2134 = vpop.permute.xlu0 %2133
    %2135 = vrot.lane.b32.xlu0 %v2128, 17
    %v2136 = vpop.permute.xlu0 %2135
    %2137 = vrot.lane.b32.xlu0 %v1947, 17
    %v2138 = vpop.permute.xlu0 %2137
    %v2139 = vsel %vm306, %v2130, %v2132
    %v2140 = vsel %vm306, %v2132, %v2134
    %v2141 = vsel %vm306, %v2134, %v2136
    %v2142 = vsel %vm306, %v2136, %v2138
    %v2143 = vsel %vm138, %v23, 0
    %v2145 = vsel %vm69, %v2139, 0
    %v2147 = vsel %vm69, %v2140, 0
    %v2149 = vsel %vm69, %v2141, 0
    %v2151 = vsel %vm69, %v2142, 0
    %2153 = vmatprep.subr.mxu0 %v2147
    %2154 = vmatpush1.msra.mxu0 %v2145
    %2155 = vmatprep.subr.mxu0 0.0
    %2156 = vmatpush1.msra.mxu0 0.0
    %2157 = vmatprep.subr.mxu0 0.0
    %2158 = vmatpush1.msra.mxu0 0.0
    %2159 = vmatprep.subr.mxu0 0.0
    %2160 = vmatpush1.msra.mxu0 0.0
    %2161 = vmatprep.subr.mxu0 0.0
    %2162 = vmatpush1.msra.mxu0 0.0
    %2163 = vmatprep.subr.mxu0 0.0
    %2164 = vmatpush1.msra.mxu0 0.0
    %2165 = vmatprep.subr.mxu0 0.0
    %2166 = vmatpush1.msra.mxu0 0.0
    %2167 = vmatprep.subr.mxu0 0.0
    %2168 = vmatpush1.msra.mxu0 0.0
    %2169 = vmatprep.subr.mxu0 0.0
    %2170 = vmatpush1.msra.mxu0 0.0
    %2171 = vmatprep.subr.mxu0 0.0
    %2172 = vmatpush1.msra.mxu0 0.0
    %2173 = vmatprep.subr.mxu0 0.0
    %2174 = vmatpush1.msra.mxu0 0.0
    %2175 = vmatprep.subr.mxu0 0.0
    %2176 = vmatpush1.msra.mxu0 0.0
    %2177 = vmatprep.subr.mxu0 0.0
    %2178 = vmatpush1.msra.mxu0 0.0
    %2179 = vmatprep.subr.mxu0 0.0
    %2180 = vmatpush1.msra.mxu0 0.0
    %2181 = vmatprep.subr.mxu0 0.0
    %2182 = vmatpush1.msra.mxu0 0.0
    %2183 = vmatprep.subr.mxu0 0.0
    %2184 = vmatpush1.msra.mxu0 0.0
    %2185 = vmatprep.subr.mxu0 0.0
    %2186 = vmatpush1.msra.mxu0 0.0
    %2187 = vmatprep.subr.mxu0 0.0
    %2188 = vmatpush1.msra.mxu0 0.0
    %2189 = vmatprep.subr.mxu0 0.0
    %2190 = vmatpush1.msra.mxu0 0.0
    %2191 = vmatprep.subr.mxu0 0.0
    %2192 = vmatpush1.msra.mxu0 0.0
    %2193 = vmatprep.subr.mxu0 0.0
    %2194 = vmatpush1.msra.mxu0 0.0
    %2195 = vmatprep.subr.mxu0 0.0
    %2196 = vmatpush1.msra.mxu0 0.0
    %2197 = vmatprep.subr.mxu0 0.0
    %2198 = vmatpush1.msra.mxu0 0.0
    %2199 = vmatprep.subr.mxu0 0.0
    %2200 = vmatpush1.msra.mxu0 0.0
    %2201 = vmatprep.subr.mxu0 0.0
    %2202 = vmatpush1.msra.mxu0 0.0
    %2203 = vmatprep.subr.mxu0 0.0
    %2204 = vmatpush1.msra.mxu0 0.0
    %2205 = vmatprep.subr.mxu0 0.0
    %2206 = vmatpush1.msra.mxu0 0.0
    %2207 = vmatprep.subr.mxu0 0.0
    %2208 = vmatpush1.msra.mxu0 0.0
    %2209 = vmatprep.subr.mxu0 0.0
    %2210 = vmatpush1.msra.mxu0 0.0
    %2211 = vmatprep.subr.mxu0 0.0
    %2212 = vmatpush1.msra.mxu0 0.0
    %2213 = vmatprep.subr.mxu0 0.0
    %2214 = vmatpush1.msra.mxu0 0.0
    %2215 = vmatprep.subr.mxu0 0.0
    %2216 = vmatpush1.msra.mxu0 0.0
    %2217 = vmatprep.mubr.f32.mxu0 0.0
    %2218 = vmatmul.mubr.f32.gmra.mrb[0].mxu0 %v2143
    %v2219 = vpop.f32.mrb[0].mxu0
    %v2220 = vadd.f32 %v2049, %v2219
    %v2221 = vpop.f32.mrb[0].mxu0
    %v2222 = vadd.f32 %v2051, %v2221
    %2223 = vdwg.mxu0
    %2224 = vmatprep.subr.mxu0 %v2151
    %2225 = vmatpush1.msra.mxu0 %v2149
    %2226 = vmatprep.subr.mxu0 0.0
    %2227 = vmatpush1.msra.mxu0 0.0
    %2228 = vmatprep.subr.mxu0 0.0
    %2229 = vmatpush1.msra.mxu0 0.0
    %2230 = vmatprep.subr.mxu0 0.0
    %2231 = vmatpush1.msra.mxu0 0.0
    %2232 = vmatprep.subr.mxu0 0.0
    %2233 = vmatpush1.msra.mxu0 0.0
    %2234 = vmatprep.subr.mxu0 0.0
    %2235 = vmatpush1.msra.mxu0 0.0
    %2236 = vmatprep.subr.mxu0 0.0
    %2237 = vmatpush1.msra.mxu0 0.0
    %2238 = vmatprep.subr.mxu0 0.0
    %2239 = vmatpush1.msra.mxu0 0.0
    %2240 = vmatprep.subr.mxu0 0.0
    %2241 = vmatpush1.msra.mxu0 0.0
    %2242 = vmatprep.subr.mxu0 0.0
    %2243 = vmatpush1.msra.mxu0 0.0
    %2244 = vmatprep.subr.mxu0 0.0
    %2245 = vmatpush1.msra.mxu0 0.0
    %2246 = vmatprep.subr.mxu0 0.0
    %2247 = vmatpush1.msra.mxu0 0.0
    %2248 = vmatprep.subr.mxu0 0.0
    %2249 = vmatpush1.msra.mxu0 0.0
    %2250 = vmatprep.subr.mxu0 0.0
    %2251 = vmatpush1.msra.mxu0 0.0
    %2252 = vmatprep.subr.mxu0 0.0
    %2253 = vmatpush1.msra.mxu0 0.0
    %2254 = vmatprep.subr.mxu0 0.0
    %2255 = vmatpush1.msra.mxu0 0.0
    %2256 = vmatprep.subr.mxu0 0.0
    %2257 = vmatpush1.msra.mxu0 0.0
    %2258 = vmatprep.subr.mxu0 0.0
    %2259 = vmatpush1.msra.mxu0 0.0
    %2260 = vmatprep.subr.mxu0 0.0
    %2261 = vmatpush1.msra.mxu0 0.0
    %2262 = vmatprep.subr.mxu0 0.0
    %2263 = vmatpush1.msra.mxu0 0.0
    %2264 = vmatprep.subr.mxu0 0.0
    %2265 = vmatpush1.msra.mxu0 0.0
    %2266 = vmatprep.subr.mxu0 0.0
    %2267 = vmatpush1.msra.mxu0 0.0
    %2268 = vmatprep.subr.mxu0 0.0
    %2269 = vmatpush1.msra.mxu0 0.0
    %2270 = vmatprep.subr.mxu0 0.0
    %2271 = vmatpush1.msra.mxu0 0.0
    %2272 = vmatprep.subr.mxu0 0.0
    %2273 = vmatpush1.msra.mxu0 0.0
    %2274 = vmatprep.subr.mxu0 0.0
    %2275 = vmatpush1.msra.mxu0 0.0
    %2276 = vmatprep.subr.mxu0 0.0
    %2277 = vmatpush1.msra.mxu0 0.0
    %2278 = vmatprep.subr.mxu0 0.0
    %2279 = vmatpush1.msra.mxu0 0.0
    %2280 = vmatprep.subr.mxu0 0.0
    %2281 = vmatpush1.msra.mxu0 0.0
    %2282 = vmatprep.subr.mxu0 0.0
    %2283 = vmatpush1.msra.mxu0 0.0
    %2284 = vmatprep.subr.mxu0 0.0
    %2285 = vmatpush1.msra.mxu0 0.0
    %2286 = vmatprep.subr.mxu0 0.0
    %2287 = vmatpush1.msra.mxu0 0.0
    %2288 = vmatprep.mubr.f32.mxu0 0.0
    %2289 = vmatmul.mubr.f32.gmra.mrb[0].mxu0 %v2143
    %v2290 = vpop.f32.mrb[0].mxu0
    %v2291 = vadd.f32 %v2120, %v2290
    %v2292 = vpop.f32.mrb[0].mxu0
    %v2293 = vadd.f32 %v2122, %v2292
    %2294 = vdwg.mxu0
    %v2295 = vld [vmem:[#allocation2] sm:$0xff]
    %v2296 = vld [vmem:[#allocation2 + $0x8] sm:$0xff]
    %v2297 = vld [vmem:[#allocation2 + $0x10] sm:$0xf]
    %v2298 = vmul.f32 %v2295, %v495
    %v2299 = vmul.f32 %v2296, %v497
    %v2300 = vmul.f32 %v2297, %v493
    %v2304 = vcombine.high %v2298, %v2298
    %v2305 = vcombine.high %v2299, %v2299
    %2306 = vrot.lane.b32.xlu0 %v2298, 15
    %v2307 = vpop.permute.xlu0 %2306
    %2308 = vrot.lane.b32.xlu0 %v2304, 15
    %v2309 = vpop.permute.xlu0 %2308
    %2310 = vrot.lane.b32.xlu0 %v2299, 15
    %v2311 = vpop.permute.xlu0 %2310
    %2312 = vrot.lane.b32.xlu0 %v2305, 15
    %v2313 = vpop.permute.xlu0 %2312
    %2314 = vrot.lane.b32.xlu0 %v2300, 15
    %v2315 = vpop.permute.xlu0 %2314
    %v2316 = vsel %vm519, %v2307, %v2309
    %v2317 = vsel %vm519, %v2309, %v2311
    %v2318 = vsel %vm519, %v2311, %v2313
    %v2319 = vsel %vm519, %v2313, %v2315
    %v2321 = vsel %vm138, %v24, 0
    %v2323 = vsel %vm69, %v2316, 0
    %v2325 = vsel %vm69, %v2317, 0
    %v2327 = vsel %vm69, %v2318, 0
    %v2329 = vsel %vm69, %v2319, 0
    %2331 = vmatprep.subr.mxu0 %v2325
    %2332 = vmatpush1.msra.mxu0 %v2323
    %2333 = vmatprep.subr.mxu0 0.0
    %2334 = vmatpush1.msra.mxu0 0.0
    %2335 = vmatprep.subr.mxu0 0.0
    %2336 = vmatpush1.msra.mxu0 0.0
    %2337 = vmatprep.subr.mxu0 0.0
    %2338 = vmatpush1.msra.mxu0 0.0
    %2339 = vmatprep.subr.mxu0 0.0
    %2340 = vmatpush1.msra.mxu0 0.0
    %2341 = vmatprep.subr.mxu0 0.0
    %2342 = vmatpush1.msra.mxu0 0.0
    %2343 = vmatprep.subr.mxu0 0.0
    %2344 = vmatpush1.msra.mxu0 0.0
    %2345 = vmatprep.subr.mxu0 0.0
    %2346 = vmatpush1.msra.mxu0 0.0
    %2347 = vmatprep.subr.mxu0 0.0
    %2348 = vmatpush1.msra.mxu0 0.0
    %2349 = vmatprep.subr.mxu0 0.0
    %2350 = vmatpush1.msra.mxu0 0.0
    %2351 = vmatprep.subr.mxu0 0.0
    %2352 = vmatpush1.msra.mxu0 0.0
    %2353 = vmatprep.subr.mxu0 0.0
    %2354 = vmatpush1.msra.mxu0 0.0
    %2355 = vmatprep.subr.mxu0 0.0
    %2356 = vmatpush1.msra.mxu0 0.0
    %2357 = vmatprep.subr.mxu0 0.0
    %2358 = vmatpush1.msra.mxu0 0.0
    %2359 = vmatprep.subr.mxu0 0.0
    %2360 = vmatpush1.msra.mxu0 0.0
    %2361 = vmatprep.subr.mxu0 0.0
    %2362 = vmatpush1.msra.mxu0 0.0
    %2363 = vmatprep.subr.mxu0 0.0
    %2364 = vmatpush1.msra.mxu0 0.0
    %2365 = vmatprep.subr.mxu0 0.0
    %2366 = vmatpush1.msra.mxu0 0.0
    %2367 = vmatprep.subr.mxu0 0.0
    %2368 = vmatpush1.msra.mxu0 0.0
    %2369 = vmatprep.subr.mxu0 0.0
    %2370 = vmatpush1.msra.mxu0 0.0
    %2371 = vmatprep.subr.mxu0 0.0
    %2372 = vmatpush1.msra.mxu0 0.0
    %2373 = vmatprep.subr.mxu0 0.0
    %2374 = vmatpush1.msra.mxu0 0.0
    %2375 = vmatprep.subr.mxu0 0.0
    %2376 = vmatpush1.msra.mxu0 0.0
    %2377 = vmatprep.subr.mxu0 0.0
    %2378 = vmatpush1.msra.mxu0 0.0
    %2379 = vmatprep.subr.mxu0 0.0
    %2380 = vmatpush1.msra.mxu0 0.0
    %2381 = vmatprep.subr.mxu0 0.0
    %2382 = vmatpush1.msra.mxu0 0.0
    %2383 = vmatprep.subr.mxu0 0.0
    %2384 = vmatpush1.msra.mxu0 0.0
    %2385 = vmatprep.subr.mxu0 0.0
    %2386 = vmatpush1.msra.mxu0 0.0
    %2387 = vmatprep.subr.mxu0 0.0
    %2388 = vmatpush1.msra.mxu0 0.0
    %2389 = vmatprep.subr.mxu0 0.0
    %2390 = vmatpush1.msra.mxu0 0.0
    %2391 = vmatprep.subr.mxu0 0.0
    %2392 = vmatpush1.msra.mxu0 0.0
    %2393 = vmatprep.subr.mxu0 0.0
    %2394 = vmatpush1.msra.mxu0 0.0
    %2395 = vmatprep.mubr.f32.mxu0 0.0
    %2396 = vmatmul.mubr.f32.gmra.mrb[0].mxu0 %v2321
    %v2397 = vpop.f32.mrb[0].mxu0
    %v2398 = vadd.f32 0.0, %v2397
    %v2399 = vpop.f32.mrb[0].mxu0
    %v2400 = vadd.f32 0.0, %v2399
    %2401 = vdwg.mxu0
    %2402 = vmatprep.subr.mxu0 %v2329
    %2403 = vmatpush1.msra.mxu0 %v2327
    %2404 = vmatprep.subr.mxu0 0.0
    %2405 = vmatpush1.msra.mxu0 0.0
    %2406 = vmatprep.subr.mxu0 0.0
    %2407 = vmatpush1.msra.mxu0 0.0
    %2408 = vmatprep.subr.mxu0 0.0
    %2409 = vmatpush1.msra.mxu0 0.0
    %2410 = vmatprep.subr.mxu0 0.0
    %2411 = vmatpush1.msra.mxu0 0.0
    %2412 = vmatprep.subr.mxu0 0.0
    %2413 = vmatpush1.msra.mxu0 0.0
    %2414 = vmatprep.subr.mxu0 0.0
    %2415 = vmatpush1.msra.mxu0 0.0
    %2416 = vmatprep.subr.mxu0 0.0
    %2417 = vmatpush1.msra.mxu0 0.0
    %2418 = vmatprep.subr.mxu0 0.0
    %2419 = vmatpush1.msra.mxu0 0.0
    %2420 = vmatprep.subr.mxu0 0.0
    %2421 = vmatpush1.msra.mxu0 0.0
    %2422 = vmatprep.subr.mxu0 0.0
    %2423 = vmatpush1.msra.mxu0 0.0
    %2424 = vmatprep.subr.mxu0 0.0
    %2425 = vmatpush1.msra.mxu0 0.0
    %2426 = vmatprep.subr.mxu0 0.0
    %2427 = vmatpush1.msra.mxu0 0.0
    %2428 = vmatprep.subr.mxu0 0.0
    %2429 = vmatpush1.msra.mxu0 0.0
    %2430 = vmatprep.subr.mxu0 0.0
    %2431 = vmatpush1.msra.mxu0 0.0
    %2432 = vmatprep.subr.mxu0 0.0
    %2433 = vmatpush1.msra.mxu0 0.0
    %2434 = vmatprep.subr.mxu0 0.0
    %2435 = vmatpush1.msra.mxu0 0.0
    %2436 = vmatprep.subr.mxu0 0.0
    %2437 = vmatpush1.msra.mxu0 0.0
    %2438 = vmatprep.subr.mxu0 0.0
    %2439 = vmatpush1.msra.mxu0 0.0
    %2440 = vmatprep.subr.mxu0 0.0
    %2441 = vmatpush1.msra.mxu0 0.0
    %2442 = vmatprep.subr.mxu0 0.0
    %2443 = vmatpush1.msra.mxu0 0.0
    %2444 = vmatprep.subr.mxu0 0.0
    %2445 = vmatpush1.msra.mxu0 0.0
    %2446 = vmatprep.subr.mxu0 0.0
    %2447 = vmatpush1.msra.mxu0 0.0
    %2448 = vmatprep.subr.mxu0 0.0
    %2449 = vmatpush1.msra.mxu0 0.0
    %2450 = vmatprep.subr.mxu0 0.0
    %2451 = vmatpush1.msra.mxu0 0.0
    %2452 = vmatprep.subr.mxu0 0.0
    %2453 = vmatpush1.msra.mxu0 0.0
    %2454 = vmatprep.subr.mxu0 0.0
    %2455 = vmatpush1.msra.mxu0 0.0
    %2456 = vmatprep.subr.mxu0 0.0
    %2457 = vmatpush1.msra.mxu0 0.0
    %2458 = vmatprep.subr.mxu0 0.0
    %2459 = vmatpush1.msra.mxu0 0.0
    %2460 = vmatprep.subr.mxu0 0.0
    %2461 = vmatpush1.msra.mxu0 0.0
    %2462 = vmatprep.subr.mxu0 0.0
    %2463 = vmatpush1.msra.mxu0 0.0
    %2464 = vmatprep.subr.mxu0 0.0
    %2465 = vmatpush1.msra.mxu0 0.0
    %2466 = vmatprep.mubr.f32.mxu0 0.0
    %2467 = vmatmul.mubr.f32.gmra.mrb[0].mxu0 %v2321
    %v2468 = vpop.f32.mrb[0].mxu0
    %v2469 = vadd.f32 0.0, %v2468
    %v2470 = vpop.f32.mrb[0].mxu0
    %v2471 = vadd.f32 0.0, %v2470
    %2472 = vdwg.mxu0
    %v2473 = vadd.f32 %v2220, %v2398
    %v2474 = vadd.f32 %v2222, %v2400
    %v2475 = vadd.f32 %v2291, %v2469
    %v2476 = vadd.f32 %v2293, %v2471
    %v2477 = vld [vmem:[#allocation2] sm:$0xff]
    %v2478 = vld [vmem:[#allocation2 + $0x8] sm:$0xff]
    %v2479 = vld [vmem:[#allocation2 + $0x10] sm:$0xf]
    %v2480 = vmul.f32 %v2477, %v713
    %v2481 = vmul.f32 %v2478, %v715
    %v2482 = vmul.f32 %v2479, %v711
    %v2483 = vrot.slane %v24, 4
    %v2487 = vcombine.high %v2480, %v2480
    %v2488 = vcombine.high %v2481, %v2481
    %2489 = vrot.lane.b32.xlu0 %v2480, 1
    %v2490 = vpop.permute.xlu0 %2489
    %2491 = vrot.lane.b32.xlu0 %v2487, 1
    %v2492 = vpop.permute.xlu0 %2491
    %2493 = vrot.lane.b32.xlu0 %v2481, 1
    %v2494 = vpop.permute.xlu0 %2493
    %2495 = vrot.lane.b32.xlu0 %v2488, 1
    %v2496 = vpop.permute.xlu0 %2495
    %2497 = vrot.lane.b32.xlu0 %v2482, 1
    %v2498 = vpop.permute.xlu0 %2497
    %v2499 = vsel %vm738, %v2490, %v2492
    %v2500 = vsel %vm738, %v2492, %v2494
    %v2501 = vsel %vm738, %v2494, %v2496
    %v2502 = vsel %vm738, %v2496, %v2498
    %v2503 = vsel %vm138, %v2483, 0
    %v2505 = vsel %vm69, %v2499, 0
    %v2507 = vsel %vm69, %v2500, 0
    %v2509 = vsel %vm69, %v2501, 0
    %v2511 = vsel %vm69, %v2502, 0
    %2513 = vmatprep.subr.mxu0 %v2507
    %2514 = vmatpush1.msra.mxu0 %v2505
    %2515 = vmatprep.subr.mxu0 0.0
    %2516 = vmatpush1.msra.mxu0 0.0
    %2517 = vmatprep.subr.mxu0 0.0
    %2518 = vmatpush1.msra.mxu0 0.0
    %2519 = vmatprep.subr.mxu0 0.0
    %2520 = vmatpush1.msra.mxu0 0.0
    %2521 = vmatprep.subr.mxu0 0.0
    %2522 = vmatpush1.msra.mxu0 0.0
    %2523 = vmatprep.subr.mxu0 0.0
    %2524 = vmatpush1.msra.mxu0 0.0
    %2525 = vmatprep.subr.mxu0 0.0
    %2526 = vmatpush1.msra.mxu0 0.0
    %2527 = vmatprep.subr.mxu0 0.0
    %2528 = vmatpush1.msra.mxu0 0.0
    %2529 = vmatprep.subr.mxu0 0.0
    %2530 = vmatpush1.msra.mxu0 0.0
    %2531 = vmatprep.subr.mxu0 0.0
    %2532 = vmatpush1.msra.mxu0 0.0
    %2533 = vmatprep.subr.mxu0 0.0
    %2534 = vmatpush1.msra.mxu0 0.0
    %2535 = vmatprep.subr.mxu0 0.0
    %2536 = vmatpush1.msra.mxu0 0.0
    %2537 = vmatprep.subr.mxu0 0.0
    %2538 = vmatpush1.msra.mxu0 0.0
    %2539 = vmatprep.subr.mxu0 0.0
    %2540 = vmatpush1.msra.mxu0 0.0
    %2541 = vmatprep.subr.mxu0 0.0
    %2542 = vmatpush1.msra.mxu0 0.0
    %2543 = vmatprep.subr.mxu0 0.0
    %2544 = vmatpush1.msra.mxu0 0.0
    %2545 = vmatprep.subr.mxu0 0.0
    %2546 = vmatpush1.msra.mxu0 0.0
    %2547 = vmatprep.subr.mxu0 0.0
    %2548 = vmatpush1.msra.mxu0 0.0
    %2549 = vmatprep.subr.mxu0 0.0
    %2550 = vmatpush1.msra.mxu0 0.0
    %2551 = vmatprep.subr.mxu0 0.0
    %2552 = vmatpush1.msra.mxu0 0.0
    %2553 = vmatprep.subr.mxu0 0.0
    %2554 = vmatpush1.msra.mxu0 0.0
    %2555 = vmatprep.subr.mxu0 0.0
    %2556 = vmatpush1.msra.mxu0 0.0
    %2557 = vmatprep.subr.mxu0 0.0
    %2558 = vmatpush1.msra.mxu0 0.0
    %2559 = vmatprep.subr.mxu0 0.0
    %2560 = vmatpush1.msra.mxu0 0.0
    %2561 = vmatprep.subr.mxu0 0.0
    %2562 = vmatpush1.msra.mxu0 0.0
    %2563 = vmatprep.subr.mxu0 0.0
    %2564 = vmatpush1.msra.mxu0 0.0
    %2565 = vmatprep.subr.mxu0 0.0
    %2566 = vmatpush1.msra.mxu0 0.0
    %2567 = vmatprep.subr.mxu0 0.0
    %2568 = vmatpush1.msra.mxu0 0.0
    %2569 = vmatprep.subr.mxu0 0.0
    %2570 = vmatpush1.msra.mxu0 0.0
    %2571 = vmatprep.subr.mxu0 0.0
    %2572 = vmatpush1.msra.mxu0 0.0
    %2573 = vmatprep.subr.mxu0 0.0
    %2574 = vmatpush1.msra.mxu0 0.0
    %2575 = vmatprep.subr.mxu0 0.0
    %2576 = vmatpush1.msra.mxu0 0.0
    %2577 = vmatprep.mubr.f32.mxu0 0.0
    %2578 = vmatmul.mubr.f32.gmra.mrb[0].mxu0 %v2503
    %v2579 = vpop.f32.mrb[0].mxu0
    %v2580 = vadd.f32 0.0, %v2579
    %v2581 = vpop.f32.mrb[0].mxu0
    %v2582 = vadd.f32 0.0, %v2581
    %2583 = vdwg.mxu0
    %2584 = vmatprep.subr.mxu0 %v2511
    %2585 = vmatpush1.msra.mxu0 %v2509
    %2586 = vmatprep.subr.mxu0 0.0
    %2587 = vmatpush1.msra.mxu0 0.0
    %2588 = vmatprep.subr.mxu0 0.0
    %2589 = vmatpush1.msra.mxu0 0.0
    %2590 = vmatprep.subr.mxu0 0.0
    %2591 = vmatpush1.msra.mxu0 0.0
    %2592 = vmatprep.subr.mxu0 0.0
    %2593 = vmatpush1.msra.mxu0 0.0
    %2594 = vmatprep.subr.mxu0 0.0
    %2595 = vmatpush1.msra.mxu0 0.0
    %2596 = vmatprep.subr.mxu0 0.0
    %2597 = vmatpush1.msra.mxu0 0.0
    %2598 = vmatprep.subr.mxu0 0.0
    %2599 = vmatpush1.msra.mxu0 0.0
    %2600 = vmatprep.subr.mxu0 0.0
    %2601 = vmatpush1.msra.mxu0 0.0
    %2602 = vmatprep.subr.mxu0 0.0
    %2603 = vmatpush1.msra.mxu0 0.0
    %2604 = vmatprep.subr.mxu0 0.0
    %2605 = vmatpush1.msra.mxu0 0.0
    %2606 = vmatprep.subr.mxu0 0.0
    %2607 = vmatpush1.msra.mxu0 0.0
    %2608 = vmatprep.subr.mxu0 0.0
    %2609 = vmatpush1.msra.mxu0 0.0
    %2610 = vmatprep.subr.mxu0 0.0
    %2611 = vmatpush1.msra.mxu0 0.0
    %2612 = vmatprep.subr.mxu0 0.0
    %2613 = vmatpush1.msra.mxu0 0.0
    %2614 = vmatprep.subr.mxu0 0.0
    %2615 = vmatpush1.msra.mxu0 0.0
    %2616 = vmatprep.subr.mxu0 0.0
    %2617 = vmatpush1.msra.mxu0 0.0
    %2618 = vmatprep.subr.mxu0 0.0
    %2619 = vmatpush1.msra.mxu0 0.0
    %2620 = vmatprep.subr.mxu0 0.0
    %2621 = vmatpush1.msra.mxu0 0.0
    %2622 = vmatprep.subr.mxu0 0.0
    %2623 = vmatpush1.msra.mxu0 0.0
    %2624 = vmatprep.subr.mxu0 0.0
    %2625 = vmatpush1.msra.mxu0 0.0
    %2626 = vmatprep.subr.mxu0 0.0
    %2627 = vmatpush1.msra.mxu0 0.0
    %2628 = vmatprep.subr.mxu0 0.0
    %2629 = vmatpush1.msra.mxu0 0.0
    %2630 = vmatprep.subr.mxu0 0.0
    %2631 = vmatpush1.msra.mxu0 0.0
    %2632 = vmatprep.subr.mxu0 0.0
    %2633 = vmatpush1.msra.mxu0 0.0
    %2634 = vmatprep.subr.mxu0 0.0
    %2635 = vmatpush1.msra.mxu0 0.0
    %2636 = vmatprep.subr.mxu0 0.0
    %2637 = vmatpush1.msra.mxu0 0.0
    %2638 = vmatprep.subr.mxu0 0.0
    %2639 = vmatpush1.msra.mxu0 0.0
    %2640 = vmatprep.subr.mxu0 0.0
    %2641 = vmatpush1.msra.mxu0 0.0
    %2642 = vmatprep.subr.mxu0 0.0
    %2643 = vmatpush1.msra.mxu0 0.0
    %2644 = vmatprep.subr.mxu0 0.0
    %2645 = vmatpush1.msra.mxu0 0.0
    %2646 = vmatprep.subr.mxu0 0.0
    %2647 = vmatpush1.msra.mxu0 0.0
    %2648 = vmatprep.mubr.f32.mxu0 0.0
    %2649 = vmatmul.mubr.f32.gmra.mrb[0].mxu0 %v2503
    %v2650 = vpop.f32.mrb[0].mxu0
    %v2651 = vadd.f32 0.0, %v2650
    %v2652 = vpop.f32.mrb[0].mxu0
    %v2653 = vadd.f32 0.0, %v2652
    %2654 = vdwg.mxu0
    %v2655 = vadd.f32 %v2473, %v2580
    %v2656 = vadd.f32 %v2474, %v2582
    %v2657 = vadd.f32 %v2475, %v2651
    %v2658 = vadd.f32 %v2476, %v2653
    %v2659 = vld [vmem:[#allocation2 + $0x4] sm:$0xff]
    %v2660 = vld [vmem:[#allocation2 + $0xc] sm:$0xff]
    %v2663 = vcombine.high %v2659, %v2659
    %v2664 = vcombine.high %v2660, %v2660
    %v2666 = vsel %vm138, %v25, 0
    %v2668 = vsel %vm69, %v2659, 0
    %v2670 = vsel %vm69, %v2663, 0
    %v2672 = vsel %vm69, %v2660, 0
    %v2674 = vsel %vm69, %v2664, 0
    %2676 = vmatprep.subr.mxu0 %v2670
    %2677 = vmatpush1.msra.mxu0 %v2668
    %2678 = vmatprep.subr.mxu0 0.0
    %2679 = vmatpush1.msra.mxu0 0.0
    %2680 = vmatprep.subr.mxu0 0.0
    %2681 = vmatpush1.msra.mxu0 0.0
    %2682 = vmatprep.subr.mxu0 0.0
    %2683 = vmatpush1.msra.mxu0 0.0
    %2684 = vmatprep.subr.mxu0 0.0
    %2685 = vmatpush1.msra.mxu0 0.0
    %2686 = vmatprep.subr.mxu0 0.0
    %2687 = vmatpush1.msra.mxu0 0.0
    %2688 = vmatprep.subr.mxu0 0.0
    %2689 = vmatpush1.msra.mxu0 0.0
    %2690 = vmatprep.subr.mxu0 0.0
    %2691 = vmatpush1.msra.mxu0 0.0
    %2692 = vmatprep.subr.mxu0 0.0
    %2693 = vmatpush1.msra.mxu0 0.0
    %2694 = vmatprep.subr.mxu0 0.0
    %2695 = vmatpush1.msra.mxu0 0.0
    %2696 = vmatprep.subr.mxu0 0.0
    %2697 = vmatpush1.msra.mxu0 0.0
    %2698 = vmatprep.subr.mxu0 0.0
    %2699 = vmatpush1.msra.mxu0 0.0
    %2700 = vmatprep.subr.mxu0 0.0
    %2701 = vmatpush1.msra.mxu0 0.0
    %2702 = vmatprep.subr.mxu0 0.0
    %2703 = vmatpush1.msra.mxu0 0.0
    %2704 = vmatprep.subr.mxu0 0.0
    %2705 = vmatpush1.msra.mxu0 0.0
    %2706 = vmatprep.subr.mxu0 0.0
    %2707 = vmatpush1.msra.mxu0 0.0
    %2708 = vmatprep.subr.mxu0 0.0
    %2709 = vmatpush1.msra.mxu0 0.0
    %2710 = vmatprep.subr.mxu0 0.0
    %2711 = vmatpush1.msra.mxu0 0.0
    %2712 = vmatprep.subr.mxu0 0.0
    %2713 = vmatpush1.msra.mxu0 0.0
    %2714 = vmatprep.subr.mxu0 0.0
    %2715 = vmatpush1.msra.mxu0 0.0
    %2716 = vmatprep.subr.mxu0 0.0
    %2717 = vmatpush1.msra.mxu0 0.0
    %2718 = vmatprep.subr.mxu0 0.0
    %2719 = vmatpush1.msra.mxu0 0.0
    %2720 = vmatprep.subr.mxu0 0.0
    %2721 = vmatpush1.msra.mxu0 0.0
    %2722 = vmatprep.subr.mxu0 0.0
    %2723 = vmatpush1.msra.mxu0 0.0
    %2724 = vmatprep.subr.mxu0 0.0
    %2725 = vmatpush1.msra.mxu0 0.0
    %2726 = vmatprep.subr.mxu0 0.0
    %2727 = vmatpush1.msra.mxu0 0.0
    %2728 = vmatprep.subr.mxu0 0.0
    %2729 = vmatpush1.msra.mxu0 0.0
    %2730 = vmatprep.subr.mxu0 0.0
    %2731 = vmatpush1.msra.mxu0 0.0
    %2732 = vmatprep.subr.mxu0 0.0
    %2733 = vmatpush1.msra.mxu0 0.0
    %2734 = vmatprep.subr.mxu0 0.0
    %2735 = vmatpush1.msra.mxu0 0.0
    %2736 = vmatprep.subr.mxu0 0.0
    %2737 = vmatpush1.msra.mxu0 0.0
    %2738 = vmatprep.subr.mxu0 0.0
    %2739 = vmatpush1.msra.mxu0 0.0
    %2740 = vmatprep.mubr.f32.mxu0 0.0
    %2741 = vmatmul.mubr.f32.gmra.mrb[0].mxu0 %v2666
    %v2742 = vpop.f32.mrb[0].mxu0
    %v2743 = vadd.f32 0.0, %v2742
    %v2744 = vpop.f32.mrb[0].mxu0
    %v2745 = vadd.f32 0.0, %v2744
    %2746 = vdwg.mxu0
    %2747 = vmatprep.subr.mxu0 %v2674
    %2748 = vmatpush1.msra.mxu0 %v2672
    %2749 = vmatprep.subr.mxu0 0.0
    %2750 = vmatpush1.msra.mxu0 0.0
    %2751 = vmatprep.subr.mxu0 0.0
    %2752 = vmatpush1.msra.mxu0 0.0
    %2753 = vmatprep.subr.mxu0 0.0
    %2754 = vmatpush1.msra.mxu0 0.0
    %2755 = vmatprep.subr.mxu0 0.0
    %2756 = vmatpush1.msra.mxu0 0.0
    %2757 = vmatprep.subr.mxu0 0.0
    %2758 = vmatpush1.msra.mxu0 0.0
    %2759 = vmatprep.subr.mxu0 0.0
    %2760 = vmatpush1.msra.mxu0 0.0
    %2761 = vmatprep.subr.mxu0 0.0
    %2762 = vmatpush1.msra.mxu0 0.0
    %2763 = vmatprep.subr.mxu0 0.0
    %2764 = vmatpush1.msra.mxu0 0.0
    %2765 = vmatprep.subr.mxu0 0.0
    %2766 = vmatpush1.msra.mxu0 0.0
    %2767 = vmatprep.subr.mxu0 0.0
    %2768 = vmatpush1.msra.mxu0 0.0
    %2769 = vmatprep.subr.mxu0 0.0
    %2770 = vmatpush1.msra.mxu0 0.0
    %2771 = vmatprep.subr.mxu0 0.0
    %2772 = vmatpush1.msra.mxu0 0.0
    %2773 = vmatprep.subr.mxu0 0.0
    %2774 = vmatpush1.msra.mxu0 0.0
    %2775 = vmatprep.subr.mxu0 0.0
    %2776 = vmatpush1.msra.mxu0 0.0
    %2777 = vmatprep.subr.mxu0 0.0
    %2778 = vmatpush1.msra.mxu0 0.0
    %2779 = vmatprep.subr.mxu0 0.0
    %2780 = vmatpush1.msra.mxu0 0.0
    %2781 = vmatprep.subr.mxu0 0.0
    %2782 = vmatpush1.msra.mxu0 0.0
    %2783 = vmatprep.subr.mxu0 0.0
    %2784 = vmatpush1.msra.mxu0 0.0
    %2785 = vmatprep.subr.mxu0 0.0
    %2786 = vmatpush1.msra.mxu0 0.0
    %2787 = vmatprep.subr.mxu0 0.0
    %2788 = vmatpush1.msra.mxu0 0.0
    %2789 = vmatprep.subr.mxu0 0.0
    %2790 = vmatpush1.msra.mxu0 0.0
    %2791 = vmatprep.subr.mxu0 0.0
    %2792 = vmatpush1.msra.mxu0 0.0
    %2793 = vmatprep.subr.mxu0 0.0
    %2794 = vmatpush1.msra.mxu0 0.0
    %2795 = vmatprep.subr.mxu0 0.0
    %2796 = vmatpush1.msra.mxu0 0.0
    %2797 = vmatprep.subr.mxu0 0.0
    %2798 = vmatpush1.msra.mxu0 0.0
    %2799 = vmatprep.subr.mxu0 0.0
    %2800 = vmatpush1.msra.mxu0 0.0
    %2801 = vmatprep.subr.mxu0 0.0
    %2802 = vmatpush1.msra.mxu0 0.0
    %2803 = vmatprep.subr.mxu0 0.0
    %2804 = vmatpush1.msra.mxu0 0.0
    %2805 = vmatprep.subr.mxu0 0.0
    %2806 = vmatpush1.msra.mxu0 0.0
    %2807 = vmatprep.subr.mxu0 0.0
    %2808 = vmatpush1.msra.mxu0 0.0
    %2809 = vmatprep.subr.mxu0 0.0
    %2810 = vmatpush1.msra.mxu0 0.0
    %2811 = vmatprep.mubr.f32.mxu0 0.0
    %2812 = vmatmul.mubr.f32.gmra.mrb[0].mxu0 %v2666
    %v2813 = vpop.f32.mrb[0].mxu0
    %v2814 = vadd.f32 0.0, %v2813
    %v2815 = vpop.f32.mrb[0].mxu0
    %v2816 = vadd.f32 0.0, %v2815
    %2817 = vdwg.mxu0
    %v2818 = vadd.f32 %v2655, %v2743
    %v2819 = vadd.f32 %v2656, %v2745
    %v2820 = vadd.f32 %v2657, %v2814
    %v2821 = vadd.f32 %v2658, %v2816
    %v2822 = vld [vmem:[#allocation2 + $0x4] sm:$0xff]
    %v2823 = vld [vmem:[#allocation2 + $0xc] sm:$0xff]
    %v2824 = vld [vmem:[#allocation2 + $0x14] sm:$0xf]
    %v2825 = vmul.f32 %v2822, %v1093
    %v2826 = vmul.f32 %v2823, %v1095
    %v2827 = vmul.f32 %v2824, %v1092
    %v2828 = vrot.slane %v25, 4
    %v2832 = vcombine.high %v2825, %v2825
    %v2833 = vcombine.high %v2826, %v2826
    %2834 = vrot.lane.b32.xlu0 %v2825, 127
    %v2835 = vpop.permute.xlu0 %2834
    %2836 = vrot.lane.b32.xlu0 %v2832, 127
    %v2837 = vpop.permute.xlu0 %2836
    %2838 = vrot.lane.b32.xlu0 %v2826, 127
    %v2839 = vpop.permute.xlu0 %2838
    %2840 = vrot.lane.b32.xlu0 %v2833, 127
    %v2841 = vpop.permute.xlu0 %2840
    %2842 = vrot.lane.b32.xlu0 %v2827, 127
    %v2843 = vpop.permute.xlu0 %2842
    %v2844 = vsel %vm712, %v2835, %v2837
    %v2845 = vsel %vm712, %v2837, %v2839
    %v2846 = vsel %vm712, %v2839, %v2841
    %v2847 = vsel %vm712, %v2841, %v2843
    %v2848 = vsel %vm138, %v2828, 0
    %v2850 = vsel %vm69, %v2844, 0
    %v2852 = vsel %vm69, %v2845, 0
    %v2854 = vsel %vm69, %v2846, 0
    %v2856 = vsel %vm69, %v2847, 0
    %2858 = vmatprep.subr.mxu0 %v2852
    %2859 = vmatpush1.msra.mxu0 %v2850
    %2860 = vmatprep.subr.mxu0 0.0
    %2861 = vmatpush1.msra.mxu0 0.0
    %2862 = vmatprep.subr.mxu0 0.0
    %2863 = vmatpush1.msra.mxu0 0.0
    %2864 = vmatprep.subr.mxu0 0.0
    %2865 = vmatpush1.msra.mxu0 0.0
    %2866 = vmatprep.subr.mxu0 0.0
    %2867 = vmatpush1.msra.mxu0 0.0
    %2868 = vmatprep.subr.mxu0 0.0
    %2869 = vmatpush1.msra.mxu0 0.0
    %2870 = vmatprep.subr.mxu0 0.0
    %2871 = vmatpush1.msra.mxu0 0.0
    %2872 = vmatprep.subr.mxu0 0.0
    %2873 = vmatpush1.msra.mxu0 0.0
    %2874 = vmatprep.subr.mxu0 0.0
    %2875 = vmatpush1.msra.mxu0 0.0
    %2876 = vmatprep.subr.mxu0 0.0
    %2877 = vmatpush1.msra.mxu0 0.0
    %2878 = vmatprep.subr.mxu0 0.0
    %2879 = vmatpush1.msra.mxu0 0.0
    %2880 = vmatprep.subr.mxu0 0.0
    %2881 = vmatpush1.msra.mxu0 0.0
    %2882 = vmatprep.subr.mxu0 0.0
    %2883 = vmatpush1.msra.mxu0 0.0
    %2884 = vmatprep.subr.mxu0 0.0
    %2885 = vmatpush1.msra.mxu0 0.0
    %2886 = vmatprep.subr.mxu0 0.0
    %2887 = vmatpush1.msra.mxu0 0.0
    %2888 = vmatprep.subr.mxu0 0.0
    %2889 = vmatpush1.msra.mxu0 0.0
    %2890 = vmatprep.subr.mxu0 0.0
    %2891 = vmatpush1.msra.mxu0 0.0
    %2892 = vmatprep.subr.mxu0 0.0
    %2893 = vmatpush1.msra.mxu0 0.0
    %2894 = vmatprep.subr.mxu0 0.0
    %2895 = vmatpush1.msra.mxu0 0.0
    %2896 = vmatprep.subr.mxu0 0.0
    %2897 = vmatpush1.msra.mxu0 0.0
    %2898 = vmatprep.subr.mxu0 0.0
    %2899 = vmatpush1.msra.mxu0 0.0
    %2900 = vmatprep.subr.mxu0 0.0
    %2901 = vmatpush1.msra.mxu0 0.0
    %2902 = vmatprep.subr.mxu0 0.0
    %2903 = vmatpush1.msra.mxu0 0.0
    %2904 = vmatprep.subr.mxu0 0.0
    %2905 = vmatpush1.msra.mxu0 0.0
    %2906 = vmatprep.subr.mxu0 0.0
    %2907 = vmatpush1.msra.mxu0 0.0
    %2908 = vmatprep.subr.mxu0 0.0
    %2909 = vmatpush1.msra.mxu0 0.0
    %2910 = vmatprep.subr.mxu0 0.0
    %2911 = vmatpush1.msra.mxu0 0.0
    %2912 = vmatprep.subr.mxu0 0.0
    %2913 = vmatpush1.msra.mxu0 0.0
    %2914 = vmatprep.subr.mxu0 0.0
    %2915 = vmatpush1.msra.mxu0 0.0
    %2916 = vmatprep.subr.mxu0 0.0
    %2917 = vmatpush1.msra.mxu0 0.0
    %2918 = vmatprep.subr.mxu0 0.0
    %2919 = vmatpush1.msra.mxu0 0.0
    %2920 = vmatprep.subr.mxu0 0.0
    %2921 = vmatpush1.msra.mxu0 0.0
    %2922 = vmatprep.mubr.f32.mxu0 0.0
    %2923 = vmatmul.mubr.f32.gmra.mrb[0].mxu0 %v2848
    %v2924 = vpop.f32.mrb[0].mxu0
    %v2925 = vadd.f32 0.0, %v2924
    %v2926 = vpop.f32.mrb[0].mxu0
    %v2927 = vadd.f32 0.0, %v2926
    %2928 = vdwg.mxu0
    %2929 = vmatprep.subr.mxu0 %v2856
    %2930 = vmatpush1.msra.mxu0 %v2854
    %2931 = vmatprep.subr.mxu0 0.0
    %2932 = vmatpush1.msra.mxu0 0.0
    %2933 = vmatprep.subr.mxu0 0.0
    %2934 = vmatpush1.msra.mxu0 0.0
    %2935 = vmatprep.subr.mxu0 0.0
    %2936 = vmatpush1.msra.mxu0 0.0
    %2937 = vmatprep.subr.mxu0 0.0
    %2938 = vmatpush1.msra.mxu0 0.0
    %2939 = vmatprep.subr.mxu0 0.0
    %2940 = vmatpush1.msra.mxu0 0.0
    %2941 = vmatprep.subr.mxu0 0.0
    %2942 = vmatpush1.msra.mxu0 0.0
    %2943 = vmatprep.subr.mxu0 0.0
    %2944 = vmatpush1.msra.mxu0 0.0
    %2945 = vmatprep.subr.mxu0 0.0
    %2946 = vmatpush1.msra.mxu0 0.0
    %2947 = vmatprep.subr.mxu0 0.0
    %2948 = vmatpush1.msra.mxu0 0.0
    %2949 = vmatprep.subr.mxu0 0.0
    %2950 = vmatpush1.msra.mxu0 0.0
    %2951 = vmatprep.subr.mxu0 0.0
    %2952 = vmatpush1.msra.mxu0 0.0
    %2953 = vmatprep.subr.mxu0 0.0
    %2954 = vmatpush1.msra.mxu0 0.0
    %2955 = vmatprep.subr.mxu0 0.0
    %2956 = vmatpush1.msra.mxu0 0.0
    %2957 = vmatprep.subr.mxu0 0.0
    %2958 = vmatpush1.msra.mxu0 0.0
    %2959 = vmatprep.subr.mxu0 0.0
    %2960 = vmatpush1.msra.mxu0 0.0
    %2961 = vmatprep.subr.mxu0 0.0
    %2962 = vmatpush1.msra.mxu0 0.0
    %2963 = vmatprep.subr.mxu0 0.0
    %2964 = vmatpush1.msra.mxu0 0.0
    %2965 = vmatprep.subr.mxu0 0.0
    %2966 = vmatpush1.msra.mxu0 0.0
    %2967 = vmatprep.subr.mxu0 0.0
    %2968 = vmatpush1.msra.mxu0 0.0
    %2969 = vmatprep.subr.mxu0 0.0
    %2970 = vmatpush1.msra.mxu0 0.0
    %2971 = vmatprep.subr.mxu0 0.0
    %2972 = vmatpush1.msra.mxu0 0.0
    %2973 = vmatprep.subr.mxu0 0.0
    %2974 = vmatpush1.msra.mxu0 0.0
    %2975 = vmatprep.subr.mxu0 0.0
    %2976 = vmatpush1.msra.mxu0 0.0
    %2977 = vmatprep.subr.mxu0 0.0
    %2978 = vmatpush1.msra.mxu0 0.0
    %2979 = vmatprep.subr.mxu0 0.0
    %2980 = vmatpush1.msra.mxu0 0.0
    %2981 = vmatprep.subr.mxu0 0.0
    %2982 = vmatpush1.msra.mxu0 0.0
    %2983 = vmatprep.subr.mxu0 0.0
    %2984 = vmatpush1.msra.mxu0 0.0
    %2985 = vmatprep.subr.mxu0 0.0
    %2986 = vmatpush1.msra.mxu0 0.0
    %2987 = vmatprep.subr.mxu0 0.0
    %2988 = vmatpush1.msra.mxu0 0.0
    %2989 = vmatprep.subr.mxu0 0.0
    %2990 = vmatpush1.msra.mxu0 0.0
    %2991 = vmatprep.subr.mxu0 0.0
    %2992 = vmatpush1.msra.mxu0 0.0
    %2993 = vmatprep.mubr.f32.mxu0 0.0
    %2994 = vmatmul.mubr.f32.gmra.mrb[0].mxu0 %v2848
    %v2995 = vpop.f32.mrb[0].mxu0
    %v2996 = vadd.f32 0.0, %v2995
    %v2997 = vpop.f32.mrb[0].mxu0
    %v2998 = vadd.f32 0.0, %v2997
    %2999 = vdwg.mxu0
    %v3000 = vadd.f32 %v2818, %v2925
    %v3001 = vadd.f32 %v2819, %v2927
    %v3002 = vadd.f32 %v2820, %v2996
    %v3003 = vadd.f32 %v2821, %v2998
    %v3004 = vld [vmem:[#allocation2 + $0x4] sm:$0xff]
    %v3005 = vld [vmem:[#allocation2 + $0xc] sm:$0xff]
    %v3006 = vld [vmem:[#allocation2 + $0x14] sm:$0xf]
    %v3007 = vmul.f32 %v3004, %v1309
    %v3008 = vmul.f32 %v3005, %v1311
    %v3009 = vmul.f32 %v3006, %v1308
    %v3013 = vcombine.high %v3007, %v3007
    %v3014 = vcombine.high %v3008, %v3008
    %3015 = vrot.lane.b32.xlu0 %v3007, 113
    %v3016 = vpop.permute.xlu0 %3015
    %3017 = vrot.lane.b32.xlu0 %v3013, 113
    %v3018 = vpop.permute.xlu0 %3017
    %3019 = vrot.lane.b32.xlu0 %v3008, 113
    %v3020 = vpop.permute.xlu0 %3019
    %3021 = vrot.lane.b32.xlu0 %v3014, 113
    %v3022 = vpop.permute.xlu0 %3021
    %3023 = vrot.lane.b32.xlu0 %v3009, 113
    %v3024 = vpop.permute.xlu0 %3023
    %v3025 = vsel %vm494, %v3016, %v3018
    %v3026 = vsel %vm494, %v3018, %v3020
    %v3027 = vsel %vm494, %v3020, %v3022
    %v3028 = vsel %vm494, %v3022, %v3024
    %v3030 = vsel %vm138, %v26, 0
    %v3032 = vsel %vm69, %v3025, 0
    %v3034 = vsel %vm69, %v3026, 0
    %v3036 = vsel %vm69, %v3027, 0
    %v3038 = vsel %vm69, %v3028, 0
    %3040 = vmatprep.subr.mxu0 %v3034
    %3041 = vmatpush1.msra.mxu0 %v3032
    %3042 = vmatprep.subr.mxu0 0.0
    %3043 = vmatpush1.msra.mxu0 0.0
    %3044 = vmatprep.subr.mxu0 0.0
    %3045 = vmatpush1.msra.mxu0 0.0
    %3046 = vmatprep.subr.mxu0 0.0
    %3047 = vmatpush1.msra.mxu0 0.0
    %3048 = vmatprep.subr.mxu0 0.0
    %3049 = vmatpush1.msra.mxu0 0.0
    %3050 = vmatprep.subr.mxu0 0.0
    %3051 = vmatpush1.msra.mxu0 0.0
    %3052 = vmatprep.subr.mxu0 0.0
    %3053 = vmatpush1.msra.mxu0 0.0
    %3054 = vmatprep.subr.mxu0 0.0
    %3055 = vmatpush1.msra.mxu0 0.0
    %3056 = vmatprep.subr.mxu0 0.0
    %3057 = vmatpush1.msra.mxu0 0.0
    %3058 = vmatprep.subr.mxu0 0.0
    %3059 = vmatpush1.msra.mxu0 0.0
    %3060 = vmatprep.subr.mxu0 0.0
    %3061 = vmatpush1.msra.mxu0 0.0
    %3062 = vmatprep.subr.mxu0 0.0
    %3063 = vmatpush1.msra.mxu0 0.0
    %3064 = vmatprep.subr.mxu0 0.0
    %3065 = vmatpush1.msra.mxu0 0.0
    %3066 = vmatprep.subr.mxu0 0.0
    %3067 = vmatpush1.msra.mxu0 0.0
    %3068 = vmatprep.subr.mxu0 0.0
    %3069 = vmatpush1.msra.mxu0 0.0
    %3070 = vmatprep.subr.mxu0 0.0
    %3071 = vmatpush1.msra.mxu0 0.0
    %3072 = vmatprep.subr.mxu0 0.0
    %3073 = vmatpush1.msra.mxu0 0.0
    %3074 = vmatprep.subr.mxu0 0.0
    %3075 = vmatpush1.msra.mxu0 0.0
    %3076 = vmatprep.subr.mxu0 0.0
    %3077 = vmatpush1.msra.mxu0 0.0
    %3078 = vmatprep.subr.mxu0 0.0
    %3079 = vmatpush1.msra.mxu0 0.0
    %3080 = vmatprep.subr.mxu0 0.0
    %3081 = vmatpush1.msra.mxu0 0.0
    %3082 = vmatprep.subr.mxu0 0.0
    %3083 = vmatpush1.msra.mxu0 0.0
    %3084 = vmatprep.subr.mxu0 0.0
    %3085 = vmatpush1.msra.mxu0 0.0
    %3086 = vmatprep.subr.mxu0 0.0
    %3087 = vmatpush1.msra.mxu0 0.0
    %3088 = vmatprep.subr.mxu0 0.0
    %3089 = vmatpush1.msra.mxu0 0.0
    %3090 = vmatprep.subr.mxu0 0.0
    %3091 = vmatpush1.msra.mxu0 0.0
    %3092 = vmatprep.subr.mxu0 0.0
    %3093 = vmatpush1.msra.mxu0 0.0
    %3094 = vmatprep.subr.mxu0 0.0
    %3095 = vmatpush1.msra.mxu0 0.0
    %3096 = vmatprep.subr.mxu0 0.0
    %3097 = vmatpush1.msra.mxu0 0.0
    %3098 = vmatprep.subr.mxu0 0.0
    %3099 = vmatpush1.msra.mxu0 0.0
    %3100 = vmatprep.subr.mxu0 0.0
    %3101 = vmatpush1.msra.mxu0 0.0
    %3102 = vmatprep.subr.mxu0 0.0
    %3103 = vmatpush1.msra.mxu0 0.0
    %3104 = vmatprep.mubr.f32.mxu0 0.0
    %3105 = vmatmul.mubr.f32.gmra.mrb[0].mxu0 %v3030
    %v3106 = vpop.f32.mrb[0].mxu0
    %v3107 = vadd.f32 0.0, %v3106
    %v3108 = vpop.f32.mrb[0].mxu0
    %v3109 = vadd.f32 0.0, %v3108
    %3110 = vdwg.mxu0
    %3111 = vmatprep.subr.mxu0 %v3038
    %3112 = vmatpush1.msra.mxu0 %v3036
    %3113 = vmatprep.subr.mxu0 0.0
    %3114 = vmatpush1.msra.mxu0 0.0
    %3115 = vmatprep.subr.mxu0 0.0
    %3116 = vmatpush1.msra.mxu0 0.0
    %3117 = vmatprep.subr.mxu0 0.0
    %3118 = vmatpush1.msra.mxu0 0.0
    %3119 = vmatprep.subr.mxu0 0.0
    %3120 = vmatpush1.msra.mxu0 0.0
    %3121 = vmatprep.subr.mxu0 0.0
    %3122 = vmatpush1.msra.mxu0 0.0
    %3123 = vmatprep.subr.mxu0 0.0
    %3124 = vmatpush1.msra.mxu0 0.0
    %3125 = vmatprep.subr.mxu0 0.0
    %3126 = vmatpush1.msra.mxu0 0.0
    %3127 = vmatprep.subr.mxu0 0.0
    %3128 = vmatpush1.msra.mxu0 0.0
    %3129 = vmatprep.subr.mxu0 0.0
    %3130 = vmatpush1.msra.mxu0 0.0
    %3131 = vmatprep.subr.mxu0 0.0
    %3132 = vmatpush1.msra.mxu0 0.0
    %3133 = vmatprep.subr.mxu0 0.0
    %3134 = vmatpush1.msra.mxu0 0.0
    %3135 = vmatprep.subr.mxu0 0.0
    %3136 = vmatpush1.msra.mxu0 0.0
    %3137 = vmatprep.subr.mxu0 0.0
    %3138 = vmatpush1.msra.mxu0 0.0
    %3139 = vmatprep.subr.mxu0 0.0
    %3140 = vmatpush1.msra.mxu0 0.0
    %3141 = vmatprep.subr.mxu0 0.0
    %3142 = vmatpush1.msra.mxu0 0.0
    %3143 = vmatprep.subr.mxu0 0.0
    %3144 = vmatpush1.msra.mxu0 0.0
    %3145 = vmatprep.subr.mxu0 0.0
    %3146 = vmatpush1.msra.mxu0 0.0
    %3147 = vmatprep.subr.mxu0 0.0
    %3148 = vmatpush1.msra.mxu0 0.0
    %3149 = vmatprep.subr.mxu0 0.0
    %3150 = vmatpush1.msra.mxu0 0.0
    %3151 = vmatprep.subr.mxu0 0.0
    %3152 = vmatpush1.msra.mxu0 0.0
    %3153 = vmatprep.subr.mxu0 0.0
    %3154 = vmatpush1.msra.mxu0 0.0
    %3155 = vmatprep.subr.mxu0 0.0
    %3156 = vmatpush1.msra.mxu0 0.0
    %3157 = vmatprep.subr.mxu0 0.0
    %3158 = vmatpush1.msra.mxu0 0.0
    %3159 = vmatprep.subr.mxu0 0.0
    %3160 = vmatpush1.msra.mxu0 0.0
    %3161 = vmatprep.subr.mxu0 0.0
    %3162 = vmatpush1.msra.mxu0 0.0
    %3163 = vmatprep.subr.mxu0 0.0
    %3164 = vmatpush1.msra.mxu0 0.0
    %3165 = vmatprep.subr.mxu0 0.0
    %3166 = vmatpush1.msra.mxu0 0.0
    %3167 = vmatprep.subr.mxu0 0.0
    %3168 = vmatpush1.msra.mxu0 0.0
    %3169 = vmatprep.subr.mxu0 0.0
    %3170 = vmatpush1.msra.mxu0 0.0
    %3171 = vmatprep.subr.mxu0 0.0
    %3172 = vmatpush1.msra.mxu0 0.0
    %3173 = vmatprep.subr.mxu0 0.0
    %3174 = vmatpush1.msra.mxu0 0.0
    %3175 = vmatprep.mubr.f32.mxu0 0.0
    %3176 = vmatmul.mubr.f32.gmra.mrb[0].mxu0 %v3030
    %v3177 = vpop.f32.mrb[0].mxu0
    %v3178 = vadd.f32 0.0, %v3177
    %v3179 = vpop.f32.mrb[0].mxu0
    %v3180 = vadd.f32 0.0, %v3179
    %3181 = vdwg.mxu0
    %v3182 = vadd.f32 %v3000, %v3107
    %v3183 = vadd.f32 %v3001, %v3109
    %v3184 = vadd.f32 %v3002, %v3178
    %v3185 = vadd.f32 %v3003, %v3180
    %v3186 = vld [vmem:[#allocation2 + $0x4] sm:$0xff]
    %v3187 = vld [vmem:[#allocation2 + $0xc] sm:$0xff]
    %v3188 = vld [vmem:[#allocation2 + $0x14] sm:$0xf]
    %v3189 = vmul.f32 %v3186, %v1525
    %v3190 = vmul.f32 %v3187, %v1527
    %v3191 = vmul.f32 %v3188, %v1524
    %v3192 = vrot.slane %v26, 4
    %v3196 = vcombine.high %v3189, %v3189
    %v3197 = vcombine.high %v3190, %v3190
    %3198 = vrot.lane.b32.xlu0 %v3189, 112
    %v3199 = vpop.permute.xlu0 %3198
    %3200 = vrot.lane.b32.xlu0 %v3196, 112
    %v3201 = vpop.permute.xlu0 %3200
    %3202 = vrot.lane.b32.xlu0 %v3190, 112
    %v3203 = vpop.permute.xlu0 %3202
    %3204 = vrot.lane.b32.xlu0 %v3197, 112
    %v3205 = vpop.permute.xlu0 %3204
    %3206 = vrot.lane.b32.xlu0 %v3191, 112
    %v3207 = vpop.permute.xlu0 %3206
    %v3208 = vsel %vm106, %v3199, %v3201
    %v3209 = vsel %vm106, %v3201, %v3203
    %v3210 = vsel %vm106, %v3203, %v3205
    %v3211 = vsel %vm106, %v3205, %v3207
    %v3212 = vsel %vm138, %v3192, 0
    %v3214 = vsel %vm69, %v3208, 0
    %v3216 = vsel %vm69, %v3209, 0
    %v3218 = vsel %vm69, %v3210, 0
    %v3220 = vsel %vm69, %v3211, 0
    %3222 = vmatprep.subr.mxu0 %v3216
    %3223 = vmatpush1.msra.mxu0 %v3214
    %3224 = vmatprep.subr.mxu0 0.0
    %3225 = vmatpush1.msra.mxu0 0.0
    %3226 = vmatprep.subr.mxu0 0.0
    %3227 = vmatpush1.msra.mxu0 0.0
    %3228 = vmatprep.subr.mxu0 0.0
    %3229 = vmatpush1.msra.mxu0 0.0
    %3230 = vmatprep.subr.mxu0 0.0
    %3231 = vmatpush1.msra.mxu0 0.0
    %3232 = vmatprep.subr.mxu0 0.0
    %3233 = vmatpush1.msra.mxu0 0.0
    %3234 = vmatprep.subr.mxu0 0.0
    %3235 = vmatpush1.msra.mxu0 0.0
    %3236 = vmatprep.subr.mxu0 0.0
    %3237 = vmatpush1.msra.mxu0 0.0
    %3238 = vmatprep.subr.mxu0 0.0
    %3239 = vmatpush1.msra.mxu0 0.0
    %3240 = vmatprep.subr.mxu0 0.0
    %3241 = vmatpush1.msra.mxu0 0.0
    %3242 = vmatprep.subr.mxu0 0.0
    %3243 = vmatpush1.msra.mxu0 0.0
    %3244 = vmatprep.subr.mxu0 0.0
    %3245 = vmatpush1.msra.mxu0 0.0
    %3246 = vmatprep.subr.mxu0 0.0
    %3247 = vmatpush1.msra.mxu0 0.0
    %3248 = vmatprep.subr.mxu0 0.0
    %3249 = vmatpush1.msra.mxu0 0.0
    %3250 = vmatprep.subr.mxu0 0.0
    %3251 = vmatpush1.msra.mxu0 0.0
    %3252 = vmatprep.subr.mxu0 0.0
    %3253 = vmatpush1.msra.mxu0 0.0
    %3254 = vmatprep.subr.mxu0 0.0
    %3255 = vmatpush1.msra.mxu0 0.0
    %3256 = vmatprep.subr.mxu0 0.0
    %3257 = vmatpush1.msra.mxu0 0.0
    %3258 = vmatprep.subr.mxu0 0.0
    %3259 = vmatpush1.msra.mxu0 0.0
    %3260 = vmatprep.subr.mxu0 0.0
    %3261 = vmatpush1.msra.mxu0 0.0
    %3262 = vmatprep.subr.mxu0 0.0
    %3263 = vmatpush1.msra.mxu0 0.0
    %3264 = vmatprep.subr.mxu0 0.0
    %3265 = vmatpush1.msra.mxu0 0.0
    %3266 = vmatprep.subr.mxu0 0.0
    %3267 = vmatpush1.msra.mxu0 0.0
    %3268 = vmatprep.subr.mxu0 0.0
    %3269 = vmatpush1.msra.mxu0 0.0
    %3270 = vmatprep.subr.mxu0 0.0
    %3271 = vmatpush1.msra.mxu0 0.0
    %3272 = vmatprep.subr.mxu0 0.0
    %3273 = vmatpush1.msra.mxu0 0.0
    %3274 = vmatprep.subr.mxu0 0.0
    %3275 = vmatpush1.msra.mxu0 0.0
    %3276 = vmatprep.subr.mxu0 0.0
    %3277 = vmatpush1.msra.mxu0 0.0
    %3278 = vmatprep.subr.mxu0 0.0
    %3279 = vmatpush1.msra.mxu0 0.0
    %3280 = vmatprep.subr.mxu0 0.0
    %3281 = vmatpush1.msra.mxu0 0.0
    %3282 = vmatprep.subr.mxu0 0.0
    %3283 = vmatpush1.msra.mxu0 0.0
    %3284 = vmatprep.subr.mxu0 0.0
    %3285 = vmatpush1.msra.mxu0 0.0
    %3286 = vmatprep.mubr.f32.mxu0 0.0
    %3287 = vmatmul.mubr.f32.gmra.mrb[0].mxu0 %v3212
    %v3288 = vpop.f32.mrb[0].mxu0
    %v3289 = vadd.f32 0.0, %v3288
    %v3290 = vpop.f32.mrb[0].mxu0
    %v3291 = vadd.f32 0.0, %v3290
    %3292 = vdwg.mxu0
    %3293 = vmatprep.subr.mxu0 %v3220
    %3294 = vmatpush1.msra.mxu0 %v3218
    %3295 = vmatprep.subr.mxu0 0.0
    %3296 = vmatpush1.msra.mxu0 0.0
    %3297 = vmatprep.subr.mxu0 0.0
    %3298 = vmatpush1.msra.mxu0 0.0
    %3299 = vmatprep.subr.mxu0 0.0
    %3300 = vmatpush1.msra.mxu0 0.0
    %3301 = vmatprep.subr.mxu0 0.0
    %3302 = vmatpush1.msra.mxu0 0.0
    %3303 = vmatprep.subr.mxu0 0.0
    %3304 = vmatpush1.msra.mxu0 0.0
    %3305 = vmatprep.subr.mxu0 0.0
    %3306 = vmatpush1.msra.mxu0 0.0
    %3307 = vmatprep.subr.mxu0 0.0
    %3308 = vmatpush1.msra.mxu0 0.0
    %3309 = vmatprep.subr.mxu0 0.0
    %3310 = vmatpush1.msra.mxu0 0.0
    %3311 = vmatprep.subr.mxu0 0.0
    %3312 = vmatpush1.msra.mxu0 0.0
    %3313 = vmatprep.subr.mxu0 0.0
    %3314 = vmatpush1.msra.mxu0 0.0
    %3315 = vmatprep.subr.mxu0 0.0
    %3316 = vmatpush1.msra.mxu0 0.0
    %3317 = vmatprep.subr.mxu0 0.0
    %3318 = vmatpush1.msra.mxu0 0.0
    %3319 = vmatprep.subr.mxu0 0.0
    %3320 = vmatpush1.msra.mxu0 0.0
    %3321 = vmatprep.subr.mxu0 0.0
    %3322 = vmatpush1.msra.mxu0 0.0
    %3323 = vmatprep.subr.mxu0 0.0
    %3324 = vmatpush1.msra.mxu0 0.0
    %3325 = vmatprep.subr.mxu0 0.0
    %3326 = vmatpush1.msra.mxu0 0.0
    %3327 = vmatprep.subr.mxu0 0.0
    %3328 = vmatpush1.msra.mxu0 0.0
    %3329 = vmatprep.subr.mxu0 0.0
    %3330 = vmatpush1.msra.mxu0 0.0
    %3331 = vmatprep.subr.mxu0 0.0
    %3332 = vmatpush1.msra.mxu0 0.0
    %3333 = vmatprep.subr.mxu0 0.0
    %3334 = vmatpush1.msra.mxu0 0.0
    %3335 = vmatprep.subr.mxu0 0.0
    %3336 = vmatpush1.msra.mxu0 0.0
    %3337 = vmatprep.subr.mxu0 0.0
    %3338 = vmatpush1.msra.mxu0 0.0
    %3339 = vmatprep.subr.mxu0 0.0
    %3340 = vmatpush1.msra.mxu0 0.0
    %3341 = vmatprep.subr.mxu0 0.0
    %3342 = vmatpush1.msra.mxu0 0.0
    %3343 = vmatprep.subr.mxu0 0.0
    %3344 = vmatpush1.msra.mxu0 0.0
    %3345 = vmatprep.subr.mxu0 0.0
    %3346 = vmatpush1.msra.mxu0 0.0
    %3347 = vmatprep.subr.mxu0 0.0
    %3348 = vmatpush1.msra.mxu0 0.0
    %3349 = vmatprep.subr.mxu0 0.0
    %3350 = vmatpush1.msra.mxu0 0.0
    %3351 = vmatprep.subr.mxu0 0.0
    %3352 = vmatpush1.msra.mxu0 0.0
    %3353 = vmatprep.subr.mxu0 0.0
    %3354 = vmatpush1.msra.mxu0 0.0
    %3355 = vmatprep.subr.mxu0 0.0
    %3356 = vmatpush1.msra.mxu0 0.0
    %3357 = vmatprep.mubr.f32.mxu0 0.0
    %3358 = vmatmul.mubr.f32.gmra.mrb[0].mxu0 %v3212
    %v3359 = vpop.f32.mrb[0].mxu0
    %v3360 = vadd.f32 0.0, %v3359
    %v3361 = vpop.f32.mrb[0].mxu0
    %v3362 = vadd.f32 0.0, %v3361
    %3363 = vdwg.mxu0
    %v3364 = vadd.f32 %v3182, %v3289
    %v3365 = vadd.f32 %v3183, %v3291
    %v3366 = vadd.f32 %v3184, %v3360
    %v3367 = vadd.f32 %v3185, %v3362
    %v3368 = vld [vmem:[#allocation2 + $0x4] sm:$0xff]
    %v3369 = vld [vmem:[#allocation2 + $0xc] sm:$0xff]
    %v3370 = vld [vmem:[#allocation2 + $0x14] sm:$0xf]
    %v3371 = vmul.f32 %v3368, %v1741
    %v3372 = vmul.f32 %v3369, %v1743
    %v3373 = vmul.f32 %v3370, %v1740
    %v3377 = vcombine.high %v3371, %v3371
    %v3378 = vcombine.high %v3372, %v3372
    %3379 = vrot.lane.b32.xlu0 %v3371, 111
    %v3380 = vpop.permute.xlu0 %3379
    %3381 = vrot.lane.b32.xlu0 %v3377, 111
    %v3382 = vpop.permute.xlu0 %3381
    %3383 = vrot.lane.b32.xlu0 %v3372, 111
    %v3384 = vpop.permute.xlu0 %3383
    %3385 = vrot.lane.b32.xlu0 %v3378, 111
    %v3386 = vpop.permute.xlu0 %3385
    %3387 = vrot.lane.b32.xlu0 %v3373, 111
    %v3388 = vpop.permute.xlu0 %3387
    %v3389 = vsel %vm67, %v3380, %v3382
    %v3390 = vsel %vm67, %v3382, %v3384
    %v3391 = vsel %vm67, %v3384, %v3386
    %v3392 = vsel %vm67, %v3386, %v3388
    %v3394 = vsel %vm138, %v27, 0
    %v3396 = vsel %vm69, %v3389, 0
    %v3398 = vsel %vm69, %v3390, 0
    %v3400 = vsel %vm69, %v3391, 0
    %v3402 = vsel %vm69, %v3392, 0
    %3404 = vmatprep.subr.mxu0 %v3398
    %3405 = vmatpush1.msra.mxu0 %v3396
    %3406 = vmatprep.subr.mxu0 0.0
    %3407 = vmatpush1.msra.mxu0 0.0
    %3408 = vmatprep.subr.mxu0 0.0
    %3409 = vmatpush1.msra.mxu0 0.0
    %3410 = vmatprep.subr.mxu0 0.0
    %3411 = vmatpush1.msra.mxu0 0.0
    %3412 = vmatprep.subr.mxu0 0.0
    %3413 = vmatpush1.msra.mxu0 0.0
    %3414 = vmatprep.subr.mxu0 0.0
    %3415 = vmatpush1.msra.mxu0 0.0
    %3416 = vmatprep.subr.mxu0 0.0
    %3417 = vmatpush1.msra.mxu0 0.0
    %3418 = vmatprep.subr.mxu0 0.0
    %3419 = vmatpush1.msra.mxu0 0.0
    %3420 = vmatprep.subr.mxu0 0.0
    %3421 = vmatpush1.msra.mxu0 0.0
    %3422 = vmatprep.subr.mxu0 0.0
    %3423 = vmatpush1.msra.mxu0 0.0
    %3424 = vmatprep.subr.mxu0 0.0
    %3425 = vmatpush1.msra.mxu0 0.0
    %3426 = vmatprep.subr.mxu0 0.0
    %3427 = vmatpush1.msra.mxu0 0.0
    %3428 = vmatprep.subr.mxu0 0.0
    %3429 = vmatpush1.msra.mxu0 0.0
    %3430 = vmatprep.subr.mxu0 0.0
    %3431 = vmatpush1.msra.mxu0 0.0
    %3432 = vmatprep.subr.mxu0 0.0
    %3433 = vmatpush1.msra.mxu0 0.0
    %3434 = vmatprep.subr.mxu0 0.0
    %3435 = vmatpush1.msra.mxu0 0.0
    %3436 = vmatprep.subr.mxu0 0.0
    %3437 = vmatpush1.msra.mxu0 0.0
    %3438 = vmatprep.subr.mxu0 0.0
    %3439 = vmatpush1.msra.mxu0 0.0
    %3440 = vmatprep.subr.mxu0 0.0
    %3441 = vmatpush1.msra.mxu0 0.0
    %3442 = vmatprep.subr.mxu0 0.0
    %3443 = vmatpush1.msra.mxu0 0.0
    %3444 = vmatprep.subr.mxu0 0.0
    %3445 = vmatpush1.msra.mxu0 0.0
    %3446 = vmatprep.subr.mxu0 0.0
    %3447 = vmatpush1.msra.mxu0 0.0
    %3448 = vmatprep.subr.mxu0 0.0
    %3449 = vmatpush1.msra.mxu0 0.0
    %3450 = vmatprep.subr.mxu0 0.0
    %3451 = vmatpush1.msra.mxu0 0.0
    %3452 = vmatprep.subr.mxu0 0.0
    %3453 = vmatpush1.msra.mxu0 0.0
    %3454 = vmatprep.subr.mxu0 0.0
    %3455 = vmatpush1.msra.mxu0 0.0
    %3456 = vmatprep.subr.mxu0 0.0
    %3457 = vmatpush1.msra.mxu0 0.0
    %3458 = vmatprep.subr.mxu0 0.0
    %3459 = vmatpush1.msra.mxu0 0.0
    %3460 = vmatprep.subr.mxu0 0.0
    %3461 = vmatpush1.msra.mxu0 0.0
    %3462 = vmatprep.subr.mxu0 0.0
    %3463 = vmatpush1.msra.mxu0 0.0
    %3464 = vmatprep.subr.mxu0 0.0
    %3465 = vmatpush1.msra.mxu0 0.0
    %3466 = vmatprep.subr.mxu0 0.0
    %3467 = vmatpush1.msra.mxu0 0.0
    %3468 = vmatprep.mubr.f32.mxu0 0.0
    %3469 = vmatmul.mubr.f32.gmra.mrb[0].mxu0 %v3394
    %v3470 = vpop.f32.mrb[0].mxu0
    %v3471 = vadd.f32 0.0, %v3470
    %v3472 = vpop.f32.mrb[0].mxu0
    %v3473 = vadd.f32 0.0, %v3472
    %3474 = vdwg.mxu0
    %3475 = vmatprep.subr.mxu0 %v3402
    %3476 = vmatpush1.msra.mxu0 %v3400
    %3477 = vmatprep.subr.mxu0 0.0
    %3478 = vmatpush1.msra.mxu0 0.0
    %3479 = vmatprep.subr.mxu0 0.0
    %3480 = vmatpush1.msra.mxu0 0.0
    %3481 = vmatprep.subr.mxu0 0.0
    %3482 = vmatpush1.msra.mxu0 0.0
    %3483 = vmatprep.subr.mxu0 0.0
    %3484 = vmatpush1.msra.mxu0 0.0
    %3485 = vmatprep.subr.mxu0 0.0
    %3486 = vmatpush1.msra.mxu0 0.0
    %3487 = vmatprep.subr.mxu0 0.0
    %3488 = vmatpush1.msra.mxu0 0.0
    %3489 = vmatprep.subr.mxu0 0.0
    %3490 = vmatpush1.msra.mxu0 0.0
    %3491 = vmatprep.subr.mxu0 0.0
    %3492 = vmatpush1.msra.mxu0 0.0
    %3493 = vmatprep.subr.mxu0 0.0
    %3494 = vmatpush1.msra.mxu0 0.0
    %3495 = vmatprep.subr.mxu0 0.0
    %3496 = vmatpush1.msra.mxu0 0.0
    %3497 = vmatprep.subr.mxu0 0.0
    %3498 = vmatpush1.msra.mxu0 0.0
    %3499 = vmatprep.subr.mxu0 0.0
    %3500 = vmatpush1.msra.mxu0 0.0
    %3501 = vmatprep.subr.mxu0 0.0
    %3502 = vmatpush1.msra.mxu0 0.0
    %3503 = vmatprep.subr.mxu0 0.0
    %3504 = vmatpush1.msra.mxu0 0.0
    %3505 = vmatprep.subr.mxu0 0.0
    %3506 = vmatpush1.msra.mxu0 0.0
    %3507 = vmatprep.subr.mxu0 0.0
    %3508 = vmatpush1.msra.mxu0 0.0
    %3509 = vmatprep.subr.mxu0 0.0
    %3510 = vmatpush1.msra.mxu0 0.0
    %3511 = vmatprep.subr.mxu0 0.0
    %3512 = vmatpush1.msra.mxu0 0.0
    %3513 = vmatprep.subr.mxu0 0.0
    %3514 = vmatpush1.msra.mxu0 0.0
    %3515 = vmatprep.subr.mxu0 0.0
    %3516 = vmatpush1.msra.mxu0 0.0
    %3517 = vmatprep.subr.mxu0 0.0
    %3518 = vmatpush1.msra.mxu0 0.0
    %3519 = vmatprep.subr.mxu0 0.0
    %3520 = vmatpush1.msra.mxu0 0.0
    %3521 = vmatprep.subr.mxu0 0.0
    %3522 = vmatpush1.msra.mxu0 0.0
    %3523 = vmatprep.subr.mxu0 0.0
    %3524 = vmatpush1.msra.mxu0 0.0
    %3525 = vmatprep.subr.mxu0 0.0
    %3526 = vmatpush1.msra.mxu0 0.0
    %3527 = vmatprep.subr.mxu0 0.0
    %3528 = vmatpush1.msra.mxu0 0.0
    %3529 = vmatprep.subr.mxu0 0.0
    %3530 = vmatpush1.msra.mxu0 0.0
    %3531 = vmatprep.subr.mxu0 0.0
    %3532 = vmatpush1.msra.mxu0 0.0
    %3533 = vmatprep.subr.mxu0 0.0
    %3534 = vmatpush1.msra.mxu0 0.0
    %3535 = vmatprep.subr.mxu0 0.0
    %3536 = vmatpush1.msra.mxu0 0.0
    %3537 = vmatprep.subr.mxu0 0.0
    %3538 = vmatpush1.msra.mxu0 0.0
    %3539 = vmatprep.mubr.f32.mxu0 0.0
    %3540 = vmatmul.mubr.f32.gmra.mrb[0].mxu0 %v3394
    %v3541 = vpop.f32.mrb[0].mxu0
    %v3542 = vadd.f32 0.0, %v3541
    %v3543 = vpop.f32.mrb[0].mxu0
    %v3544 = vadd.f32 0.0, %v3543
    %3545 = vdwg.mxu0
    %v3546 = vadd.f32 %v3364, %v3471
    %v3547 = vadd.f32 %v3365, %v3473
    %v3548 = vadd.f32 %v3366, %v3542
    %v3549 = vadd.f32 %v3367, %v3544
    %v3550 = vld [vmem:[%s0 + $0x4] sm:$0xff]
    %v3551 = vld [vmem:[%s0 + $0xc] sm:$0xff]
    %v3556 = vcombine.low %v3546, %v3547
    %v3557 = vcombine.low %v3548, %v3549
    %v3560 = vadd.f32 %v3550, %v3556
    %v3561 = vadd.f32 %v3551, %v3557
    %3562 = vst [vmem:[#allocation3] sm:$0xff] %v3560
    %3563 = vst [vmem:[#allocation3 + $0x8] sm:$0xff] %v3561
    // Predicated region
    $region18: #{tpu_custom_call.1} parent=1 // pred_check
      _
    $region19: #{tpu_custom_call.1} parent=1 // pred_check_branch
      %3565 = sbr.rel (0) target = $region21
    $region20: #{tpu_custom_call.1} parent=1 // pred_region
      %s3567 = ssub.s32 256, 256
      %3568 = vsyncadd [#allocation4], %s3567
      %s3570 = sshll.u32 [#allocation3], 4
      %s3571 = int_to_ptr.vmem [resolvable:$true] %s3570
      %3573 = dma.vmem_to_hbm [thread:$0]  %s3571, 256, %s4, [#allocation4]
    $region21: #{tpu_custom_call.1} parent=1 // pred_fallthru
      _
    // Predicated region
    $region22: #{tpu_custom_call.1} parent=1 // pred_check
      _
    $region23: #{tpu_custom_call.1} parent=1 // pred_check_branch
      %3575 = sbr.rel (0) target = $region25
    $region24: #{tpu_custom_call.1} parent=1 // pred_region
      %3576 = dma.done [#allocation4], 256
    $region25: #{tpu_custom_call.1} parent=1 // pred_fallthru
      _
    %3577 = vsyncpa [#allocation4], 1

</llo_original>
